<compile_context>
chip_gen: v7x
topology: tpu7x:2x2x1
jax: 0.10.0
libtpu: 0.0.40
codegen_flags: <defaults>
</compile_context>

<pallas_src>
import math

import jax
import jax.numpy as jnp
from jax.experimental import pallas as pl
from jax.experimental.pallas import tpu as pltpu


# ----------------------------- helpers -------------------------------------


def _hardswish(x):
    return x * jnp.clip(x + 3.0, 0.0, 6.0) * (1.0 / 6.0)


# ----------------------------- kernels --------------------------------------


def stem_pool_kernel(xph_ref, w_ref, b_ref, pooled_ref):
    """Fused 3x3/s2 conv stem + hardswish + global-average-pool (one batch elem).

    xph_ref:    (4, OH+1, OW+1, C)  phase-decomposed padded image
    w_ref:      (9, C, 16)          one (C, 16) weight slab per kernel tap
    b_ref:      (1, 16)
    pooled_ref: (1, 16)             pooled stem features (only HBM output)
    """
    _, oh1, ow1, c = xph_ref.shape
    oh, ow = oh1 - 1, ow1 - 1
    cout = w_ref.shape[-1]

    acc = jnp.zeros((oh * ow, cout), jnp.float32)
    for di in range(3):                      # static unroll: 9 kernel taps
        for dj in range(3):
            p = (di % 2) * 2 + (dj % 2)      # stride-2 phase of this tap
            r0, c0 = di // 2, dj // 2        # unit-stride offset inside phase
            v = xph_ref[p, r0:r0 + oh, c0:c0 + ow, :]          # (OH, OW, C)
            acc += jnp.dot(v.reshape(oh * ow, c), w_ref[di * 3 + dj],
                           preferred_element_type=jnp.float32)

    act = _hardswish(acc + b_ref[...])                         # (OH*OW, 16) f32
    pooled_ref[...] = jnp.mean(act, axis=0, keepdims=True)     # (1, 16)


def head_kernel(pooled_ref, w1_ref, b1_ref, w2_ref, b2_ref, wc_ref, bc_ref,
                o_ref, acc_ref):
    """K-tiled classifier head: MLP(16->1024->1024pad) -> 4 heads -> sigmoid."""
    k = pl.program_id(0)

    @pl.when(k == 0)
    def _():
        acc_ref[...] = jnp.zeros_like(acc_ref)

    # k-th block of the hidden layer (exactly what the k-th w2 slice consumes).
    pooled = pooled_ref[...].astype(jnp.bfloat16)                      # (B, 16)
    h = jnp.dot(pooled, w1_ref[...],
                preferred_element_type=jnp.float32) + b1_ref[...]      # (B, KBLK)
    h = _hardswish(h)                                                  # f32 VPU math
    acc_ref[...] += jnp.dot(h.astype(jnp.bfloat16), w2_ref[...],
                            preferred_element_type=jnp.float32)        # (B, 1024)

    @pl.when(k == pl.num_programs(0) - 1)
    def _():
        feats = acc_ref[...] + b2_ref[...]                             # (B, 1024)
        logits = jnp.dot(feats.astype(jnp.bfloat16), wc_ref[...],
                         preferred_element_type=jnp.float32) + bc_ref[...]
        o_ref[...] = jax.nn.sigmoid(logits)                            # (B, 128)


# ----------------------------- wrapper ---------------------------------------


def init_params(key):
    ks = jax.random.split(key, 8)

    def uni(k, shape, fan_in):
        bound = 1.0 / math.sqrt(fan_in)
        return jax.random.uniform(k, shape, jnp.float32, -bound, bound)

    kk = 3 * 3 * 3  # stem: 3x3 conv over 3 input channels
    stem_w = uni(ks[0], (9, 3, 16), kk)        # (tap, Cin, Cout)
    stem_b = uni(ks[1], (1, 16), kk)
    w1 = uni(ks[2], (16, 1024), 16)
    b1 = uni(ks[3], (1, 1024), 16)
    w2 = uni(ks[4], (1024, 1000), 1024)
    b2 = uni(ks[5], (1, 1000), 1024)
    wc = uni(ks[6], (1000, 4), 1000)           # 4x Linear(1000,1) stacked as columns
    bc = uni(ks[7], (1, 4), 1000)

    # Zero-pad classifier widths 1000->1024 and 4->128 (lane-dense, numerically
    # identical: padded columns/rows contribute exactly zero to logits[:, :4]).
    w2p = jnp.zeros((1024, 1024), jnp.float32).at[:, :1000].set(w2)
    b2p = jnp.zeros((1, 1024), jnp.float32).at[:, :1000].set(b2)
    wcp = jnp.zeros((1024, 128), jnp.float32).at[:1000, :4].set(wc)
    bcp = jnp.zeros((1, 128), jnp.float32).at[:, :4].set(bc)

    return {
        "stem_w": stem_w, "stem_b": stem_b,                    # f32 (tiny)
        "mlp_w1": w1.astype(jnp.bfloat16), "mlp_b1": b1,       # bf16 MXU weights,
        "mlp_w2": w2p.astype(jnp.bfloat16), "mlp_b2": b2p,     # f32 biases / accum
        "cls_w": wcp.astype(jnp.bfloat16), "cls_b": bcp,
    }


def net_forward(x_nchw, params):
    # NCHW (PyTorch convention) -> NHWC for the kernel path.
    x = jnp.transpose(x_nchw, (0, 2, 3, 1)).astype(jnp.float32)
    B, H, W, C = x.shape
    assert H % 2 == 0 and W % 2 == 0, "stem assumes even spatial dims"
    OH = (H + 2 - 3) // 2 + 1
    OW = (W + 2 - 3) // 2 + 1
    OH1, OW1 = OH + 1, OW + 1        # = (H+2)//2, (W+2)//2

    # Pad by 1 and split into the 4 stride-2 phases (pure layout shuffle, same
    # total bytes as the padded image -- no 9x im2col inflation in HBM).
    xp = jnp.pad(x, ((0, 0), (1, 1), (1, 1), (0, 0)))          # (B, H+2, W+2, C)
    xph = xp.reshape(B, OH1, 2, OW1, 2, C).transpose(0, 2, 4, 1, 3, 5)
    xph = xph.reshape(B, 4, OH1, OW1, C)                       # phase p = 2*(r%2)+(c%2)

    cparams_a = pltpu.CompilerParams(
        dimension_semantics=("parallel",),           # shard batch across TCs (v7x)
        vmem_limit_bytes=32 * 1024 * 1024)

    pooled = pl.pallas_call(
        stem_pool_kernel,
        grid=(B,),
        in_specs=[
            pl.BlockSpec((None, 4, OH1, OW1, C), lambda b: (b, 0, 0, 0, 0)),
            pl.BlockSpec((9, 3, 16), lambda b: (0, 0, 0)),     # resident weights
            pl.BlockSpec((1, 16), lambda b: (0, 0)),
        ],
        out_specs=pl.BlockSpec((None, 1, 16), lambda b: (b, 0, 0)),
        out_shape=jax.ShapeDtypeStruct((B, 1, 16), jnp.float32),
        compiler_params=cparams_a,
    )(xph, params["stem_w"], params["stem_b"])
    pooled = pooled.reshape(B, 16)                             # 128-byte intermediate

    KBLK = 256
    KT = 1024 // KBLK
    cparams_b = pltpu.CompilerParams(
        dimension_semantics=("arbitrary",),          # K-reduction axis
        vmem_limit_bytes=32 * 1024 * 1024)

    out_padded = pl.pallas_call(
        head_kernel,
        grid=(KT,),
        in_specs=[
            pl.BlockSpec((B, 16), lambda k: (0, 0)),           # resident
            pl.BlockSpec((16, KBLK), lambda k: (0, k)),        # w1 k-block
            pl.BlockSpec((1, KBLK), lambda k: (0, k)),         # b1 k-block
            pl.BlockSpec((KBLK, 1024), lambda k: (k, 0)),      # w2 k-block (streamed)
            pl.BlockSpec((1, 1024), lambda k: (0, 0)),         # resident
            pl.BlockSpec((1024, 128), lambda k: (0, 0)),       # resident
            pl.BlockSpec((1, 128), lambda k: (0, 0)),          # resident
        ],
        out_specs=pl.BlockSpec((B, 128), lambda k: (0, 0)),
        out_shape=jax.ShapeDtypeStruct((B, 128), jnp.float32),
        scratch_shapes=[pltpu.VMEM((B, 1024), jnp.float32)],   # feature accumulator
        compiler_params=cparams_b,
    )(pooled, params["mlp_w1"], params["mlp_b1"], params["mlp_w2"],
      params["mlp_b2"], params["cls_w"], params["cls_b"])

    return out_padded[:, :4]       # concat of the 4 sigmoid heads


if __name__ == "__main__":
    key = jax.random.PRNGKey(0)
    k_x, k_p = jax.random.split(key)

    B, C, H, W = 2, 3, 32, 32
    x = jax.random.normal(k_x, (B, C, H, W), jnp.float32)   # NCHW, as PyTorch would pass
    params = init_params(k_p)

    fwd = jax.jit(net_forward)
    out = jax.block_until_ready(fwd(x, params))

    assert out.shape == (B, 4)
    assert bool(jnp.all((out >= 0.0) & (out <= 1.0)))        # sigmoid range
    print("KERNEL_OK")
</pallas_src>

<mosaic_0001>
module attributes {stable_mosaic.version = 11 : i64} {
  func.func @stem_pool_kernel(%arg0: i32, %arg1: memref<1x4x17x17x3xf32, #tpu.memory_space<vmem>>, %arg2: memref<9x3x16xf32, #tpu.memory_space<vmem>>, %arg3: memref<1x16xf32, #tpu.memory_space<vmem>>, %arg4: memref<1x1x16xf32, #tpu.memory_space<vmem>>) attributes {dimension_semantics = [#tpu.dimension_semantics<parallel>], iteration_bounds = array<i64: 2>, scalar_prefetch = 0 : i64, scratch_operands = 0 : i64, tpu.core_type = #tpu.core_type<tc>, window_params = [{transform_indices = @transform_0, window_bounds = array<i64: 1, 4, 17, 17, 3>}, {pipeline_mode = #tpu.pipeline_mode<synchronous>, transform_indices = @transform_1, window_bounds = array<i64: 9, 3, 16>}, {pipeline_mode = #tpu.pipeline_mode<synchronous>, transform_indices = @transform_2, window_bounds = array<i64: 1, 16>}, {transform_indices = @transform_3, window_bounds = array<i64: 1, 1, 16>}]} {
    %cst = arith.constant 0.000000e+00 : f32
    %0 = vector.broadcast %cst : f32 to vector<256x16xf32>
    %c0 = arith.constant 0 : index
    %c0_0 = arith.constant 0 : index
    %c0_1 = arith.constant 0 : index
    %c0_2 = arith.constant 0 : index
    %c0_3 = arith.constant 0 : index
    %1 = vector.load %arg1[%c0, %c0_0, %c0_1, %c0_2, %c0_3] : memref<1x4x17x17x3xf32, #tpu.memory_space<vmem>>, vector<1x1x16x16x3xf32>
    %2 = vector.shape_cast %1 : vector<1x1x16x16x3xf32> to vector<16x16x3xf32>
    %3 = vector.shape_cast %2 : vector<16x16x3xf32> to vector<256x3xf32>
    %c0_4 = arith.constant 0 : index
    %c0_5 = arith.constant 0 : index
    %c0_6 = arith.constant 0 : index
    %4 = vector.load %arg2[%c0_4, %c0_5, %c0_6] : memref<9x3x16xf32, #tpu.memory_space<vmem>>, vector<1x3x16xf32>
    %5 = vector.shape_cast %4 : vector<1x3x16xf32> to vector<3x16xf32>
    %cst_7 = arith.constant dense<0.000000e+00> : vector<256x16xf32>
    %6 = tpu.matmul %3, %5, %cst_7 {dimension_numbers = #tpu.dot_dimension_numbers<[1], [0], [0], [1], [0, 0, 1, 1], [], []>} : vector<256x3xf32>, vector<3x16xf32>, vector<256x16xf32> -> vector<256x16xf32>
    %7 = arith.addf %0, %6 : vector<256x16xf32>
    %c0_8 = arith.constant 0 : index
    %c1 = arith.constant 1 : index
    %c0_9 = arith.constant 0 : index
    %c0_10 = arith.constant 0 : index
    %c0_11 = arith.constant 0 : index
    %8 = vector.load %arg1[%c0_8, %c1, %c0_9, %c0_10, %c0_11] : memref<1x4x17x17x3xf32, #tpu.memory_space<vmem>>, vector<1x1x16x16x3xf32>
    %9 = vector.shape_cast %8 : vector<1x1x16x16x3xf32> to vector<16x16x3xf32>
    %10 = vector.shape_cast %9 : vector<16x16x3xf32> to vector<256x3xf32>
    %c1_12 = arith.constant 1 : index
    %c0_13 = arith.constant 0 : index
    %c0_14 = arith.constant 0 : index
    %11 = vector.load %arg2[%c1_12, %c0_13, %c0_14] : memref<9x3x16xf32, #tpu.memory_space<vmem>>, vector<1x3x16xf32>
    %12 = vector.shape_cast %11 : vector<1x3x16xf32> to vector<3x16xf32>
    %cst_15 = arith.constant dense<0.000000e+00> : vector<256x16xf32>
    %13 = tpu.matmul %10, %12, %cst_15 {dimension_numbers = #tpu.dot_dimension_numbers<[1], [0], [0], [1], [0, 0, 1, 1], [], []>} : vector<256x3xf32>, vector<3x16xf32>, vector<256x16xf32> -> vector<256x16xf32>
    %14 = arith.addf %7, %13 : vector<256x16xf32>
    %c0_16 = arith.constant 0 : index
    %c0_17 = arith.constant 0 : index
    %c0_18 = arith.constant 0 : index
    %c1_19 = arith.constant 1 : index
    %c0_20 = arith.constant 0 : index
    %15 = vector.load %arg1[%c0_16, %c0_17, %c0_18, %c1_19, %c0_20] : memref<1x4x17x17x3xf32, #tpu.memory_space<vmem>>, vector<1x1x16x16x3xf32>
    %16 = vector.shape_cast %15 : vector<1x1x16x16x3xf32> to vector<16x16x3xf32>
    %17 = vector.shape_cast %16 : vector<16x16x3xf32> to vector<256x3xf32>
    %c2 = arith.constant 2 : index
    %c0_21 = arith.constant 0 : index
    %c0_22 = arith.constant 0 : index
    %18 = vector.load %arg2[%c2, %c0_21, %c0_22] : memref<9x3x16xf32, #tpu.memory_space<vmem>>, vector<1x3x16xf32>
    %19 = vector.shape_cast %18 : vector<1x3x16xf32> to vector<3x16xf32>
    %cst_23 = arith.constant dense<0.000000e+00> : vector<256x16xf32>
    %20 = tpu.matmul %17, %19, %cst_23 {dimension_numbers = #tpu.dot_dimension_numbers<[1], [0], [0], [1], [0, 0, 1, 1], [], []>} : vector<256x3xf32>, vector<3x16xf32>, vector<256x16xf32> -> vector<256x16xf32>
    %21 = arith.addf %14, %20 : vector<256x16xf32>
    %c0_24 = arith.constant 0 : index
    %c2_25 = arith.constant 2 : index
    %c0_26 = arith.constant 0 : index
    %c0_27 = arith.constant 0 : index
    %c0_28 = arith.constant 0 : index
    %22 = vector.load %arg1[%c0_24, %c2_25, %c0_26, %c0_27, %c0_28] : memref<1x4x17x17x3xf32, #tpu.memory_space<vmem>>, vector<1x1x16x16x3xf32>
    %23 = vector.shape_cast %22 : vector<1x1x16x16x3xf32> to vector<16x16x3xf32>
    %24 = vector.shape_cast %23 : vector<16x16x3xf32> to vector<256x3xf32>
    %c3 = arith.constant 3 : index
    %c0_29 = arith.constant 0 : index
    %c0_30 = arith.constant 0 : index
    %25 = vector.load %arg2[%c3, %c0_29, %c0_30] : memref<9x3x16xf32, #tpu.memory_space<vmem>>, vector<1x3x16xf32>
    %26 = vector.shape_cast %25 : vector<1x3x16xf32> to vector<3x16xf32>
    %cst_31 = arith.constant dense<0.000000e+00> : vector<256x16xf32>
    %27 = tpu.matmul %24, %26, %cst_31 {dimension_numbers = #tpu.dot_dimension_numbers<[1], [0], [0], [1], [0, 0, 1, 1], [], []>} : vector<256x3xf32>, vector<3x16xf32>, vector<256x16xf32> -> vector<256x16xf32>
    %28 = arith.addf %21, %27 : vector<256x16xf32>
    %c0_32 = arith.constant 0 : index
    %c3_33 = arith.constant 3 : index
    %c0_34 = arith.constant 0 : index
    %c0_35 = arith.constant 0 : index
    %c0_36 = arith.constant 0 : index
    %29 = vector.load %arg1[%c0_32, %c3_33, %c0_34, %c0_35, %c0_36] : memref<1x4x17x17x3xf32, #tpu.memory_space<vmem>>, vector<1x1x16x16x3xf32>
    %30 = vector.shape_cast %29 : vector<1x1x16x16x3xf32> to vector<16x16x3xf32>
    %31 = vector.shape_cast %30 : vector<16x16x3xf32> to vector<256x3xf32>
    %c4 = arith.constant 4 : index
    %c0_37 = arith.constant 0 : index
    %c0_38 = arith.constant 0 : index
    %32 = vector.load %arg2[%c4, %c0_37, %c0_38] : memref<9x3x16xf32, #tpu.memory_space<vmem>>, vector<1x3x16xf32>
    %33 = vector.shape_cast %32 : vector<1x3x16xf32> to vector<3x16xf32>
    %cst_39 = arith.constant dense<0.000000e+00> : vector<256x16xf32>
    %34 = tpu.matmul %31, %33, %cst_39 {dimension_numbers = #tpu.dot_dimension_numbers<[1], [0], [0], [1], [0, 0, 1, 1], [], []>} : vector<256x3xf32>, vector<3x16xf32>, vector<256x16xf32> -> vector<256x16xf32>
    %35 = arith.addf %28, %34 : vector<256x16xf32>
    %c0_40 = arith.constant 0 : index
    %c2_41 = arith.constant 2 : index
    %c0_42 = arith.constant 0 : index
    %c1_43 = arith.constant 1 : index
    %c0_44 = arith.constant 0 : index
    %36 = vector.load %arg1[%c0_40, %c2_41, %c0_42, %c1_43, %c0_44] : memref<1x4x17x17x3xf32, #tpu.memory_space<vmem>>, vector<1x1x16x16x3xf32>
    %37 = vector.shape_cast %36 : vector<1x1x16x16x3xf32> to vector<16x16x3xf32>
    %38 = vector.shape_cast %37 : vector<16x16x3xf32> to vector<256x3xf32>
    %c5 = arith.constant 5 : index
    %c0_45 = arith.constant 0 : index
    %c0_46 = arith.constant 0 : index
    %39 = vector.load %arg2[%c5, %c0_45, %c0_46] : memref<9x3x16xf32, #tpu.memory_space<vmem>>, vector<1x3x16xf32>
    %40 = vector.shape_cast %39 : vector<1x3x16xf32> to vector<3x16xf32>
    %cst_47 = arith.constant dense<0.000000e+00> : vector<256x16xf32>
    %41 = tpu.matmul %38, %40, %cst_47 {dimension_numbers = #tpu.dot_dimension_numbers<[1], [0], [0], [1], [0, 0, 1, 1], [], []>} : vector<256x3xf32>, vector<3x16xf32>, vector<256x16xf32> -> vector<256x16xf32>
    %42 = arith.addf %35, %41 : vector<256x16xf32>
    %c0_48 = arith.constant 0 : index
    %c0_49 = arith.constant 0 : index
    %c1_50 = arith.constant 1 : index
    %c0_51 = arith.constant 0 : index
    %c0_52 = arith.constant 0 : index
    %43 = vector.load %arg1[%c0_48, %c0_49, %c1_50, %c0_51, %c0_52] : memref<1x4x17x17x3xf32, #tpu.memory_space<vmem>>, vector<1x1x16x16x3xf32>
    %44 = vector.shape_cast %43 : vector<1x1x16x16x3xf32> to vector<16x16x3xf32>
    %45 = vector.shape_cast %44 : vector<16x16x3xf32> to vector<256x3xf32>
    %c6 = arith.constant 6 : index
    %c0_53 = arith.constant 0 : index
    %c0_54 = arith.constant 0 : index
    %46 = vector.load %arg2[%c6, %c0_53, %c0_54] : memref<9x3x16xf32, #tpu.memory_space<vmem>>, vector<1x3x16xf32>
    %47 = vector.shape_cast %46 : vector<1x3x16xf32> to vector<3x16xf32>
    %cst_55 = arith.constant dense<0.000000e+00> : vector<256x16xf32>
    %48 = tpu.matmul %45, %47, %cst_55 {dimension_numbers = #tpu.dot_dimension_numbers<[1], [0], [0], [1], [0, 0, 1, 1], [], []>} : vector<256x3xf32>, vector<3x16xf32>, vector<256x16xf32> -> vector<256x16xf32>
    %49 = arith.addf %42, %48 : vector<256x16xf32>
    %c0_56 = arith.constant 0 : index
    %c1_57 = arith.constant 1 : index
    %c1_58 = arith.constant 1 : index
    %c0_59 = arith.constant 0 : index
    %c0_60 = arith.constant 0 : index
    %50 = vector.load %arg1[%c0_56, %c1_57, %c1_58, %c0_59, %c0_60] : memref<1x4x17x17x3xf32, #tpu.memory_space<vmem>>, vector<1x1x16x16x3xf32>
    %51 = vector.shape_cast %50 : vector<1x1x16x16x3xf32> to vector<16x16x3xf32>
    %52 = vector.shape_cast %51 : vector<16x16x3xf32> to vector<256x3xf32>
    %c7 = arith.constant 7 : index
    %c0_61 = arith.constant 0 : index
    %c0_62 = arith.constant 0 : index
    %53 = vector.load %arg2[%c7, %c0_61, %c0_62] : memref<9x3x16xf32, #tpu.memory_space<vmem>>, vector<1x3x16xf32>
    %54 = vector.shape_cast %53 : vector<1x3x16xf32> to vector<3x16xf32>
    %cst_63 = arith.constant dense<0.000000e+00> : vector<256x16xf32>
    %55 = tpu.matmul %52, %54, %cst_63 {dimension_numbers = #tpu.dot_dimension_numbers<[1], [0], [0], [1], [0, 0, 1, 1], [], []>} : vector<256x3xf32>, vector<3x16xf32>, vector<256x16xf32> -> vector<256x16xf32>
    %56 = arith.addf %49, %55 : vector<256x16xf32>
    %c0_64 = arith.constant 0 : index
    %c0_65 = arith.constant 0 : index
    %c1_66 = arith.constant 1 : index
    %c1_67 = arith.constant 1 : index
    %c0_68 = arith.constant 0 : index
    %57 = vector.load %arg1[%c0_64, %c0_65, %c1_66, %c1_67, %c0_68] : memref<1x4x17x17x3xf32, #tpu.memory_space<vmem>>, vector<1x1x16x16x3xf32>
    %58 = vector.shape_cast %57 : vector<1x1x16x16x3xf32> to vector<16x16x3xf32>
    %59 = vector.shape_cast %58 : vector<16x16x3xf32> to vector<256x3xf32>
    %c8 = arith.constant 8 : index
    %c0_69 = arith.constant 0 : index
    %c0_70 = arith.constant 0 : index
    %60 = vector.load %arg2[%c8, %c0_69, %c0_70] : memref<9x3x16xf32, #tpu.memory_space<vmem>>, vector<1x3x16xf32>
    %61 = vector.shape_cast %60 : vector<1x3x16xf32> to vector<3x16xf32>
    %cst_71 = arith.constant dense<0.000000e+00> : vector<256x16xf32>
    %62 = tpu.matmul %59, %61, %cst_71 {dimension_numbers = #tpu.dot_dimension_numbers<[1], [0], [0], [1], [0, 0, 1, 1], [], []>} : vector<256x3xf32>, vector<3x16xf32>, vector<256x16xf32> -> vector<256x16xf32>
    %63 = arith.addf %56, %62 : vector<256x16xf32>
    %c0_72 = arith.constant 0 : index
    %c0_73 = arith.constant 0 : index
    %64 = vector.load %arg3[%c0_72, %c0_73] : memref<1x16xf32, #tpu.memory_space<vmem>>, vector<1x16xf32>
    %65 = vector.broadcast %64 : vector<1x16xf32> to vector<256x16xf32>
    %66 = arith.addf %63, %65 : vector<256x16xf32>
    %cst_74 = arith.constant 3.000000e+00 : f32
    %67 = vector.broadcast %cst_74 : f32 to vector<256x16xf32>
    %68 = arith.addf %66, %67 : vector<256x16xf32>
    %cst_75 = arith.constant 0.000000e+00 : f32
    %cst_76 = arith.constant 6.000000e+00 : f32
    %69 = vector.broadcast %cst_75 : f32 to vector<256x16xf32>
    %70 = arith.maximumf %69, %68 : vector<256x16xf32>
    %71 = vector.broadcast %cst_76 : f32 to vector<256x16xf32>
    %72 = arith.minimumf %71, %70 : vector<256x16xf32>
    %73 = arith.mulf %66, %72 : vector<256x16xf32>
    %cst_77 = arith.constant 0.166666672 : f32
    %74 = vector.broadcast %cst_77 : f32 to vector<256x16xf32>
    %75 = arith.mulf %73, %74 : vector<256x16xf32>
    %cst_78 = arith.constant dense<0.000000e+00> : vector<16xf32>
    %76 = vector.multi_reduction <add>, %75, %cst_78 [0] : vector<256x16xf32> to vector<16xf32>
    %77 = vector.shape_cast %76 : vector<16xf32> to vector<1x16xf32>
    %cst_79 = arith.constant 2.560000e+02 : f32
    %78 = vector.broadcast %cst_79 : f32 to vector<1x16xf32>
    %79 = arith.divf %77, %78 : vector<1x16xf32>
    %c0_80 = arith.constant 0 : index
    %c0_81 = arith.constant 0 : index
    %c0_82 = arith.constant 0 : index
    %80 = vector.load %arg4[%c0_80, %c0_81, %c0_82] : memref<1x1x16xf32, #tpu.memory_space<vmem>>, vector<1x1x16xf32>
    %81 = vector.shape_cast %80 : vector<1x1x16xf32> to vector<1x16xf32>
    %82 = vector.shape_cast %79 : vector<1x16xf32> to vector<1x1x16xf32>
    tpu.vector_store %arg4[%c0_80, %c0_81, %c0_82], %82 {strides = array<i32>} : memref<1x1x16xf32, #tpu.memory_space<vmem>>, vector<1x1x16xf32>,
    return
  }
  func.func @transform_0(%arg0: i32) -> (i32, i32, i32, i32, i32) {
    %c0_i32 = arith.constant 0 : i32
    %c0_i32_0 = arith.constant 0 : i32
    %c0_i32_1 = arith.constant 0 : i32
    %c0_i32_2 = arith.constant 0 : i32
    %c0_i32_3 = arith.constant 0 : i32
    return %arg0, %c0_i32, %c0_i32_0, %c0_i32_1, %c0_i32_2 : i32, i32, i32, i32, i32
  }
  func.func @transform_1(%arg0: i32) -> (i32, i32, i32) {
    %c0_i32 = arith.constant 0 : i32
    %c0_i32_0 = arith.constant 0 : i32
    %c0_i32_1 = arith.constant 0 : i32
    %c0_i32_2 = arith.constant 0 : i32
    return %c0_i32, %c0_i32_0, %c0_i32_1 : i32, i32, i32
  }
  func.func @transform_2(%arg0: i32) -> (i32, i32) {
    %c0_i32 = arith.constant 0 : i32
    %c0_i32_0 = arith.constant 0 : i32
    %c0_i32_1 = arith.constant 0 : i32
    return %c0_i32, %c0_i32_0 : i32, i32
  }
  func.func @transform_3(%arg0: i32) -> (i32, i32, i32) {
    %c0_i32 = arith.constant 0 : i32
    %c0_i32_0 = arith.constant 0 : i32
    %c0_i32_1 = arith.constant 0 : i32
    return %arg0, %c0_i32, %c0_i32_0 : i32, i32, i32
  }
}

module attributes {stable_mosaic.version = 11 : i64} {
  func.func @head_kernel(%arg0: i32, %arg1: memref<2x16xf32, #tpu.memory_space<vmem>>, %arg2: memref<16x256xbf16, #tpu.memory_space<vmem>>, %arg3: memref<1x256xf32, #tpu.memory_space<vmem>>, %arg4: memref<256x1024xbf16, #tpu.memory_space<vmem>>, %arg5: memref<1x1024xf32, #tpu.memory_space<vmem>>, %arg6: memref<1024x128xbf16, #tpu.memory_space<vmem>>, %arg7: memref<1x128xf32, #tpu.memory_space<vmem>>, %arg8: memref<2x128xf32, #tpu.memory_space<vmem>>, %arg9: memref<2x1024xf32, #tpu.memory_space<vmem>>) attributes {dimension_semantics = [#tpu.dimension_semantics<arbitrary>], iteration_bounds = array<i64: 4>, scalar_prefetch = 0 : i64, scratch_operands = 1 : i64, tpu.core_type = #tpu.core_type<tc>, window_params = [{pipeline_mode = #tpu.pipeline_mode<synchronous>, transform_indices = @transform_0, window_bounds = array<i64: 2, 16>}, {transform_indices = @transform_1, window_bounds = array<i64: 16, 256>}, {transform_indices = @transform_2, window_bounds = array<i64: 1, 256>}, {transform_indices = @transform_3, window_bounds = array<i64: 256, 1024>}, {pipeline_mode = #tpu.pipeline_mode<synchronous>, transform_indices = @transform_4, window_bounds = array<i64: 1, 1024>}, {pipeline_mode = #tpu.pipeline_mode<synchronous>, transform_indices = @transform_5, window_bounds = array<i64: 1024, 128>}, {pipeline_mode = #tpu.pipeline_mode<synchronous>, transform_indices = @transform_6, window_bounds = array<i64: 1, 128>}, {pipeline_mode = #tpu.pipeline_mode<synchronous>, transform_indices = @transform_7, window_bounds = array<i64: 2, 128>}]} {
    %c0_i32 = arith.constant 0 : i32
    %0 = arith.cmpi eq, %arg0, %c0_i32 : i32
    %1 = arith.extui %0 : i1 to i32
    %c0_i32_0 = arith.constant 0 : i32
    %2 = arith.cmpi ne, %1, %c0_i32_0 : i32
    scf.if %2 {
      %cst_18 = arith.constant 0.000000e+00 : f32
      %28 = vector.broadcast %cst_18 : f32 to vector<2x1024xf32>
      %c0_19 = arith.constant 0 : index
      %c0_20 = arith.constant 0 : index
      %29 = vector.load %arg9[%c0_19, %c0_20] : memref<2x1024xf32, #tpu.memory_space<vmem>>, vector<2x1024xf32>
      tpu.vector_store %arg9[%c0_19, %c0_20], %28 {strides = array<i32>} : memref<2x1024xf32, #tpu.memory_space<vmem>>, vector<2x1024xf32>,
    } else {
    }
    %c0 = arith.constant 0 : index
    %c0_1 = arith.constant 0 : index
    %3 = vector.load %arg1[%c0, %c0_1] : memref<2x16xf32, #tpu.memory_space<vmem>>, vector<2x16xf32>
    %4 = arith.truncf %3 : vector<2x16xf32> to vector<2x16xbf16>
    %c0_2 = arith.constant 0 : index
    %c0_3 = arith.constant 0 : index
    %5 = vector.load %arg2[%c0_2, %c0_3] : memref<16x256xbf16, #tpu.memory_space<vmem>>, vector<16x256xbf16>
    %cst = arith.constant dense<0.000000e+00> : vector<2x256xf32>
    %6 = tpu.matmul %4, %5, %cst {dimension_numbers = #tpu.dot_dimension_numbers<[1], [0], [0], [1], [0, 0, 1, 1], [], []>} : vector<2x16xbf16>, vector<16x256xbf16>, vector<2x256xf32> -> vector<2x256xf32>
    %c0_4 = arith.constant 0 : index
    %c0_5 = arith.constant 0 : index
    %7 = vector.load %arg3[%c0_4, %c0_5] : memref<1x256xf32, #tpu.memory_space<vmem>>, vector<1x256xf32>
    %8 = vector.broadcast %7 : vector<1x256xf32> to vector<2x256xf32>
    %9 = arith.addf %6, %8 : vector<2x256xf32>
    %cst_6 = arith.constant 3.000000e+00 : f32
    %10 = vector.broadcast %cst_6 : f32 to vector<2x256xf32>
    %11 = arith.addf %9, %10 : vector<2x256xf32>
    %cst_7 = arith.constant 0.000000e+00 : f32
    %cst_8 = arith.constant 6.000000e+00 : f32
    %12 = vector.broadcast %cst_7 : f32 to vector<2x256xf32>
    %13 = arith.maximumf %12, %11 : vector<2x256xf32>
    %14 = vector.broadcast %cst_8 : f32 to vector<2x256xf32>
    %15 = arith.minimumf %14, %13 : vector<2x256xf32>
    %16 = arith.mulf %9, %15 : vector<2x256xf32>
    %cst_9 = arith.constant 0.166666672 : f32
    %17 = vector.broadcast %cst_9 : f32 to vector<2x256xf32>
    %18 = arith.mulf %16, %17 : vector<2x256xf32>
    %c0_10 = arith.constant 0 : index
    %c0_11 = arith.constant 0 : index
    %19 = vector.load %arg9[%c0_10, %c0_11] : memref<2x1024xf32, #tpu.memory_space<vmem>>, vector<2x1024xf32>
    %20 = arith.truncf %18 : vector<2x256xf32> to vector<2x256xbf16>
    %c0_12 = arith.constant 0 : index
    %c0_13 = arith.constant 0 : index
    %21 = vector.load %arg4[%c0_12, %c0_13] : memref<256x1024xbf16, #tpu.memory_space<vmem>>, vector<256x1024xbf16>
    %cst_14 = arith.constant dense<0.000000e+00> : vector<2x1024xf32>
    %22 = tpu.matmul %20, %21, %cst_14 {dimension_numbers = #tpu.dot_dimension_numbers<[1], [0], [0], [1], [0, 0, 1, 1], [], []>} : vector<2x256xbf16>, vector<256x1024xbf16>, vector<2x1024xf32> -> vector<2x1024xf32>
    %23 = arith.addf %19, %22 : vector<2x1024xf32>
    %c0_15 = arith.constant 0 : index
    %c0_16 = arith.constant 0 : index
    %24 = vector.load %arg9[%c0_15, %c0_16] : memref<2x1024xf32, #tpu.memory_space<vmem>>, vector<2x1024xf32>
    tpu.vector_store %arg9[%c0_15, %c0_16], %23 {strides = array<i32>} : memref<2x1024xf32, #tpu.memory_space<vmem>>, vector<2x1024xf32>,
    %c3_i32 = arith.constant 3 : i32
    %25 = arith.cmpi eq, %arg0, %c3_i32 : i32
    %26 = arith.extui %25 : i1 to i32
    %c0_i32_17 = arith.constant 0 : i32
    %27 = arith.cmpi ne, %26, %c0_i32_17 : i32
    scf.if %27 {
      %c0_18 = arith.constant 0 : index
      %c0_19 = arith.constant 0 : index
      %28 = vector.load %arg9[%c0_18, %c0_19] : memref<2x1024xf32, #tpu.memory_space<vmem>>, vector<2x1024xf32>
      %c0_20 = arith.constant 0 : index
      %c0_21 = arith.constant 0 : index
      %29 = vector.load %arg5[%c0_20, %c0_21] : memref<1x1024xf32, #tpu.memory_space<vmem>>, vector<1x1024xf32>
      %30 = vector.broadcast %29 : vector<1x1024xf32> to vector<2x1024xf32>
      %31 = arith.addf %28, %30 : vector<2x1024xf32>
      %32 = arith.truncf %31 : vector<2x1024xf32> to vector<2x1024xbf16>
      %c0_22 = arith.constant 0 : index
      %c0_23 = arith.constant 0 : index
      %33 = vector.load %arg6[%c0_22, %c0_23] : memref<1024x128xbf16, #tpu.memory_space<vmem>>, vector<1024x128xbf16>
      %cst_24 = arith.constant dense<0.000000e+00> : vector<2x128xf32>
      %34 = tpu.matmul %32, %33, %cst_24 {dimension_numbers = #tpu.dot_dimension_numbers<[1], [0], [0], [1], [0, 0, 1, 1], [], []>} : vector<2x1024xbf16>, vector<1024x128xbf16>, vector<2x128xf32> -> vector<2x128xf32>
      %c0_25 = arith.constant 0 : index
      %c0_26 = arith.constant 0 : index
      %35 = vector.load %arg7[%c0_25, %c0_26] : memref<1x128xf32, #tpu.memory_space<vmem>>, vector<1x128xf32>
      %36 = vector.broadcast %35 : vector<1x128xf32> to vector<2x128xf32>
      %37 = arith.addf %34, %36 : vector<2x128xf32>
      %38 = arith.negf %37 : vector<2x128xf32>
      %39 = math.exp %38 : vector<2x128xf32>
      %cst_27 = arith.constant 1.000000e+00 : f32
      %40 = vector.broadcast %cst_27 : f32 to vector<2x128xf32>
      %41 = arith.addf %40, %39 : vector<2x128xf32>
      %42 = arith.divf %40, %41 : vector<2x128xf32>
      %c0_28 = arith.constant 0 : index
      %c0_29 = arith.constant 0 : index
      %43 = vector.load %arg8[%c0_28, %c0_29] : memref<2x128xf32, #tpu.memory_space<vmem>>, vector<2x128xf32>
      tpu.vector_store %arg8[%c0_28, %c0_29], %42 {strides = array<i32>} : memref<2x128xf32, #tpu.memory_space<vmem>>, vector<2x128xf32>,
    } else {
    }
    return
  }
  func.func @transform_0(%arg0: i32) -> (i32, i32) {
    %c0_i32 = arith.constant 0 : i32
    %c0_i32_0 = arith.constant 0 : i32
    %c0_i32_1 = arith.constant 0 : i32
    return %c0_i32, %c0_i32_0 : i32, i32
  }
  func.func @transform_1(%arg0: i32) -> (i32, i32) {
    %c0_i32 = arith.constant 0 : i32
    %c0_i32_0 = arith.constant 0 : i32
    return %c0_i32, %arg0 : i32, i32
  }
  func.func @transform_2(%arg0: i32) -> (i32, i32) {
    %c0_i32 = arith.constant 0 : i32
    %c0_i32_0 = arith.constant 0 : i32
    return %c0_i32, %arg0 : i32, i32
  }
  func.func @transform_3(%arg0: i32) -> (i32, i32) {
    %c0_i32 = arith.constant 0 : i32
    %c0_i32_0 = arith.constant 0 : i32
    return %arg0, %c0_i32 : i32, i32
  }
  func.func @transform_4(%arg0: i32) -> (i32, i32) {
    %c0_i32 = arith.constant 0 : i32
    %c0_i32_0 = arith.constant 0 : i32
    %c0_i32_1 = arith.constant 0 : i32
    return %c0_i32, %c0_i32_0 : i32, i32
  }
  func.func @transform_5(%arg0: i32) -> (i32, i32) {
    %c0_i32 = arith.constant 0 : i32
    %c0_i32_0 = arith.constant 0 : i32
    %c0_i32_1 = arith.constant 0 : i32
    return %c0_i32, %c0_i32_0 : i32, i32
  }
  func.func @transform_6(%arg0: i32) -> (i32, i32) {
    %c0_i32 = arith.constant 0 : i32
    %c0_i32_0 = arith.constant 0 : i32
    %c0_i32_1 = arith.constant 0 : i32
    return %c0_i32, %c0_i32_0 : i32, i32
  }
  func.func @transform_7(%arg0: i32) -> (i32, i32) {
    %c0_i32 = arith.constant 0 : i32
    %c0_i32_0 = arith.constant 0 : i32
    %c0_i32_1 = arith.constant 0 : i32
    return %c0_i32, %c0_i32_0 : i32, i32
  }
}

</mosaic_0001>

<llo_original>
// kernel: net_forward.2
$region0: #{net_forward.2}
  #allocation0 [shape = 'u32[]', space=smem, size = 0x4, offset = 0x4, fixed_abs, tag = 'smem constant byte address 0x4 - core index']
  #allocation1 [shape = 'u32[144,128]{1,0:T(1,128)}', space=vmem, size = 0x12000, scoped, tag = 'internal scratch']
  %s0 = inlined_call_operand.vmem [shape: f32[2,4,17,17,3], index: 0, kind: input, shape index: {}]
  %s1 = inlined_call_operand.vmem [shape: f32[9,3,16], index: 1, kind: input, shape index: {}]
  %s2 = inlined_call_operand.vmem [shape: f32[1,16], index: 2, kind: input, shape index: {}]
  %s3 = inlined_call_operand.vmem [shape: f32[2,1,16], index: 3, kind: output, shape index: {}]
  %s4 = sld [smem:[#allocation0]]
  $region45: #{net_forward.2} parent=0
    _
  %s6 = ssub.s32 1, %s4
  %s7 = scalar_select 0, %s6, %s4
  loop: start=0, step=1, limit=4
  $region2: #{net_forward.2} parent=0 // loop_pre_header
    _
  $region3: #{net_forward.2} parent=0 // loop_header
    %s9 = sphi 0, %s13
    %p10 = scmp.ge.s32.totalorder %s9, 4
    %s19 = sphi 0, %s21
    %s22 = sphi 0, %s19
    %s23 = sphi 0, %s22
    %s39 = sphi 0, %s23
    %s43 = sphi 0, %s43
    %s45 = sphi 0, %s43
    %s46 = sphi 0, %s45
    %s60 = sphi 0, %s46
    %s64 = sphi 0, %s64
    %s66 = sphi 0, %s64
    %s67 = sphi 0, %s66
    %s81 = sphi 0, %s67
    %s87 = sphi 0, %s89
    %s90 = sphi 0, %s87
    %s91 = sphi 0, %s90
    %s107 = sphi 0, %s91
  $region4: #{net_forward.2} parent=0 // loop_header_branch
    %12 = sbr.rel (%p10) target = $region8
  $region5: #{net_forward.2} parent=0 // loop_body
    %s14 = ssub.s32 %s9, 1
    %s15 = ssub.s32 %s9, 2
    %s16 = sadd.s32 %s9, 1
    %s17 = ssub.s32 %s9, %s16
    %p18 = scmp.eq.s32.totalorder %s17, 0
    %s20 = sadd.s32 %s19, 1
    %s21 = scalar_select %p18, %s19, %s20
    %p24 = pneg %p18
    %p25 = scmp.eq.s32.totalorder %s9, 1
    %p26 = por %p24, %p25
    %p27 = scmp.ne.s32.totalorder %s19, %s22
    %p28 = scmp.eq.s32.totalorder %s9, 0
    %p29 = por %p27, %p28
    %p30 = scmp.ne.s32.totalorder %s19, %s22
    %p31 = scmp.eq.s32.totalorder %s14, 1
    %p32 = por %p30, %p31
    %p33 = scmp.ne.s32.totalorder %s22, %s23
    %p34 = scmp.eq.s32.totalorder %s14, 0
    %p35 = por %p33, %p34
    %p36 = scmp.ne.s32.totalorder %s22, %s23
    %p37 = scmp.eq.s32.totalorder %s15, 1
    %p38 = por %p36, %p37
    %p40 = scmp.ne.s32.totalorder %s23, %s39
    %p41 = scmp.eq.s32.totalorder %s15, 0
    %p42 = por %p40, %p41
    %s44 = sadd.s32 %s43, 1
    %p47 = scmp.eq.s32.totalorder %s9, 1
    %p48 = scmp.ne.s32.totalorder %s43, %s45
    %p49 = scmp.eq.s32.totalorder %s9, 0
    %p50 = por %p48, %p49
    %p51 = scmp.ne.s32.totalorder %s43, %s45
    %p52 = scmp.eq.s32.totalorder %s14, 1
    %p53 = por %p51, %p52
    %p54 = scmp.ne.s32.totalorder %s45, %s46
    %p55 = scmp.eq.s32.totalorder %s14, 0
    %p56 = por %p54, %p55
    %p57 = scmp.ne.s32.totalorder %s45, %s46
    %p58 = scmp.eq.s32.totalorder %s15, 1
    %p59 = por %p57, %p58
    %p61 = scmp.ne.s32.totalorder %s46, %s60
    %p62 = scmp.eq.s32.totalorder %s15, 0
    %p63 = por %p61, %p62
    %s65 = sadd.s32 %s64, 1
    %p68 = scmp.eq.s32.totalorder %s9, 1
    %p69 = scmp.ne.s32.totalorder %s64, %s66
    %p70 = scmp.eq.s32.totalorder %s9, 0
    %p71 = por %p69, %p70
    %p72 = scmp.ne.s32.totalorder %s64, %s66
    %p73 = scmp.eq.s32.totalorder %s14, 1
    %p74 = por %p72, %p73
    %p75 = scmp.ne.s32.totalorder %s66, %s67
    %p76 = scmp.eq.s32.totalorder %s14, 0
    %p77 = por %p75, %p76
    %p78 = scmp.ne.s32.totalorder %s66, %s67
    %p79 = scmp.eq.s32.totalorder %s15, 1
    %p80 = por %p78, %p79
    %p82 = scmp.ne.s32.totalorder %s67, %s81
    %p83 = scmp.eq.s32.totalorder %s15, 0
    %p84 = por %p82, %p83
    %s85 = ssub.s32 %s9, %s16
    %p86 = scmp.eq.s32.totalorder %s85, 0
    %s88 = sadd.s32 %s87, 1
    %s89 = scalar_select %p86, %s87, %s88
    %p92 = pneg %p86
    %p93 = scmp.eq.s32.totalorder %s9, 1
    %p94 = por %p92, %p93
    %p95 = scmp.ne.s32.totalorder %s87, %s90
    %p96 = scmp.eq.s32.totalorder %s9, 0
    %p97 = por %p95, %p96
    %p98 = scmp.ne.s32.totalorder %s87, %s90
    %p99 = scmp.eq.s32.totalorder %s14, 1
    %p100 = por %p98, %p99
    %p101 = scmp.ne.s32.totalorder %s90, %s91
    %p102 = scmp.eq.s32.totalorder %s14, 0
    %p103 = por %p101, %p102
    %p104 = scmp.ne.s32.totalorder %s90, %s91
    %p105 = scmp.eq.s32.totalorder %s15, 1
    %p106 = por %p104, %p105
    %p108 = scmp.ne.s32.totalorder %s91, %s107
    %p109 = scmp.eq.s32.totalorder %s15, 0
    %p110 = por %p108, %p109
    %p111 = scmp.le.s32.totalorder 1, %s9
    %p112 = scmp.lt.s32.totalorder %s9, 3
    %p113 = pnand %p111, %p112
    %p114 = pneg %p113
    // Predicated region
    $region9: #{net_forward.2} parent=5 // pred_check
      _
    $region10: #{net_forward.2} parent=5 // pred_check_branch
      %116 = sbr.rel (%p113) target = $region12
    $region11: #{net_forward.2} parent=5 // pred_region
      %s117 = ssub.s32 %s9, 1
      // Predicated region
      $region13: #{net_forward.2} parent=11 // pred_check
        %p118 = pneg %p56
      $region14: #{net_forward.2} parent=11 // pred_check_branch
        %120 = sbr.rel (%p118) target = $region16
      $region15: #{net_forward.2} parent=11 // pred_region
        _
      $region16: #{net_forward.2} parent=11 // pred_fallthru
        _
      // Predicated region
      $region17: #{net_forward.2} parent=11 // pred_check
        %p121 = pneg %p77
      $region18: #{net_forward.2} parent=11 // pred_check_branch
        %123 = sbr.rel (%p121) target = $region20
      $region19: #{net_forward.2} parent=11 // pred_region
        _
      $region20: #{net_forward.2} parent=11 // pred_fallthru
        _
    $region12: #{net_forward.2} parent=5 // pred_fallthru
      _
    %p124 = scmp.lt.s32.totalorder %s9, 2
    // Predicated region
    $region21: #{net_forward.2} parent=5 // pred_check
      %p125 = pneg %p124
    $region22: #{net_forward.2} parent=5 // pred_check_branch
      %127 = sbr.rel (%p125) target = $region24
    $region23: #{net_forward.2} parent=5 // pred_region
      // Predicated region
      $region25: #{net_forward.2} parent=23 // pred_check
        %p128 = pneg %p29
      $region26: #{net_forward.2} parent=23 // pred_check_branch
        %130 = sbr.rel (%p128) target = $region28
      $region27: #{net_forward.2} parent=23 // pred_region
        %p131 = scmp.lt.s32.totalorder %s9, 1
        %s132 = scalar_select %p131, %s9, 1
        %s133 = smul.addr %s132, 204
        %s134 = smul.addr %s133, 8
        %s135 = scalar_lea.vmem %s0, %s134
      $region28: #{net_forward.2} parent=23 // pred_fallthru
        _
    $region24: #{net_forward.2} parent=5 // pred_fallthru
      _
    %p136 = scmp.le.s32.totalorder 1, %s9
    %p137 = scmp.lt.s32.totalorder %s9, 3
    %p138 = pnand %p136, %p137
    %p139 = pneg %p138
    // Predicated region
    $region29: #{net_forward.2} parent=5 // pred_check
      _
    $region30: #{net_forward.2} parent=5 // pred_check_branch
      %141 = sbr.rel (%p138) target = $region32
    $region31: #{net_forward.2} parent=5 // pred_region
      %s142 = ssub.s32 %s9, 1
      %p143 = scmp.lt.s32.totalorder %s14, 1
      %s144 = scalar_select %p143, %s14, 1
      %s145 = smul.addr %s144, 204
      %s146 = smul.addr %s145, 8
      %s147 = scalar_lea.vmem %s0, %s146
      %p148 = pneg %p35
      %p149 = pneg %p32
      %p150 = pneg %p56
      %p151 = pneg %p53
      %p152 = pneg %p77
      %p153 = pneg %p74
      %p154 = pneg %p103
      %p155 = pneg %p100
      %p156 = scmp.lt.s32.totalorder %s14, 1
      %s157 = scalar_select %p156, %s14, 1
      %s158 = scalar_lea.vmem %s3, %s157
      %p159 = scmp.lt.s32.totalorder %s14, 1
      %s160 = scalar_select %p159, %s14, 1
      %s161 = smul.addr %s160, 204
      %s162 = smul.addr %s161, 8
      %s163 = scalar_lea.vmem %s0, %s162
      %p164 = scmp.lt.s32.totalorder %s14, 1
      %s165 = scalar_select %p164, %s14, 1
      %s166 = scalar_lea.vmem %s3, %s165
      %v167 = vld [vmem:[%s163] sm:$0xff]
      %v168 = vld [vmem:[%s163 + $0x8] sm:$0xff]
      %v169 = vld [vmem:[%s163 + $0x18] sm:$0xff]
      %v170 = vld [vmem:[%s163 + $0x20] sm:$0xff]
      %v171 = vld [vmem:[%s163 + $0x30] sm:$0xff]
      %v172 = vld [vmem:[%s163 + $0x38] sm:$0xff]
      %v173 = vld [vmem:[%s163 + $0x48] sm:$0xff]
      %v174 = vld [vmem:[%s163 + $0x50] sm:$0xff]
      %v175 = vld [vmem:[%s163 + $0x60] sm:$0xff]
      %v176 = vld [vmem:[%s163 + $0x68] sm:$0xff]
      %v177 = vld [vmem:[%s163 + $0x78] sm:$0xff]
      %v178 = vld [vmem:[%s163 + $0x80] sm:$0xff]
      %v179 = vld [vmem:[%s163 + $0x90] sm:$0xff]
      %v180 = vld [vmem:[%s163 + $0x98] sm:$0xff]
      %v181 = vld [vmem:[%s163 + $0xa8] sm:$0xff]
      %v182 = vld [vmem:[%s163 + $0xb0] sm:$0xff]
      %v183 = vld [vmem:[%s163 + $0xc0] sm:$0xff]
      %v184 = vld [vmem:[%s163 + $0xc8] sm:$0xff]
      %v185 = vld [vmem:[%s163 + $0xd8] sm:$0xff]
      %v186 = vld [vmem:[%s163 + $0xe0] sm:$0xff]
      %v187 = vld [vmem:[%s163 + $0xf0] sm:$0xff]
      %v188 = vld [vmem:[%s163 + $0xf8] sm:$0xff]
      %v189 = vld [vmem:[%s163 + $0x108] sm:$0xff]
      %v190 = vld [vmem:[%s163 + $0x110] sm:$0xff]
      %v191 = vld [vmem:[%s163 + $0x120] sm:$0xff]
      %v192 = vld [vmem:[%s163 + $0x128] sm:$0xff]
      %v193 = vld [vmem:[%s163 + $0x138] sm:$0xff]
      %v194 = vld [vmem:[%s163 + $0x140] sm:$0xff]
      %v195 = vld [vmem:[%s163 + $0x150] sm:$0xff]
      %v196 = vld [vmem:[%s163 + $0x158] sm:$0xff]
      %v197 = vld [vmem:[%s163 + $0x168] sm:$0xff]
      %v198 = vld [vmem:[%s163 + $0x170] sm:$0xff]
      %v199 = vld [vmem:[%s1] sm:$0x7]
      %s200 = scalar_lea.vmem %s163, 408
      %v201 = vld [vmem:[%s200] sm:$0xff]
      %v202 = vld [vmem:[%s200 + $0x8] sm:$0xff]
      %v203 = vld [vmem:[%s200 + $0x18] sm:$0xff]
      %v204 = vld [vmem:[%s200 + $0x20] sm:$0xff]
      %v205 = vld [vmem:[%s200 + $0x30] sm:$0xff]
      %v206 = vld [vmem:[%s200 + $0x38] sm:$0xff]
      %v207 = vld [vmem:[%s200 + $0x48] sm:$0xff]
      %v208 = vld [vmem:[%s200 + $0x50] sm:$0xff]
      %v209 = vld [vmem:[%s200 + $0x60] sm:$0xff]
      %v210 = vld [vmem:[%s200 + $0x68] sm:$0xff]
      %v211 = vld [vmem:[%s200 + $0x78] sm:$0xff]
      %v212 = vld [vmem:[%s200 + $0x80] sm:$0xff]
      %v213 = vld [vmem:[%s200 + $0x90] sm:$0xff]
      %v214 = vld [vmem:[%s200 + $0x98] sm:$0xff]
      %v215 = vld [vmem:[%s200 + $0xa8] sm:$0xff]
      %v216 = vld [vmem:[%s200 + $0xb0] sm:$0xff]
      %v217 = vld [vmem:[%s200 + $0xc0] sm:$0xff]
      %v218 = vld [vmem:[%s200 + $0xc8] sm:$0xff]
      %v219 = vld [vmem:[%s200 + $0xd8] sm:$0xff]
      %v220 = vld [vmem:[%s200 + $0xe0] sm:$0xff]
      %v221 = vld [vmem:[%s200 + $0xf0] sm:$0xff]
      %v222 = vld [vmem:[%s200 + $0xf8] sm:$0xff]
      %v223 = vld [vmem:[%s200 + $0x108] sm:$0xff]
      %v224 = vld [vmem:[%s200 + $0x110] sm:$0xff]
      %v225 = vld [vmem:[%s200 + $0x120] sm:$0xff]
      %v226 = vld [vmem:[%s200 + $0x128] sm:$0xff]
      %v227 = vld [vmem:[%s200 + $0x138] sm:$0xff]
      %v228 = vld [vmem:[%s200 + $0x140] sm:$0xff]
      %v229 = vld [vmem:[%s200 + $0x150] sm:$0xff]
      %v230 = vld [vmem:[%s200 + $0x158] sm:$0xff]
      %v231 = vld [vmem:[%s200 + $0x168] sm:$0xff]
      %v232 = vld [vmem:[%s200 + $0x170] sm:$0xff]
      %s233 = scalar_lea.vmem %s1, 4
      %v234 = vld [vmem:[%s233] sm:$0x7]
      %vm235 = vcmask 23552
      %v237 = vsel %vm235, %v201, 0
      %v240 = vsel %vm235, %v202, 0
      %v243 = vsel %vm235, %v203, 0
      %v246 = vsel %vm235, %v204, 0
      %v249 = vsel %vm235, %v205, 0
      %v252 = vsel %vm235, %v206, 0
      %v255 = vsel %vm235, %v207, 0
      %v258 = vsel %vm235, %v208, 0
      %v261 = vsel %vm235, %v209, 0
      %v264 = vsel %vm235, %v210, 0
      %v267 = vsel %vm235, %v211, 0
      %v270 = vsel %vm235, %v212, 0
      %v273 = vsel %vm235, %v213, 0
      %v276 = vsel %vm235, %v214, 0
      %v279 = vsel %vm235, %v215, 0
      %v282 = vsel %vm235, %v216, 0
      %v285 = vsel %vm235, %v217, 0
      %v288 = vsel %vm235, %v218, 0
      %v291 = vsel %vm235, %v219, 0
      %v294 = vsel %vm235, %v220, 0
      %v297 = vsel %vm235, %v221, 0
      %v300 = vsel %vm235, %v222, 0
      %v303 = vsel %vm235, %v223, 0
      %v306 = vsel %vm235, %v224, 0
      %v309 = vsel %vm235, %v225, 0
      %v312 = vsel %vm235, %v226, 0
      %v315 = vsel %vm235, %v227, 0
      %v318 = vsel %vm235, %v228, 0
      %v321 = vsel %vm235, %v229, 0
      %v324 = vsel %vm235, %v230, 0
      %v327 = vsel %vm235, %v231, 0
      %v330 = vsel %vm235, %v232, 0
      %vm332 = vcmask 1042432
      %v334 = vsel %vm332, %v234, 0
      %336 = vmatprep.subr.mxu0 0.0
      %337 = vmatpush1.msra.mxu0 %v334
      %338 = vmatprep.subr.mxu0 0.0
      %339 = vmatpush1.msra.mxu0 0.0
      %340 = vmatprep.subr.mxu0 0.0
      %341 = vmatpush1.msra.mxu0 0.0
      %342 = vmatprep.subr.mxu0 0.0
      %343 = vmatpush1.msra.mxu0 0.0
      %344 = vmatprep.subr.mxu0 0.0
      %345 = vmatpush1.msra.mxu0 0.0
      %346 = vmatprep.subr.mxu0 0.0
      %347 = vmatpush1.msra.mxu0 0.0
      %348 = vmatprep.subr.mxu0 0.0
      %349 = vmatpush1.msra.mxu0 0.0
      %350 = vmatprep.subr.mxu0 0.0
      %351 = vmatpush1.msra.mxu0 0.0
      %352 = vmatprep.subr.mxu0 0.0
      %353 = vmatpush1.msra.mxu0 0.0
      %354 = vmatprep.subr.mxu0 0.0
      %355 = vmatpush1.msra.mxu0 0.0
      %356 = vmatprep.subr.mxu0 0.0
      %357 = vmatpush1.msra.mxu0 0.0
      %358 = vmatprep.subr.mxu0 0.0
      %359 = vmatpush1.msra.mxu0 0.0
      %360 = vmatprep.subr.mxu0 0.0
      %361 = vmatpush1.msra.mxu0 0.0
      %362 = vmatprep.subr.mxu0 0.0
      %363 = vmatpush1.msra.mxu0 0.0
      %364 = vmatprep.subr.mxu0 0.0
      %365 = vmatpush1.msra.mxu0 0.0
      %366 = vmatprep.subr.mxu0 0.0
      %367 = vmatpush1.msra.mxu0 0.0
      %368 = vmatprep.subr.mxu0 0.0
      %369 = vmatpush1.msra.mxu0 0.0
      %370 = vmatprep.subr.mxu0 0.0
      %371 = vmatpush1.msra.mxu0 0.0
      %372 = vmatprep.subr.mxu0 0.0
      %373 = vmatpush1.msra.mxu0 0.0
      %374 = vmatprep.subr.mxu0 0.0
      %375 = vmatpush1.msra.mxu0 0.0
      %376 = vmatprep.subr.mxu0 0.0
      %377 = vmatpush1.msra.mxu0 0.0
      %378 = vmatprep.subr.mxu0 0.0
      %379 = vmatpush1.msra.mxu0 0.0
      %380 = vmatprep.subr.mxu0 0.0
      %381 = vmatpush1.msra.mxu0 0.0
      %382 = vmatprep.subr.mxu0 0.0
      %383 = vmatpush1.msra.mxu0 0.0
      %384 = vmatprep.subr.mxu0 0.0
      %385 = vmatpush1.msra.mxu0 0.0
      %386 = vmatprep.subr.mxu0 0.0
      %387 = vmatpush1.msra.mxu0 0.0
      %388 = vmatprep.subr.mxu0 0.0
      %389 = vmatpush1.msra.mxu0 0.0
      %390 = vmatprep.subr.mxu0 0.0
      %391 = vmatpush1.msra.mxu0 0.0
      %392 = vmatprep.subr.mxu0 0.0
      %393 = vmatpush1.msra.mxu0 0.0
      %394 = vmatprep.subr.mxu0 0.0
      %395 = vmatpush1.msra.mxu0 0.0
      %396 = vmatprep.subr.mxu0 0.0
      %397 = vmatpush1.msra.mxu0 0.0
      %398 = vmatprep.subr.mxu0 0.0
      %399 = vmatpush1.msra.mxu0 0.0
      %400 = vmatprep.mubr.f32.mxu0 0.0
      %401 = vmatmul.mubr.f32.gmra.mrb[0].mxu0 %v237
      %v402 = vpop.f32.mrb[0].mxu0
      %v403 = vadd.f32 0.0, %v402
      %v404 = vpop.f32.mrb[0].mxu0
      %405 = vmatprep.mubr.f32.mxu0 0.0
      %406 = vmatmul.mubr.f32.gmra.mrb[0].mxu0 %v240
      %v407 = vpop.f32.mrb[0].mxu0
      %v408 = vadd.f32 0.0, %v407
      %v409 = vpop.f32.mrb[0].mxu0
      %410 = vmatprep.mubr.f32.mxu0 0.0
      %411 = vmatmul.mubr.f32.gmra.mrb[0].mxu0 %v243
      %v412 = vpop.f32.mrb[0].mxu0
      %v413 = vadd.f32 0.0, %v412
      %v414 = vpop.f32.mrb[0].mxu0
      %415 = vmatprep.mubr.f32.mxu0 0.0
      %416 = vmatmul.mubr.f32.gmra.mrb[0].mxu0 %v246
      %v417 = vpop.f32.mrb[0].mxu0
      %v418 = vadd.f32 0.0, %v417
      %v419 = vpop.f32.mrb[0].mxu0
      %420 = vmatprep.mubr.f32.mxu0 0.0
      %421 = vmatmul.mubr.f32.gmra.mrb[0].mxu0 %v249
      %v422 = vpop.f32.mrb[0].mxu0
      %v423 = vadd.f32 0.0, %v422
      %v424 = vpop.f32.mrb[0].mxu0
      %425 = vmatprep.mubr.f32.mxu0 0.0
      %426 = vmatmul.mubr.f32.gmra.mrb[0].mxu0 %v252
      %v427 = vpop.f32.mrb[0].mxu0
      %v428 = vadd.f32 0.0, %v427
      %v429 = vpop.f32.mrb[0].mxu0
      %430 = vmatprep.mubr.f32.mxu0 0.0
      %431 = vmatmul.mubr.f32.gmra.mrb[0].mxu0 %v255
      %v432 = vpop.f32.mrb[0].mxu0
      %v433 = vadd.f32 0.0, %v432
      %v434 = vpop.f32.mrb[0].mxu0
      %435 = vmatprep.mubr.f32.mxu0 0.0
      %436 = vmatmul.mubr.f32.gmra.mrb[0].mxu0 %v258
      %v437 = vpop.f32.mrb[0].mxu0
      %v438 = vadd.f32 0.0, %v437
      %v439 = vpop.f32.mrb[0].mxu0
      %440 = vmatprep.mubr.f32.mxu0 0.0
      %441 = vmatmul.mubr.f32.gmra.mrb[0].mxu0 %v261
      %v442 = vpop.f32.mrb[0].mxu0
      %v443 = vadd.f32 0.0, %v442
      %v444 = vpop.f32.mrb[0].mxu0
      %445 = vmatprep.mubr.f32.mxu0 0.0
      %446 = vmatmul.mubr.f32.gmra.mrb[0].mxu0 %v264
      %v447 = vpop.f32.mrb[0].mxu0
      %v448 = vadd.f32 0.0, %v447
      %v449 = vpop.f32.mrb[0].mxu0
      %450 = vmatprep.mubr.f32.mxu0 0.0
      %451 = vmatmul.mubr.f32.gmra.mrb[0].mxu0 %v267
      %v452 = vpop.f32.mrb[0].mxu0
      %v453 = vadd.f32 0.0, %v452
      %v454 = vpop.f32.mrb[0].mxu0
      %455 = vmatprep.mubr.f32.mxu0 0.0
      %456 = vmatmul.mubr.f32.gmra.mrb[0].mxu0 %v270
      %v457 = vpop.f32.mrb[0].mxu0
      %v458 = vadd.f32 0.0, %v457
      %v459 = vpop.f32.mrb[0].mxu0
      %460 = vmatprep.mubr.f32.mxu0 0.0
      %461 = vmatmul.mubr.f32.gmra.mrb[0].mxu0 %v273
      %v462 = vpop.f32.mrb[0].mxu0
      %v463 = vadd.f32 0.0, %v462
      %v464 = vpop.f32.mrb[0].mxu0
      %465 = vmatprep.mubr.f32.mxu0 0.0
      %466 = vmatmul.mubr.f32.gmra.mrb[0].mxu0 %v276
      %v467 = vpop.f32.mrb[0].mxu0
      %v468 = vadd.f32 0.0, %v467
      %v469 = vpop.f32.mrb[0].mxu0
      %470 = vmatprep.mubr.f32.mxu0 0.0
      %471 = vmatmul.mubr.f32.gmra.mrb[0].mxu0 %v279
      %v472 = vpop.f32.mrb[0].mxu0
      %v473 = vadd.f32 0.0, %v472
      %v474 = vpop.f32.mrb[0].mxu0
      %475 = vmatprep.mubr.f32.mxu0 0.0
      %476 = vmatmul.mubr.f32.gmra.mrb[0].mxu0 %v282
      %v477 = vpop.f32.mrb[0].mxu0
      %v478 = vadd.f32 0.0, %v477
      %v479 = vpop.f32.mrb[0].mxu0
      %480 = vmatprep.mubr.f32.mxu0 0.0
      %481 = vmatmul.mubr.f32.gmra.mrb[0].mxu0 %v285
      %v482 = vpop.f32.mrb[0].mxu0
      %v483 = vadd.f32 0.0, %v482
      %v484 = vpop.f32.mrb[0].mxu0
      %485 = vmatprep.mubr.f32.mxu0 0.0
      %486 = vmatmul.mubr.f32.gmra.mrb[0].mxu0 %v288
      %v487 = vpop.f32.mrb[0].mxu0
      %v488 = vadd.f32 0.0, %v487
      %v489 = vpop.f32.mrb[0].mxu0
      %490 = vmatprep.mubr.f32.mxu0 0.0
      %491 = vmatmul.mubr.f32.gmra.mrb[0].mxu0 %v291
      %v492 = vpop.f32.mrb[0].mxu0
      %v493 = vadd.f32 0.0, %v492
      %v494 = vpop.f32.mrb[0].mxu0
      %495 = vmatprep.mubr.f32.mxu0 0.0
      %496 = vmatmul.mubr.f32.gmra.mrb[0].mxu0 %v294
      %v497 = vpop.f32.mrb[0].mxu0
      %v498 = vadd.f32 0.0, %v497
      %v499 = vpop.f32.mrb[0].mxu0
      %500 = vmatprep.mubr.f32.mxu0 0.0
      %501 = vmatmul.mubr.f32.gmra.mrb[0].mxu0 %v297
      %v502 = vpop.f32.mrb[0].mxu0
      %v503 = vadd.f32 0.0, %v502
      %v504 = vpop.f32.mrb[0].mxu0
      %505 = vmatprep.mubr.f32.mxu0 0.0
      %506 = vmatmul.mubr.f32.gmra.mrb[0].mxu0 %v300
      %v507 = vpop.f32.mrb[0].mxu0
      %v508 = vadd.f32 0.0, %v507
      %v509 = vpop.f32.mrb[0].mxu0
      %510 = vmatprep.mubr.f32.mxu0 0.0
      %511 = vmatmul.mubr.f32.gmra.mrb[0].mxu0 %v303
      %v512 = vpop.f32.mrb[0].mxu0
      %v513 = vadd.f32 0.0, %v512
      %v514 = vpop.f32.mrb[0].mxu0
      %515 = vmatprep.mubr.f32.mxu0 0.0
      %516 = vmatmul.mubr.f32.gmra.mrb[0].mxu0 %v306
      %v517 = vpop.f32.mrb[0].mxu0
      %v518 = vadd.f32 0.0, %v517
      %v519 = vpop.f32.mrb[0].mxu0
      %520 = vmatprep.mubr.f32.mxu0 0.0
      %521 = vmatmul.mubr.f32.gmra.mrb[0].mxu0 %v309
      %v522 = vpop.f32.mrb[0].mxu0
      %v523 = vadd.f32 0.0, %v522
      %v524 = vpop.f32.mrb[0].mxu0
      %525 = vmatprep.mubr.f32.mxu0 0.0
      %526 = vmatmul.mubr.f32.gmra.mrb[0].mxu0 %v312
      %v527 = vpop.f32.mrb[0].mxu0
      %v528 = vadd.f32 0.0, %v527
      %v529 = vpop.f32.mrb[0].mxu0
      %530 = vmatprep.mubr.f32.mxu0 0.0
      %531 = vmatmul.mubr.f32.gmra.mrb[0].mxu0 %v315
      %v532 = vpop.f32.mrb[0].mxu0
      %v533 = vadd.f32 0.0, %v532
      %v534 = vpop.f32.mrb[0].mxu0
      %535 = vmatprep.mubr.f32.mxu0 0.0
      %536 = vmatmul.mubr.f32.gmra.mrb[0].mxu0 %v318
      %v537 = vpop.f32.mrb[0].mxu0
      %v538 = vadd.f32 0.0, %v537
      %v539 = vpop.f32.mrb[0].mxu0
      %540 = vmatprep.mubr.f32.mxu0 0.0
      %541 = vmatmul.mubr.f32.gmra.mrb[0].mxu0 %v321
      %v542 = vpop.f32.mrb[0].mxu0
      %v543 = vadd.f32 0.0, %v542
      %v544 = vpop.f32.mrb[0].mxu0
      %545 = vmatprep.mubr.f32.mxu0 0.0
      %546 = vmatmul.mubr.f32.gmra.mrb[0].mxu0 %v324
      %v547 = vpop.f32.mrb[0].mxu0
      %v548 = vadd.f32 0.0, %v547
      %v549 = vpop.f32.mrb[0].mxu0
      %550 = vmatprep.mubr.f32.mxu0 0.0
      %551 = vmatmul.mubr.f32.gmra.mrb[0].mxu0 %v327
      %v552 = vpop.f32.mrb[0].mxu0
      %v553 = vadd.f32 0.0, %v552
      %v554 = vpop.f32.mrb[0].mxu0
      %555 = vmatprep.mubr.f32.mxu0 0.0
      %556 = vmatmul.mubr.f32.gmra.mrb[0].mxu0 %v330
      %v557 = vpop.f32.mrb[0].mxu0
      %v558 = vadd.f32 0.0, %v557
      %v559 = vpop.f32.mrb[0].mxu0
      %560 = vdwg.mxu0
      %v562 = vsel %vm235, %v167, 0
      %v565 = vsel %vm235, %v168, 0
      %v568 = vsel %vm235, %v169, 0
      %v571 = vsel %vm235, %v170, 0
      %v574 = vsel %vm235, %v171, 0
      %v577 = vsel %vm235, %v172, 0
      %v580 = vsel %vm235, %v173, 0
      %v583 = vsel %vm235, %v174, 0
      %v586 = vsel %vm235, %v175, 0
      %v589 = vsel %vm235, %v176, 0
      %v592 = vsel %vm235, %v177, 0
      %v595 = vsel %vm235, %v178, 0
      %v598 = vsel %vm235, %v179, 0
      %v601 = vsel %vm235, %v180, 0
      %v604 = vsel %vm235, %v181, 0
      %v607 = vsel %vm235, %v182, 0
      %v610 = vsel %vm235, %v183, 0
      %v613 = vsel %vm235, %v184, 0
      %v616 = vsel %vm235, %v185, 0
      %v619 = vsel %vm235, %v186, 0
      %v622 = vsel %vm235, %v187, 0
      %v625 = vsel %vm235, %v188, 0
      %v628 = vsel %vm235, %v189, 0
      %v631 = vsel %vm235, %v190, 0
      %v634 = vsel %vm235, %v191, 0
      %v637 = vsel %vm235, %v192, 0
      %v640 = vsel %vm235, %v193, 0
      %v643 = vsel %vm235, %v194, 0
      %v646 = vsel %vm235, %v195, 0
      %v649 = vsel %vm235, %v196, 0
      %v652 = vsel %vm235, %v197, 0
      %v655 = vsel %vm235, %v198, 0
      %v658 = vsel %vm332, %v199, 0
      %660 = vmatprep.subr.mxu0 0.0
      %661 = vmatpush1.msra.mxu0 %v658
      %662 = vmatprep.subr.mxu0 0.0
      %663 = vmatpush1.msra.mxu0 0.0
      %664 = vmatprep.subr.mxu0 0.0
      %665 = vmatpush1.msra.mxu0 0.0
      %666 = vmatprep.subr.mxu0 0.0
      %667 = vmatpush1.msra.mxu0 0.0
      %668 = vmatprep.subr.mxu0 0.0
      %669 = vmatpush1.msra.mxu0 0.0
      %670 = vmatprep.subr.mxu0 0.0
      %671 = vmatpush1.msra.mxu0 0.0
      %672 = vmatprep.subr.mxu0 0.0
      %673 = vmatpush1.msra.mxu0 0.0
      %674 = vmatprep.subr.mxu0 0.0
      %675 = vmatpush1.msra.mxu0 0.0
      %676 = vmatprep.subr.mxu0 0.0
      %677 = vmatpush1.msra.mxu0 0.0
      %678 = vmatprep.subr.mxu0 0.0
      %679 = vmatpush1.msra.mxu0 0.0
      %680 = vmatprep.subr.mxu0 0.0
      %681 = vmatpush1.msra.mxu0 0.0
      %682 = vmatprep.subr.mxu0 0.0
      %683 = vmatpush1.msra.mxu0 0.0
      %684 = vmatprep.subr.mxu0 0.0
      %685 = vmatpush1.msra.mxu0 0.0
      %686 = vmatprep.subr.mxu0 0.0
      %687 = vmatpush1.msra.mxu0 0.0
      %688 = vmatprep.subr.mxu0 0.0
      %689 = vmatpush1.msra.mxu0 0.0
      %690 = vmatprep.subr.mxu0 0.0
      %691 = vmatpush1.msra.mxu0 0.0
      %692 = vmatprep.subr.mxu0 0.0
      %693 = vmatpush1.msra.mxu0 0.0
      %694 = vmatprep.subr.mxu0 0.0
      %695 = vmatpush1.msra.mxu0 0.0
      %696 = vmatprep.subr.mxu0 0.0
      %697 = vmatpush1.msra.mxu0 0.0
      %698 = vmatprep.subr.mxu0 0.0
      %699 = vmatpush1.msra.mxu0 0.0
      %700 = vmatprep.subr.mxu0 0.0
      %701 = vmatpush1.msra.mxu0 0.0
      %702 = vmatprep.subr.mxu0 0.0
      %703 = vmatpush1.msra.mxu0 0.0
      %704 = vmatprep.subr.mxu0 0.0
      %705 = vmatpush1.msra.mxu0 0.0
      %706 = vmatprep.subr.mxu0 0.0
      %707 = vmatpush1.msra.mxu0 0.0
      %708 = vmatprep.subr.mxu0 0.0
      %709 = vmatpush1.msra.mxu0 0.0
      %710 = vmatprep.subr.mxu0 0.0
      %711 = vmatpush1.msra.mxu0 0.0
      %712 = vmatprep.subr.mxu0 0.0
      %713 = vmatpush1.msra.mxu0 0.0
      %714 = vmatprep.subr.mxu0 0.0
      %715 = vmatpush1.msra.mxu0 0.0
      %716 = vmatprep.subr.mxu0 0.0
      %717 = vmatpush1.msra.mxu0 0.0
      %718 = vmatprep.subr.mxu0 0.0
      %719 = vmatpush1.msra.mxu0 0.0
      %720 = vmatprep.subr.mxu0 0.0
      %721 = vmatpush1.msra.mxu0 0.0
      %722 = vmatprep.subr.mxu0 0.0
      %723 = vmatpush1.msra.mxu0 0.0
      %724 = vmatprep.mubr.f32.mxu0 0.0
      %725 = vmatmul.mubr.f32.gmra.mrb[0].mxu0 %v562
      %v726 = vpop.f32.mrb[0].mxu0
      %v727 = vadd.f32 %v403, %v726
      %v728 = vpop.f32.mrb[0].mxu0
      %729 = vmatprep.mubr.f32.mxu0 0.0
      %730 = vmatmul.mubr.f32.gmra.mrb[0].mxu0 %v565
      %v731 = vpop.f32.mrb[0].mxu0
      %v732 = vadd.f32 %v408, %v731
      %v733 = vpop.f32.mrb[0].mxu0
      %734 = vmatprep.mubr.f32.mxu0 0.0
      %735 = vmatmul.mubr.f32.gmra.mrb[0].mxu0 %v568
      %v736 = vpop.f32.mrb[0].mxu0
      %v737 = vadd.f32 %v413, %v736
      %v738 = vpop.f32.mrb[0].mxu0
      %739 = vmatprep.mubr.f32.mxu0 0.0
      %740 = vmatmul.mubr.f32.gmra.mrb[0].mxu0 %v571
      %v741 = vpop.f32.mrb[0].mxu0
      %v742 = vadd.f32 %v418, %v741
      %v743 = vpop.f32.mrb[0].mxu0
      %744 = vmatprep.mubr.f32.mxu0 0.0
      %745 = vmatmul.mubr.f32.gmra.mrb[0].mxu0 %v574
      %v746 = vpop.f32.mrb[0].mxu0
      %v747 = vadd.f32 %v423, %v746
      %v748 = vpop.f32.mrb[0].mxu0
      %749 = vmatprep.mubr.f32.mxu0 0.0
      %750 = vmatmul.mubr.f32.gmra.mrb[0].mxu0 %v577
      %v751 = vpop.f32.mrb[0].mxu0
      %v752 = vadd.f32 %v428, %v751
      %v753 = vpop.f32.mrb[0].mxu0
      %754 = vmatprep.mubr.f32.mxu0 0.0
      %755 = vmatmul.mubr.f32.gmra.mrb[0].mxu0 %v580
      %v756 = vpop.f32.mrb[0].mxu0
      %v757 = vadd.f32 %v433, %v756
      %v758 = vpop.f32.mrb[0].mxu0
      %759 = vmatprep.mubr.f32.mxu0 0.0
      %760 = vmatmul.mubr.f32.gmra.mrb[0].mxu0 %v583
      %v761 = vpop.f32.mrb[0].mxu0
      %v762 = vadd.f32 %v438, %v761
      %v763 = vpop.f32.mrb[0].mxu0
      %764 = vmatprep.mubr.f32.mxu0 0.0
      %765 = vmatmul.mubr.f32.gmra.mrb[0].mxu0 %v586
      %v766 = vpop.f32.mrb[0].mxu0
      %v767 = vadd.f32 %v443, %v766
      %v768 = vpop.f32.mrb[0].mxu0
      %769 = vmatprep.mubr.f32.mxu0 0.0
      %770 = vmatmul.mubr.f32.gmra.mrb[0].mxu0 %v589
      %v771 = vpop.f32.mrb[0].mxu0
      %v772 = vadd.f32 %v448, %v771
      %v773 = vpop.f32.mrb[0].mxu0
      %774 = vmatprep.mubr.f32.mxu0 0.0
      %775 = vmatmul.mubr.f32.gmra.mrb[0].mxu0 %v592
      %v776 = vpop.f32.mrb[0].mxu0
      %v777 = vadd.f32 %v453, %v776
      %v778 = vpop.f32.mrb[0].mxu0
      %779 = vmatprep.mubr.f32.mxu0 0.0
      %780 = vmatmul.mubr.f32.gmra.mrb[0].mxu0 %v595
      %v781 = vpop.f32.mrb[0].mxu0
      %v782 = vadd.f32 %v458, %v781
      %v783 = vpop.f32.mrb[0].mxu0
      %784 = vmatprep.mubr.f32.mxu0 0.0
      %785 = vmatmul.mubr.f32.gmra.mrb[0].mxu0 %v598
      %v786 = vpop.f32.mrb[0].mxu0
      %v787 = vadd.f32 %v463, %v786
      %v788 = vpop.f32.mrb[0].mxu0
      %789 = vmatprep.mubr.f32.mxu0 0.0
      %790 = vmatmul.mubr.f32.gmra.mrb[0].mxu0 %v601
      %v791 = vpop.f32.mrb[0].mxu0
      %v792 = vadd.f32 %v468, %v791
      %v793 = vpop.f32.mrb[0].mxu0
      %794 = vmatprep.mubr.f32.mxu0 0.0
      %795 = vmatmul.mubr.f32.gmra.mrb[0].mxu0 %v604
      %v796 = vpop.f32.mrb[0].mxu0
      %v797 = vadd.f32 %v473, %v796
      %v798 = vpop.f32.mrb[0].mxu0
      %799 = vmatprep.mubr.f32.mxu0 0.0
      %800 = vmatmul.mubr.f32.gmra.mrb[0].mxu0 %v607
      %v801 = vpop.f32.mrb[0].mxu0
      %v802 = vadd.f32 %v478, %v801
      %v803 = vpop.f32.mrb[0].mxu0
      %804 = vmatprep.mubr.f32.mxu0 0.0
      %805 = vmatmul.mubr.f32.gmra.mrb[0].mxu0 %v610
      %v806 = vpop.f32.mrb[0].mxu0
      %v807 = vadd.f32 %v483, %v806
      %v808 = vpop.f32.mrb[0].mxu0
      %809 = vmatprep.mubr.f32.mxu0 0.0
      %810 = vmatmul.mubr.f32.gmra.mrb[0].mxu0 %v613
      %v811 = vpop.f32.mrb[0].mxu0
      %v812 = vadd.f32 %v488, %v811
      %v813 = vpop.f32.mrb[0].mxu0
      %814 = vmatprep.mubr.f32.mxu0 0.0
      %815 = vmatmul.mubr.f32.gmra.mrb[0].mxu0 %v616
      %v816 = vpop.f32.mrb[0].mxu0
      %v817 = vadd.f32 %v493, %v816
      %v818 = vpop.f32.mrb[0].mxu0
      %819 = vmatprep.mubr.f32.mxu0 0.0
      %820 = vmatmul.mubr.f32.gmra.mrb[0].mxu0 %v619
      %v821 = vpop.f32.mrb[0].mxu0
      %v822 = vadd.f32 %v498, %v821
      %v823 = vpop.f32.mrb[0].mxu0
      %824 = vmatprep.mubr.f32.mxu0 0.0
      %825 = vmatmul.mubr.f32.gmra.mrb[0].mxu0 %v622
      %v826 = vpop.f32.mrb[0].mxu0
      %v827 = vadd.f32 %v503, %v826
      %v828 = vpop.f32.mrb[0].mxu0
      %829 = vmatprep.mubr.f32.mxu0 0.0
      %830 = vmatmul.mubr.f32.gmra.mrb[0].mxu0 %v625
      %v831 = vpop.f32.mrb[0].mxu0
      %v832 = vadd.f32 %v508, %v831
      %v833 = vpop.f32.mrb[0].mxu0
      %834 = vmatprep.mubr.f32.mxu0 0.0
      %835 = vmatmul.mubr.f32.gmra.mrb[0].mxu0 %v628
      %v836 = vpop.f32.mrb[0].mxu0
      %v837 = vadd.f32 %v513, %v836
      %v838 = vpop.f32.mrb[0].mxu0
      %839 = vmatprep.mubr.f32.mxu0 0.0
      %840 = vmatmul.mubr.f32.gmra.mrb[0].mxu0 %v631
      %v841 = vpop.f32.mrb[0].mxu0
      %v842 = vadd.f32 %v518, %v841
      %v843 = vpop.f32.mrb[0].mxu0
      %844 = vmatprep.mubr.f32.mxu0 0.0
      %845 = vmatmul.mubr.f32.gmra.mrb[0].mxu0 %v634
      %v846 = vpop.f32.mrb[0].mxu0
      %v847 = vadd.f32 %v523, %v846
      %v848 = vpop.f32.mrb[0].mxu0
      %849 = vmatprep.mubr.f32.mxu0 0.0
      %850 = vmatmul.mubr.f32.gmra.mrb[0].mxu0 %v637
      %v851 = vpop.f32.mrb[0].mxu0
      %v852 = vadd.f32 %v528, %v851
      %v853 = vpop.f32.mrb[0].mxu0
      %854 = vmatprep.mubr.f32.mxu0 0.0
      %855 = vmatmul.mubr.f32.gmra.mrb[0].mxu0 %v640
      %v856 = vpop.f32.mrb[0].mxu0
      %v857 = vadd.f32 %v533, %v856
      %v858 = vpop.f32.mrb[0].mxu0
      %859 = vmatprep.mubr.f32.mxu0 0.0
      %860 = vmatmul.mubr.f32.gmra.mrb[0].mxu0 %v643
      %v861 = vpop.f32.mrb[0].mxu0
      %v862 = vadd.f32 %v538, %v861
      %v863 = vpop.f32.mrb[0].mxu0
      %864 = vmatprep.mubr.f32.mxu0 0.0
      %865 = vmatmul.mubr.f32.gmra.mrb[0].mxu0 %v646
      %v866 = vpop.f32.mrb[0].mxu0
      %v867 = vadd.f32 %v543, %v866
      %v868 = vpop.f32.mrb[0].mxu0
      %869 = vmatprep.mubr.f32.mxu0 0.0
      %870 = vmatmul.mubr.f32.gmra.mrb[0].mxu0 %v649
      %v871 = vpop.f32.mrb[0].mxu0
      %v872 = vadd.f32 %v548, %v871
      %v873 = vpop.f32.mrb[0].mxu0
      %874 = vmatprep.mubr.f32.mxu0 0.0
      %875 = vmatmul.mubr.f32.gmra.mrb[0].mxu0 %v652
      %v876 = vpop.f32.mrb[0].mxu0
      %v877 = vadd.f32 %v553, %v876
      %v878 = vpop.f32.mrb[0].mxu0
      %879 = vmatprep.mubr.f32.mxu0 0.0
      %880 = vmatmul.mubr.f32.gmra.mrb[0].mxu0 %v655
      %v881 = vpop.f32.mrb[0].mxu0
      %v882 = vadd.f32 %v558, %v881
      %v883 = vpop.f32.mrb[0].mxu0
      %884 = vdwg.mxu0
      %v885 = vld [vmem:[%s163 + $0x1] sm:$0xff]
      %v886 = vld [vmem:[%s163 + $0x9] sm:$0xff]
      %v887 = vld [vmem:[%s163 + $0x19] sm:$0xff]
      %v888 = vld [vmem:[%s163 + $0x21] sm:$0xff]
      %v889 = vld [vmem:[%s163 + $0x31] sm:$0xff]
      %v890 = vld [vmem:[%s163 + $0x39] sm:$0xff]
      %v891 = vld [vmem:[%s163 + $0x49] sm:$0xff]
      %v892 = vld [vmem:[%s163 + $0x51] sm:$0xff]
      %v893 = vld [vmem:[%s163 + $0x61] sm:$0xff]
      %v894 = vld [vmem:[%s163 + $0x69] sm:$0xff]
      %v895 = vld [vmem:[%s163 + $0x79] sm:$0xff]
      %v896 = vld [vmem:[%s163 + $0x81] sm:$0xff]
      %v897 = vld [vmem:[%s163 + $0x91] sm:$0xff]
      %v898 = vld [vmem:[%s163 + $0x99] sm:$0xff]
      %v899 = vld [vmem:[%s163 + $0xa9] sm:$0xff]
      %v900 = vld [vmem:[%s163 + $0xb1] sm:$0xff]
      %v901 = vld [vmem:[%s163 + $0xc1] sm:$0xff]
      %v902 = vld [vmem:[%s163 + $0xc9] sm:$0xff]
      %v903 = vld [vmem:[%s163 + $0xd9] sm:$0xff]
      %v904 = vld [vmem:[%s163 + $0xe1] sm:$0xff]
      %v905 = vld [vmem:[%s163 + $0xf1] sm:$0xff]
      %v906 = vld [vmem:[%s163 + $0xf9] sm:$0xff]
      %v907 = vld [vmem:[%s163 + $0x109] sm:$0xff]
      %v908 = vld [vmem:[%s163 + $0x111] sm:$0xff]
      %v909 = vld [vmem:[%s163 + $0x121] sm:$0xff]
      %v910 = vld [vmem:[%s163 + $0x129] sm:$0xff]
      %v911 = vld [vmem:[%s163 + $0x139] sm:$0xff]
      %v912 = vld [vmem:[%s163 + $0x141] sm:$0xff]
      %v913 = vld [vmem:[%s163 + $0x151] sm:$0xff]
      %v914 = vld [vmem:[%s163 + $0x159] sm:$0xff]
      %v915 = vld [vmem:[%s163 + $0x169] sm:$0xff]
      %v916 = vld [vmem:[%s163 + $0x171] sm:$0xff]
      %s917 = scalar_lea.vmem %s1, 8
      %v918 = vld [vmem:[%s917] sm:$0x7]
      %v920 = vsel %vm235, %v885, 0
      %v923 = vsel %vm235, %v886, 0
      %v926 = vsel %vm235, %v887, 0
      %v929 = vsel %vm235, %v888, 0
      %v932 = vsel %vm235, %v889, 0
      %v935 = vsel %vm235, %v890, 0
      %v938 = vsel %vm235, %v891, 0
      %v941 = vsel %vm235, %v892, 0
      %v944 = vsel %vm235, %v893, 0
      %v947 = vsel %vm235, %v894, 0
      %v950 = vsel %vm235, %v895, 0
      %v953 = vsel %vm235, %v896, 0
      %v956 = vsel %vm235, %v897, 0
      %v959 = vsel %vm235, %v898, 0
      %v962 = vsel %vm235, %v899, 0
      %v965 = vsel %vm235, %v900, 0
      %v968 = vsel %vm235, %v901, 0
      %v971 = vsel %vm235, %v902, 0
      %v974 = vsel %vm235, %v903, 0
      %v977 = vsel %vm235, %v904, 0
      %v980 = vsel %vm235, %v905, 0
      %v983 = vsel %vm235, %v906, 0
      %v986 = vsel %vm235, %v907, 0
      %v989 = vsel %vm235, %v908, 0
      %v992 = vsel %vm235, %v909, 0
      %v995 = vsel %vm235, %v910, 0
      %v998 = vsel %vm235, %v911, 0
      %v1001 = vsel %vm235, %v912, 0
      %v1004 = vsel %vm235, %v913, 0
      %v1007 = vsel %vm235, %v914, 0
      %v1010 = vsel %vm235, %v915, 0
      %v1013 = vsel %vm235, %v916, 0
      %v1016 = vsel %vm332, %v918, 0
      %1018 = vmatprep.subr.mxu0 0.0
      %1019 = vmatpush1.msra.mxu0 %v1016
      %1020 = vmatprep.subr.mxu0 0.0
      %1021 = vmatpush1.msra.mxu0 0.0
      %1022 = vmatprep.subr.mxu0 0.0
      %1023 = vmatpush1.msra.mxu0 0.0
      %1024 = vmatprep.subr.mxu0 0.0
      %1025 = vmatpush1.msra.mxu0 0.0
      %1026 = vmatprep.subr.mxu0 0.0
      %1027 = vmatpush1.msra.mxu0 0.0
      %1028 = vmatprep.subr.mxu0 0.0
      %1029 = vmatpush1.msra.mxu0 0.0
      %1030 = vmatprep.subr.mxu0 0.0
      %1031 = vmatpush1.msra.mxu0 0.0
      %1032 = vmatprep.subr.mxu0 0.0
      %1033 = vmatpush1.msra.mxu0 0.0
      %1034 = vmatprep.subr.mxu0 0.0
      %1035 = vmatpush1.msra.mxu0 0.0
      %1036 = vmatprep.subr.mxu0 0.0
      %1037 = vmatpush1.msra.mxu0 0.0
      %1038 = vmatprep.subr.mxu0 0.0
      %1039 = vmatpush1.msra.mxu0 0.0
      %1040 = vmatprep.subr.mxu0 0.0
      %1041 = vmatpush1.msra.mxu0 0.0
      %1042 = vmatprep.subr.mxu0 0.0
      %1043 = vmatpush1.msra.mxu0 0.0
      %1044 = vmatprep.subr.mxu0 0.0
      %1045 = vmatpush1.msra.mxu0 0.0
      %1046 = vmatprep.subr.mxu0 0.0
      %1047 = vmatpush1.msra.mxu0 0.0
      %1048 = vmatprep.subr.mxu0 0.0
      %1049 = vmatpush1.msra.mxu0 0.0
      %1050 = vmatprep.subr.mxu0 0.0
      %1051 = vmatpush1.msra.mxu0 0.0
      %1052 = vmatprep.subr.mxu0 0.0
      %1053 = vmatpush1.msra.mxu0 0.0
      %1054 = vmatprep.subr.mxu0 0.0
      %1055 = vmatpush1.msra.mxu0 0.0
      %1056 = vmatprep.subr.mxu0 0.0
      %1057 = vmatpush1.msra.mxu0 0.0
      %1058 = vmatprep.subr.mxu0 0.0
      %1059 = vmatpush1.msra.mxu0 0.0
      %1060 = vmatprep.subr.mxu0 0.0
      %1061 = vmatpush1.msra.mxu0 0.0
      %1062 = vmatprep.subr.mxu0 0.0
      %1063 = vmatpush1.msra.mxu0 0.0
      %1064 = vmatprep.subr.mxu0 0.0
      %1065 = vmatpush1.msra.mxu0 0.0
      %1066 = vmatprep.subr.mxu0 0.0
      %1067 = vmatpush1.msra.mxu0 0.0
      %1068 = vmatprep.subr.mxu0 0.0
      %1069 = vmatpush1.msra.mxu0 0.0
      %1070 = vmatprep.subr.mxu0 0.0
      %1071 = vmatpush1.msra.mxu0 0.0
      %1072 = vmatprep.subr.mxu0 0.0
      %1073 = vmatpush1.msra.mxu0 0.0
      %1074 = vmatprep.subr.mxu0 0.0
      %1075 = vmatpush1.msra.mxu0 0.0
      %1076 = vmatprep.subr.mxu0 0.0
      %1077 = vmatpush1.msra.mxu0 0.0
      %1078 = vmatprep.subr.mxu0 0.0
      %1079 = vmatpush1.msra.mxu0 0.0
      %1080 = vmatprep.subr.mxu0 0.0
      %1081 = vmatpush1.msra.mxu0 0.0
      %1082 = vmatprep.mubr.f32.mxu0 0.0
      %1083 = vmatmul.mubr.f32.gmra.mrb[0].mxu0 %v920
      %v1084 = vpop.f32.mrb[0].mxu0
      %v1085 = vadd.f32 0.0, %v1084
      %v1086 = vpop.f32.mrb[0].mxu0
      %1087 = vmatprep.mubr.f32.mxu0 0.0
      %1088 = vmatmul.mubr.f32.gmra.mrb[0].mxu0 %v923
      %v1089 = vpop.f32.mrb[0].mxu0
      %v1090 = vadd.f32 0.0, %v1089
      %v1091 = vpop.f32.mrb[0].mxu0
      %1092 = vmatprep.mubr.f32.mxu0 0.0
      %1093 = vmatmul.mubr.f32.gmra.mrb[0].mxu0 %v926
      %v1094 = vpop.f32.mrb[0].mxu0
      %v1095 = vadd.f32 0.0, %v1094
      %v1096 = vpop.f32.mrb[0].mxu0
      %1097 = vmatprep.mubr.f32.mxu0 0.0
      %1098 = vmatmul.mubr.f32.gmra.mrb[0].mxu0 %v929
      %v1099 = vpop.f32.mrb[0].mxu0
      %v1100 = vadd.f32 0.0, %v1099
      %v1101 = vpop.f32.mrb[0].mxu0
      %1102 = vmatprep.mubr.f32.mxu0 0.0
      %1103 = vmatmul.mubr.f32.gmra.mrb[0].mxu0 %v932
      %v1104 = vpop.f32.mrb[0].mxu0
      %v1105 = vadd.f32 0.0, %v1104
      %v1106 = vpop.f32.mrb[0].mxu0
      %1107 = vmatprep.mubr.f32.mxu0 0.0
      %1108 = vmatmul.mubr.f32.gmra.mrb[0].mxu0 %v935
      %v1109 = vpop.f32.mrb[0].mxu0
      %v1110 = vadd.f32 0.0, %v1109
      %v1111 = vpop.f32.mrb[0].mxu0
      %1112 = vmatprep.mubr.f32.mxu0 0.0
      %1113 = vmatmul.mubr.f32.gmra.mrb[0].mxu0 %v938
      %v1114 = vpop.f32.mrb[0].mxu0
      %v1115 = vadd.f32 0.0, %v1114
      %v1116 = vpop.f32.mrb[0].mxu0
      %1117 = vmatprep.mubr.f32.mxu0 0.0
      %1118 = vmatmul.mubr.f32.gmra.mrb[0].mxu0 %v941
      %v1119 = vpop.f32.mrb[0].mxu0
      %v1120 = vadd.f32 0.0, %v1119
      %v1121 = vpop.f32.mrb[0].mxu0
      %1122 = vmatprep.mubr.f32.mxu0 0.0
      %1123 = vmatmul.mubr.f32.gmra.mrb[0].mxu0 %v944
      %v1124 = vpop.f32.mrb[0].mxu0
      %v1125 = vadd.f32 0.0, %v1124
      %v1126 = vpop.f32.mrb[0].mxu0
      %1127 = vmatprep.mubr.f32.mxu0 0.0
      %1128 = vmatmul.mubr.f32.gmra.mrb[0].mxu0 %v947
      %v1129 = vpop.f32.mrb[0].mxu0
      %v1130 = vadd.f32 0.0, %v1129
      %v1131 = vpop.f32.mrb[0].mxu0
      %1132 = vmatprep.mubr.f32.mxu0 0.0
      %1133 = vmatmul.mubr.f32.gmra.mrb[0].mxu0 %v950
      %v1134 = vpop.f32.mrb[0].mxu0
      %v1135 = vadd.f32 0.0, %v1134
      %v1136 = vpop.f32.mrb[0].mxu0
      %1137 = vmatprep.mubr.f32.mxu0 0.0
      %1138 = vmatmul.mubr.f32.gmra.mrb[0].mxu0 %v953
      %v1139 = vpop.f32.mrb[0].mxu0
      %v1140 = vadd.f32 0.0, %v1139
      %v1141 = vpop.f32.mrb[0].mxu0
      %1142 = vmatprep.mubr.f32.mxu0 0.0
      %1143 = vmatmul.mubr.f32.gmra.mrb[0].mxu0 %v956
      %v1144 = vpop.f32.mrb[0].mxu0
      %v1145 = vadd.f32 0.0, %v1144
      %v1146 = vpop.f32.mrb[0].mxu0
      %1147 = vmatprep.mubr.f32.mxu0 0.0
      %1148 = vmatmul.mubr.f32.gmra.mrb[0].mxu0 %v959
      %v1149 = vpop.f32.mrb[0].mxu0
      %v1150 = vadd.f32 0.0, %v1149
      %v1151 = vpop.f32.mrb[0].mxu0
      %1152 = vmatprep.mubr.f32.mxu0 0.0
      %1153 = vmatmul.mubr.f32.gmra.mrb[0].mxu0 %v962
      %v1154 = vpop.f32.mrb[0].mxu0
      %v1155 = vadd.f32 0.0, %v1154
      %v1156 = vpop.f32.mrb[0].mxu0
      %1157 = vmatprep.mubr.f32.mxu0 0.0
      %1158 = vmatmul.mubr.f32.gmra.mrb[0].mxu0 %v965
      %v1159 = vpop.f32.mrb[0].mxu0
      %v1160 = vadd.f32 0.0, %v1159
      %v1161 = vpop.f32.mrb[0].mxu0
      %1162 = vmatprep.mubr.f32.mxu0 0.0
      %1163 = vmatmul.mubr.f32.gmra.mrb[0].mxu0 %v968
      %v1164 = vpop.f32.mrb[0].mxu0
      %v1165 = vadd.f32 0.0, %v1164
      %v1166 = vpop.f32.mrb[0].mxu0
      %1167 = vmatprep.mubr.f32.mxu0 0.0
      %1168 = vmatmul.mubr.f32.gmra.mrb[0].mxu0 %v971
      %v1169 = vpop.f32.mrb[0].mxu0
      %v1170 = vadd.f32 0.0, %v1169
      %v1171 = vpop.f32.mrb[0].mxu0
      %1172 = vmatprep.mubr.f32.mxu0 0.0
      %1173 = vmatmul.mubr.f32.gmra.mrb[0].mxu0 %v974
      %v1174 = vpop.f32.mrb[0].mxu0
      %v1175 = vadd.f32 0.0, %v1174
      %v1176 = vpop.f32.mrb[0].mxu0
      %1177 = vmatprep.mubr.f32.mxu0 0.0
      %1178 = vmatmul.mubr.f32.gmra.mrb[0].mxu0 %v977
      %v1179 = vpop.f32.mrb[0].mxu0
      %v1180 = vadd.f32 0.0, %v1179
      %v1181 = vpop.f32.mrb[0].mxu0
      %1182 = vmatprep.mubr.f32.mxu0 0.0
      %1183 = vmatmul.mubr.f32.gmra.mrb[0].mxu0 %v980
      %v1184 = vpop.f32.mrb[0].mxu0
      %v1185 = vadd.f32 0.0, %v1184
      %v1186 = vpop.f32.mrb[0].mxu0
      %1187 = vmatprep.mubr.f32.mxu0 0.0
      %1188 = vmatmul.mubr.f32.gmra.mrb[0].mxu0 %v983
      %v1189 = vpop.f32.mrb[0].mxu0
      %v1190 = vadd.f32 0.0, %v1189
      %v1191 = vpop.f32.mrb[0].mxu0
      %1192 = vmatprep.mubr.f32.mxu0 0.0
      %1193 = vmatmul.mubr.f32.gmra.mrb[0].mxu0 %v986
      %v1194 = vpop.f32.mrb[0].mxu0
      %v1195 = vadd.f32 0.0, %v1194
      %v1196 = vpop.f32.mrb[0].mxu0
      %1197 = vmatprep.mubr.f32.mxu0 0.0
      %1198 = vmatmul.mubr.f32.gmra.mrb[0].mxu0 %v989
      %v1199 = vpop.f32.mrb[0].mxu0
      %v1200 = vadd.f32 0.0, %v1199
      %v1201 = vpop.f32.mrb[0].mxu0
      %1202 = vmatprep.mubr.f32.mxu0 0.0
      %1203 = vmatmul.mubr.f32.gmra.mrb[0].mxu0 %v992
      %v1204 = vpop.f32.mrb[0].mxu0
      %v1205 = vadd.f32 0.0, %v1204
      %v1206 = vpop.f32.mrb[0].mxu0
      %1207 = vmatprep.mubr.f32.mxu0 0.0
      %1208 = vmatmul.mubr.f32.gmra.mrb[0].mxu0 %v995
      %v1209 = vpop.f32.mrb[0].mxu0
      %v1210 = vadd.f32 0.0, %v1209
      %v1211 = vpop.f32.mrb[0].mxu0
      %1212 = vmatprep.mubr.f32.mxu0 0.0
      %1213 = vmatmul.mubr.f32.gmra.mrb[0].mxu0 %v998
      %v1214 = vpop.f32.mrb[0].mxu0
      %v1215 = vadd.f32 0.0, %v1214
      %v1216 = vpop.f32.mrb[0].mxu0
      %1217 = vmatprep.mubr.f32.mxu0 0.0
      %1218 = vmatmul.mubr.f32.gmra.mrb[0].mxu0 %v1001
      %v1219 = vpop.f32.mrb[0].mxu0
      %v1220 = vadd.f32 0.0, %v1219
      %v1221 = vpop.f32.mrb[0].mxu0
      %1222 = vmatprep.mubr.f32.mxu0 0.0
      %1223 = vmatmul.mubr.f32.gmra.mrb[0].mxu0 %v1004
      %v1224 = vpop.f32.mrb[0].mxu0
      %v1225 = vadd.f32 0.0, %v1224
      %v1226 = vpop.f32.mrb[0].mxu0
      %1227 = vmatprep.mubr.f32.mxu0 0.0
      %1228 = vmatmul.mubr.f32.gmra.mrb[0].mxu0 %v1007
      %v1229 = vpop.f32.mrb[0].mxu0
      %v1230 = vadd.f32 0.0, %v1229
      %v1231 = vpop.f32.mrb[0].mxu0
      %1232 = vmatprep.mubr.f32.mxu0 0.0
      %1233 = vmatmul.mubr.f32.gmra.mrb[0].mxu0 %v1010
      %v1234 = vpop.f32.mrb[0].mxu0
      %v1235 = vadd.f32 0.0, %v1234
      %v1236 = vpop.f32.mrb[0].mxu0
      %1237 = vmatprep.mubr.f32.mxu0 0.0
      %1238 = vmatmul.mubr.f32.gmra.mrb[0].mxu0 %v1013
      %v1239 = vpop.f32.mrb[0].mxu0
      %v1240 = vadd.f32 0.0, %v1239
      %v1241 = vpop.f32.mrb[0].mxu0
      %1242 = vdwg.mxu0
      %v1243 = vadd.f32 %v727, %v1085
      %v1244 = vadd.f32 %v732, %v1090
      %v1245 = vadd.f32 %v737, %v1095
      %v1246 = vadd.f32 %v742, %v1100
      %v1247 = vadd.f32 %v747, %v1105
      %v1248 = vadd.f32 %v752, %v1110
      %v1249 = vadd.f32 %v757, %v1115
      %v1250 = vadd.f32 %v762, %v1120
      %v1251 = vadd.f32 %v767, %v1125
      %v1252 = vadd.f32 %v772, %v1130
      %v1253 = vadd.f32 %v777, %v1135
      %v1254 = vadd.f32 %v782, %v1140
      %v1255 = vadd.f32 %v787, %v1145
      %v1256 = vadd.f32 %v792, %v1150
      %v1257 = vadd.f32 %v797, %v1155
      %v1258 = vadd.f32 %v802, %v1160
      %v1259 = vadd.f32 %v807, %v1165
      %v1260 = vadd.f32 %v812, %v1170
      %v1261 = vadd.f32 %v817, %v1175
      %v1262 = vadd.f32 %v822, %v1180
      %v1263 = vadd.f32 %v827, %v1185
      %v1264 = vadd.f32 %v832, %v1190
      %v1265 = vadd.f32 %v837, %v1195
      %v1266 = vadd.f32 %v842, %v1200
      %v1267 = vadd.f32 %v847, %v1205
      %v1268 = vadd.f32 %v852, %v1210
      %v1269 = vadd.f32 %v857, %v1215
      %v1270 = vadd.f32 %v862, %v1220
      %v1271 = vadd.f32 %v867, %v1225
      %v1272 = vadd.f32 %v872, %v1230
      %v1273 = vadd.f32 %v877, %v1235
      %v1274 = vadd.f32 %v882, %v1240
      %s1275 = scalar_lea.vmem %s163, 816
      %v1276 = vld [vmem:[%s1275] sm:$0xff]
      %v1277 = vld [vmem:[%s1275 + $0x8] sm:$0xff]
      %v1278 = vld [vmem:[%s1275 + $0x18] sm:$0xff]
      %v1279 = vld [vmem:[%s1275 + $0x20] sm:$0xff]
      %v1280 = vld [vmem:[%s1275 + $0x30] sm:$0xff]
      %v1281 = vld [vmem:[%s1275 + $0x38] sm:$0xff]
      %v1282 = vld [vmem:[%s1275 + $0x48] sm:$0xff]
      %v1283 = vld [vmem:[%s1275 + $0x50] sm:$0xff]
      %v1284 = vld [vmem:[%s1275 + $0x60] sm:$0xff]
      %v1285 = vld [vmem:[%s1275 + $0x68] sm:$0xff]
      %v1286 = vld [vmem:[%s1275 + $0x78] sm:$0xff]
      %v1287 = vld [vmem:[%s1275 + $0x80] sm:$0xff]
      %v1288 = vld [vmem:[%s1275 + $0x90] sm:$0xff]
      %v1289 = vld [vmem:[%s1275 + $0x98] sm:$0xff]
      %v1290 = vld [vmem:[%s1275 + $0xa8] sm:$0xff]
      %v1291 = vld [vmem:[%s1275 + $0xb0] sm:$0xff]
      %v1292 = vld [vmem:[%s1275 + $0xc0] sm:$0xff]
      %v1293 = vld [vmem:[%s1275 + $0xc8] sm:$0xff]
      %v1294 = vld [vmem:[%s1275 + $0xd8] sm:$0xff]
      %v1295 = vld [vmem:[%s1275 + $0xe0] sm:$0xff]
      %v1296 = vld [vmem:[%s1275 + $0xf0] sm:$0xff]
      %v1297 = vld [vmem:[%s1275 + $0xf8] sm:$0xff]
      %v1298 = vld [vmem:[%s1275 + $0x108] sm:$0xff]
      %v1299 = vld [vmem:[%s1275 + $0x110] sm:$0xff]
      %v1300 = vld [vmem:[%s1275 + $0x120] sm:$0xff]
      %v1301 = vld [vmem:[%s1275 + $0x128] sm:$0xff]
      %v1302 = vld [vmem:[%s1275 + $0x138] sm:$0xff]
      %v1303 = vld [vmem:[%s1275 + $0x140] sm:$0xff]
      %v1304 = vld [vmem:[%s1275 + $0x150] sm:$0xff]
      %v1305 = vld [vmem:[%s1275 + $0x158] sm:$0xff]
      %v1306 = vld [vmem:[%s1275 + $0x168] sm:$0xff]
      %v1307 = vld [vmem:[%s1275 + $0x170] sm:$0xff]
      %s1308 = scalar_lea.vmem %s1, 12
      %v1309 = vld [vmem:[%s1308] sm:$0x7]
      %v1311 = vsel %vm235, %v1276, 0
      %v1314 = vsel %vm235, %v1277, 0
      %v1317 = vsel %vm235, %v1278, 0
      %v1320 = vsel %vm235, %v1279, 0
      %v1323 = vsel %vm235, %v1280, 0
      %v1326 = vsel %vm235, %v1281, 0
      %v1329 = vsel %vm235, %v1282, 0
      %v1332 = vsel %vm235, %v1283, 0
      %v1335 = vsel %vm235, %v1284, 0
      %v1338 = vsel %vm235, %v1285, 0
      %v1341 = vsel %vm235, %v1286, 0
      %v1344 = vsel %vm235, %v1287, 0
      %v1347 = vsel %vm235, %v1288, 0
      %v1350 = vsel %vm235, %v1289, 0
      %v1353 = vsel %vm235, %v1290, 0
      %v1356 = vsel %vm235, %v1291, 0
      %v1359 = vsel %vm235, %v1292, 0
      %v1362 = vsel %vm235, %v1293, 0
      %v1365 = vsel %vm235, %v1294, 0
      %v1368 = vsel %vm235, %v1295, 0
      %v1371 = vsel %vm235, %v1296, 0
      %v1374 = vsel %vm235, %v1297, 0
      %v1377 = vsel %vm235, %v1298, 0
      %v1380 = vsel %vm235, %v1299, 0
      %v1383 = vsel %vm235, %v1300, 0
      %v1386 = vsel %vm235, %v1301, 0
      %v1389 = vsel %vm235, %v1302, 0
      %v1392 = vsel %vm235, %v1303, 0
      %v1395 = vsel %vm235, %v1304, 0
      %v1398 = vsel %vm235, %v1305, 0
      %v1401 = vsel %vm235, %v1306, 0
      %v1404 = vsel %vm235, %v1307, 0
      %v1407 = vsel %vm332, %v1309, 0
      %1409 = vmatprep.subr.mxu0 0.0
      %1410 = vmatpush1.msra.mxu0 %v1407
      %1411 = vmatprep.subr.mxu0 0.0
      %1412 = vmatpush1.msra.mxu0 0.0
      %1413 = vmatprep.subr.mxu0 0.0
      %1414 = vmatpush1.msra.mxu0 0.0
      %1415 = vmatprep.subr.mxu0 0.0
      %1416 = vmatpush1.msra.mxu0 0.0
      %1417 = vmatprep.subr.mxu0 0.0
      %1418 = vmatpush1.msra.mxu0 0.0
      %1419 = vmatprep.subr.mxu0 0.0
      %1420 = vmatpush1.msra.mxu0 0.0
      %1421 = vmatprep.subr.mxu0 0.0
      %1422 = vmatpush1.msra.mxu0 0.0
      %1423 = vmatprep.subr.mxu0 0.0
      %1424 = vmatpush1.msra.mxu0 0.0
      %1425 = vmatprep.subr.mxu0 0.0
      %1426 = vmatpush1.msra.mxu0 0.0
      %1427 = vmatprep.subr.mxu0 0.0
      %1428 = vmatpush1.msra.mxu0 0.0
      %1429 = vmatprep.subr.mxu0 0.0
      %1430 = vmatpush1.msra.mxu0 0.0
      %1431 = vmatprep.subr.mxu0 0.0
      %1432 = vmatpush1.msra.mxu0 0.0
      %1433 = vmatprep.subr.mxu0 0.0
      %1434 = vmatpush1.msra.mxu0 0.0
      %1435 = vmatprep.subr.mxu0 0.0
      %1436 = vmatpush1.msra.mxu0 0.0
      %1437 = vmatprep.subr.mxu0 0.0
      %1438 = vmatpush1.msra.mxu0 0.0
      %1439 = vmatprep.subr.mxu0 0.0
      %1440 = vmatpush1.msra.mxu0 0.0
      %1441 = vmatprep.subr.mxu0 0.0
      %1442 = vmatpush1.msra.mxu0 0.0
      %1443 = vmatprep.subr.mxu0 0.0
      %1444 = vmatpush1.msra.mxu0 0.0
      %1445 = vmatprep.subr.mxu0 0.0
      %1446 = vmatpush1.msra.mxu0 0.0
      %1447 = vmatprep.subr.mxu0 0.0
      %1448 = vmatpush1.msra.mxu0 0.0
      %1449 = vmatprep.subr.mxu0 0.0
      %1450 = vmatpush1.msra.mxu0 0.0
      %1451 = vmatprep.subr.mxu0 0.0
      %1452 = vmatpush1.msra.mxu0 0.0
      %1453 = vmatprep.subr.mxu0 0.0
      %1454 = vmatpush1.msra.mxu0 0.0
      %1455 = vmatprep.subr.mxu0 0.0
      %1456 = vmatpush1.msra.mxu0 0.0
      %1457 = vmatprep.subr.mxu0 0.0
      %1458 = vmatpush1.msra.mxu0 0.0
      %1459 = vmatprep.subr.mxu0 0.0
      %1460 = vmatpush1.msra.mxu0 0.0
      %1461 = vmatprep.subr.mxu0 0.0
      %1462 = vmatpush1.msra.mxu0 0.0
      %1463 = vmatprep.subr.mxu0 0.0
      %1464 = vmatpush1.msra.mxu0 0.0
      %1465 = vmatprep.subr.mxu0 0.0
      %1466 = vmatpush1.msra.mxu0 0.0
      %1467 = vmatprep.subr.mxu0 0.0
      %1468 = vmatpush1.msra.mxu0 0.0
      %1469 = vmatprep.subr.mxu0 0.0
      %1470 = vmatpush1.msra.mxu0 0.0
      %1471 = vmatprep.subr.mxu0 0.0
      %1472 = vmatpush1.msra.mxu0 0.0
      %1473 = vmatprep.mubr.f32.mxu0 0.0
      %1474 = vmatmul.mubr.f32.gmra.mrb[0].mxu0 %v1311
      %v1475 = vpop.f32.mrb[0].mxu0
      %v1476 = vadd.f32 0.0, %v1475
      %v1477 = vpop.f32.mrb[0].mxu0
      %1478 = vmatprep.mubr.f32.mxu0 0.0
      %1479 = vmatmul.mubr.f32.gmra.mrb[0].mxu0 %v1314
      %v1480 = vpop.f32.mrb[0].mxu0
      %v1481 = vadd.f32 0.0, %v1480
      %v1482 = vpop.f32.mrb[0].mxu0
      %1483 = vmatprep.mubr.f32.mxu0 0.0
      %1484 = vmatmul.mubr.f32.gmra.mrb[0].mxu0 %v1317
      %v1485 = vpop.f32.mrb[0].mxu0
      %v1486 = vadd.f32 0.0, %v1485
      %v1487 = vpop.f32.mrb[0].mxu0
      %1488 = vmatprep.mubr.f32.mxu0 0.0
      %1489 = vmatmul.mubr.f32.gmra.mrb[0].mxu0 %v1320
      %v1490 = vpop.f32.mrb[0].mxu0
      %v1491 = vadd.f32 0.0, %v1490
      %v1492 = vpop.f32.mrb[0].mxu0
      %1493 = vmatprep.mubr.f32.mxu0 0.0
      %1494 = vmatmul.mubr.f32.gmra.mrb[0].mxu0 %v1323
      %v1495 = vpop.f32.mrb[0].mxu0
      %v1496 = vadd.f32 0.0, %v1495
      %v1497 = vpop.f32.mrb[0].mxu0
      %1498 = vmatprep.mubr.f32.mxu0 0.0
      %1499 = vmatmul.mubr.f32.gmra.mrb[0].mxu0 %v1326
      %v1500 = vpop.f32.mrb[0].mxu0
      %v1501 = vadd.f32 0.0, %v1500
      %v1502 = vpop.f32.mrb[0].mxu0
      %1503 = vmatprep.mubr.f32.mxu0 0.0
      %1504 = vmatmul.mubr.f32.gmra.mrb[0].mxu0 %v1329
      %v1505 = vpop.f32.mrb[0].mxu0
      %v1506 = vadd.f32 0.0, %v1505
      %v1507 = vpop.f32.mrb[0].mxu0
      %1508 = vmatprep.mubr.f32.mxu0 0.0
      %1509 = vmatmul.mubr.f32.gmra.mrb[0].mxu0 %v1332
      %v1510 = vpop.f32.mrb[0].mxu0
      %v1511 = vadd.f32 0.0, %v1510
      %v1512 = vpop.f32.mrb[0].mxu0
      %1513 = vmatprep.mubr.f32.mxu0 0.0
      %1514 = vmatmul.mubr.f32.gmra.mrb[0].mxu0 %v1335
      %v1515 = vpop.f32.mrb[0].mxu0
      %v1516 = vadd.f32 0.0, %v1515
      %v1517 = vpop.f32.mrb[0].mxu0
      %1518 = vmatprep.mubr.f32.mxu0 0.0
      %1519 = vmatmul.mubr.f32.gmra.mrb[0].mxu0 %v1338
      %v1520 = vpop.f32.mrb[0].mxu0
      %v1521 = vadd.f32 0.0, %v1520
      %v1522 = vpop.f32.mrb[0].mxu0
      %1523 = vmatprep.mubr.f32.mxu0 0.0
      %1524 = vmatmul.mubr.f32.gmra.mrb[0].mxu0 %v1341
      %v1525 = vpop.f32.mrb[0].mxu0
      %v1526 = vadd.f32 0.0, %v1525
      %v1527 = vpop.f32.mrb[0].mxu0
      %1528 = vmatprep.mubr.f32.mxu0 0.0
      %1529 = vmatmul.mubr.f32.gmra.mrb[0].mxu0 %v1344
      %v1530 = vpop.f32.mrb[0].mxu0
      %v1531 = vadd.f32 0.0, %v1530
      %v1532 = vpop.f32.mrb[0].mxu0
      %1533 = vmatprep.mubr.f32.mxu0 0.0
      %1534 = vmatmul.mubr.f32.gmra.mrb[0].mxu0 %v1347
      %v1535 = vpop.f32.mrb[0].mxu0
      %v1536 = vadd.f32 0.0, %v1535
      %v1537 = vpop.f32.mrb[0].mxu0
      %1538 = vmatprep.mubr.f32.mxu0 0.0
      %1539 = vmatmul.mubr.f32.gmra.mrb[0].mxu0 %v1350
      %v1540 = vpop.f32.mrb[0].mxu0
      %v1541 = vadd.f32 0.0, %v1540
      %v1542 = vpop.f32.mrb[0].mxu0
      %1543 = vmatprep.mubr.f32.mxu0 0.0
      %1544 = vmatmul.mubr.f32.gmra.mrb[0].mxu0 %v1353
      %v1545 = vpop.f32.mrb[0].mxu0
      %v1546 = vadd.f32 0.0, %v1545
      %v1547 = vpop.f32.mrb[0].mxu0
      %1548 = vmatprep.mubr.f32.mxu0 0.0
      %1549 = vmatmul.mubr.f32.gmra.mrb[0].mxu0 %v1356
      %v1550 = vpop.f32.mrb[0].mxu0
      %v1551 = vadd.f32 0.0, %v1550
      %v1552 = vpop.f32.mrb[0].mxu0
      %1553 = vmatprep.mubr.f32.mxu0 0.0
      %1554 = vmatmul.mubr.f32.gmra.mrb[0].mxu0 %v1359
      %v1555 = vpop.f32.mrb[0].mxu0
      %v1556 = vadd.f32 0.0, %v1555
      %v1557 = vpop.f32.mrb[0].mxu0
      %1558 = vmatprep.mubr.f32.mxu0 0.0
      %1559 = vmatmul.mubr.f32.gmra.mrb[0].mxu0 %v1362
      %v1560 = vpop.f32.mrb[0].mxu0
      %v1561 = vadd.f32 0.0, %v1560
      %v1562 = vpop.f32.mrb[0].mxu0
      %1563 = vmatprep.mubr.f32.mxu0 0.0
      %1564 = vmatmul.mubr.f32.gmra.mrb[0].mxu0 %v1365
      %v1565 = vpop.f32.mrb[0].mxu0
      %v1566 = vadd.f32 0.0, %v1565
      %v1567 = vpop.f32.mrb[0].mxu0
      %1568 = vmatprep.mubr.f32.mxu0 0.0
      %1569 = vmatmul.mubr.f32.gmra.mrb[0].mxu0 %v1368
      %v1570 = vpop.f32.mrb[0].mxu0
      %v1571 = vadd.f32 0.0, %v1570
      %v1572 = vpop.f32.mrb[0].mxu0
      %1573 = vmatprep.mubr.f32.mxu0 0.0
      %1574 = vmatmul.mubr.f32.gmra.mrb[0].mxu0 %v1371
      %v1575 = vpop.f32.mrb[0].mxu0
      %v1576 = vadd.f32 0.0, %v1575
      %v1577 = vpop.f32.mrb[0].mxu0
      %1578 = vmatprep.mubr.f32.mxu0 0.0
      %1579 = vmatmul.mubr.f32.gmra.mrb[0].mxu0 %v1374
      %v1580 = vpop.f32.mrb[0].mxu0
      %v1581 = vadd.f32 0.0, %v1580
      %v1582 = vpop.f32.mrb[0].mxu0
      %1583 = vmatprep.mubr.f32.mxu0 0.0
      %1584 = vmatmul.mubr.f32.gmra.mrb[0].mxu0 %v1377
      %v1585 = vpop.f32.mrb[0].mxu0
      %v1586 = vadd.f32 0.0, %v1585
      %v1587 = vpop.f32.mrb[0].mxu0
      %1588 = vmatprep.mubr.f32.mxu0 0.0
      %1589 = vmatmul.mubr.f32.gmra.mrb[0].mxu0 %v1380
      %v1590 = vpop.f32.mrb[0].mxu0
      %v1591 = vadd.f32 0.0, %v1590
      %v1592 = vpop.f32.mrb[0].mxu0
      %1593 = vmatprep.mubr.f32.mxu0 0.0
      %1594 = vmatmul.mubr.f32.gmra.mrb[0].mxu0 %v1383
      %v1595 = vpop.f32.mrb[0].mxu0
      %v1596 = vadd.f32 0.0, %v1595
      %v1597 = vpop.f32.mrb[0].mxu0
      %1598 = vmatprep.mubr.f32.mxu0 0.0
      %1599 = vmatmul.mubr.f32.gmra.mrb[0].mxu0 %v1386
      %v1600 = vpop.f32.mrb[0].mxu0
      %v1601 = vadd.f32 0.0, %v1600
      %v1602 = vpop.f32.mrb[0].mxu0
      %1603 = vmatprep.mubr.f32.mxu0 0.0
      %1604 = vmatmul.mubr.f32.gmra.mrb[0].mxu0 %v1389
      %v1605 = vpop.f32.mrb[0].mxu0
      %v1606 = vadd.f32 0.0, %v1605
      %v1607 = vpop.f32.mrb[0].mxu0
      %1608 = vmatprep.mubr.f32.mxu0 0.0
      %1609 = vmatmul.mubr.f32.gmra.mrb[0].mxu0 %v1392
      %v1610 = vpop.f32.mrb[0].mxu0
      %v1611 = vadd.f32 0.0, %v1610
      %v1612 = vpop.f32.mrb[0].mxu0
      %1613 = vmatprep.mubr.f32.mxu0 0.0
      %1614 = vmatmul.mubr.f32.gmra.mrb[0].mxu0 %v1395
      %v1615 = vpop.f32.mrb[0].mxu0
      %v1616 = vadd.f32 0.0, %v1615
      %v1617 = vpop.f32.mrb[0].mxu0
      %1618 = vmatprep.mubr.f32.mxu0 0.0
      %1619 = vmatmul.mubr.f32.gmra.mrb[0].mxu0 %v1398
      %v1620 = vpop.f32.mrb[0].mxu0
      %v1621 = vadd.f32 0.0, %v1620
      %v1622 = vpop.f32.mrb[0].mxu0
      %1623 = vmatprep.mubr.f32.mxu0 0.0
      %1624 = vmatmul.mubr.f32.gmra.mrb[0].mxu0 %v1401
      %v1625 = vpop.f32.mrb[0].mxu0
      %v1626 = vadd.f32 0.0, %v1625
      %v1627 = vpop.f32.mrb[0].mxu0
      %1628 = vmatprep.mubr.f32.mxu0 0.0
      %1629 = vmatmul.mubr.f32.gmra.mrb[0].mxu0 %v1404
      %v1630 = vpop.f32.mrb[0].mxu0
      %v1631 = vadd.f32 0.0, %v1630
      %v1632 = vpop.f32.mrb[0].mxu0
      %1633 = vdwg.mxu0
      %v1634 = vadd.f32 %v1243, %v1476
      %v1635 = vadd.f32 %v1244, %v1481
      %v1636 = vadd.f32 %v1245, %v1486
      %v1637 = vadd.f32 %v1246, %v1491
      %v1638 = vadd.f32 %v1247, %v1496
      %v1639 = vadd.f32 %v1248, %v1501
      %v1640 = vadd.f32 %v1249, %v1506
      %v1641 = vadd.f32 %v1250, %v1511
      %v1642 = vadd.f32 %v1251, %v1516
      %v1643 = vadd.f32 %v1252, %v1521
      %v1644 = vadd.f32 %v1253, %v1526
      %v1645 = vadd.f32 %v1254, %v1531
      %v1646 = vadd.f32 %v1255, %v1536
      %v1647 = vadd.f32 %v1256, %v1541
      %v1648 = vadd.f32 %v1257, %v1546
      %v1649 = vadd.f32 %v1258, %v1551
      %v1650 = vadd.f32 %v1259, %v1556
      %v1651 = vadd.f32 %v1260, %v1561
      %v1652 = vadd.f32 %v1261, %v1566
      %v1653 = vadd.f32 %v1262, %v1571
      %v1654 = vadd.f32 %v1263, %v1576
      %v1655 = vadd.f32 %v1264, %v1581
      %v1656 = vadd.f32 %v1265, %v1586
      %v1657 = vadd.f32 %v1266, %v1591
      %v1658 = vadd.f32 %v1267, %v1596
      %v1659 = vadd.f32 %v1268, %v1601
      %v1660 = vadd.f32 %v1269, %v1606
      %v1661 = vadd.f32 %v1270, %v1611
      %v1662 = vadd.f32 %v1271, %v1616
      %v1663 = vadd.f32 %v1272, %v1621
      %v1664 = vadd.f32 %v1273, %v1626
      %v1665 = vadd.f32 %v1274, %v1631
      %s1666 = scalar_lea.vmem %s163, 1224
      %v1667 = vld [vmem:[%s1666] sm:$0xff]
      %v1668 = vld [vmem:[%s1666 + $0x8] sm:$0xff]
      %v1669 = vld [vmem:[%s1666 + $0x18] sm:$0xff]
      %v1670 = vld [vmem:[%s1666 + $0x20] sm:$0xff]
      %v1671 = vld [vmem:[%s1666 + $0x30] sm:$0xff]
      %v1672 = vld [vmem:[%s1666 + $0x38] sm:$0xff]
      %v1673 = vld [vmem:[%s1666 + $0x48] sm:$0xff]
      %v1674 = vld [vmem:[%s1666 + $0x50] sm:$0xff]
      %v1675 = vld [vmem:[%s1666 + $0x60] sm:$0xff]
      %v1676 = vld [vmem:[%s1666 + $0x68] sm:$0xff]
      %v1677 = vld [vmem:[%s1666 + $0x78] sm:$0xff]
      %v1678 = vld [vmem:[%s1666 + $0x80] sm:$0xff]
      %v1679 = vld [vmem:[%s1666 + $0x90] sm:$0xff]
      %v1680 = vld [vmem:[%s1666 + $0x98] sm:$0xff]
      %v1681 = vld [vmem:[%s1666 + $0xa8] sm:$0xff]
      %v1682 = vld [vmem:[%s1666 + $0xb0] sm:$0xff]
      %v1683 = vld [vmem:[%s1666 + $0xc0] sm:$0xff]
      %v1684 = vld [vmem:[%s1666 + $0xc8] sm:$0xff]
      %v1685 = vld [vmem:[%s1666 + $0xd8] sm:$0xff]
      %v1686 = vld [vmem:[%s1666 + $0xe0] sm:$0xff]
      %v1687 = vld [vmem:[%s1666 + $0xf0] sm:$0xff]
      %v1688 = vld [vmem:[%s1666 + $0xf8] sm:$0xff]
      %v1689 = vld [vmem:[%s1666 + $0x108] sm:$0xff]
      %v1690 = vld [vmem:[%s1666 + $0x110] sm:$0xff]
      %v1691 = vld [vmem:[%s1666 + $0x120] sm:$0xff]
      %v1692 = vld [vmem:[%s1666 + $0x128] sm:$0xff]
      %v1693 = vld [vmem:[%s1666 + $0x138] sm:$0xff]
      %v1694 = vld [vmem:[%s1666 + $0x140] sm:$0xff]
      %v1695 = vld [vmem:[%s1666 + $0x150] sm:$0xff]
      %v1696 = vld [vmem:[%s1666 + $0x158] sm:$0xff]
      %v1697 = vld [vmem:[%s1666 + $0x168] sm:$0xff]
      %v1698 = vld [vmem:[%s1666 + $0x170] sm:$0xff]
      %s1699 = scalar_lea.vmem %s1, 16
      %v1700 = vld [vmem:[%s1699] sm:$0x7]
      %v1702 = vsel %vm235, %v1667, 0
      %v1705 = vsel %vm235, %v1668, 0
      %v1708 = vsel %vm235, %v1669, 0
      %v1711 = vsel %vm235, %v1670, 0
      %v1714 = vsel %vm235, %v1671, 0
      %v1717 = vsel %vm235, %v1672, 0
      %v1720 = vsel %vm235, %v1673, 0
      %v1723 = vsel %vm235, %v1674, 0
      %v1726 = vsel %vm235, %v1675, 0
      %v1729 = vsel %vm235, %v1676, 0
      %v1732 = vsel %vm235, %v1677, 0
      %v1735 = vsel %vm235, %v1678, 0
      %v1738 = vsel %vm235, %v1679, 0
      %v1741 = vsel %vm235, %v1680, 0
      %v1744 = vsel %vm235, %v1681, 0
      %v1747 = vsel %vm235, %v1682, 0
      %v1750 = vsel %vm235, %v1683, 0
      %v1753 = vsel %vm235, %v1684, 0
      %v1756 = vsel %vm235, %v1685, 0
      %v1759 = vsel %vm235, %v1686, 0
      %v1762 = vsel %vm235, %v1687, 0
      %v1765 = vsel %vm235, %v1688, 0
      %v1768 = vsel %vm235, %v1689, 0
      %v1771 = vsel %vm235, %v1690, 0
      %v1774 = vsel %vm235, %v1691, 0
      %v1777 = vsel %vm235, %v1692, 0
      %v1780 = vsel %vm235, %v1693, 0
      %v1783 = vsel %vm235, %v1694, 0
      %v1786 = vsel %vm235, %v1695, 0
      %v1789 = vsel %vm235, %v1696, 0
      %v1792 = vsel %vm235, %v1697, 0
      %v1795 = vsel %vm235, %v1698, 0
      %v1798 = vsel %vm332, %v1700, 0
      %1800 = vmatprep.subr.mxu0 0.0
      %1801 = vmatpush1.msra.mxu0 %v1798
      %1802 = vmatprep.subr.mxu0 0.0
      %1803 = vmatpush1.msra.mxu0 0.0
      %1804 = vmatprep.subr.mxu0 0.0
      %1805 = vmatpush1.msra.mxu0 0.0
      %1806 = vmatprep.subr.mxu0 0.0
      %1807 = vmatpush1.msra.mxu0 0.0
      %1808 = vmatprep.subr.mxu0 0.0
      %1809 = vmatpush1.msra.mxu0 0.0
      %1810 = vmatprep.subr.mxu0 0.0
      %1811 = vmatpush1.msra.mxu0 0.0
      %1812 = vmatprep.subr.mxu0 0.0
      %1813 = vmatpush1.msra.mxu0 0.0
      %1814 = vmatprep.subr.mxu0 0.0
      %1815 = vmatpush1.msra.mxu0 0.0
      %1816 = vmatprep.subr.mxu0 0.0
      %1817 = vmatpush1.msra.mxu0 0.0
      %1818 = vmatprep.subr.mxu0 0.0
      %1819 = vmatpush1.msra.mxu0 0.0
      %1820 = vmatprep.subr.mxu0 0.0
      %1821 = vmatpush1.msra.mxu0 0.0
      %1822 = vmatprep.subr.mxu0 0.0
      %1823 = vmatpush1.msra.mxu0 0.0
      %1824 = vmatprep.subr.mxu0 0.0
      %1825 = vmatpush1.msra.mxu0 0.0
      %1826 = vmatprep.subr.mxu0 0.0
      %1827 = vmatpush1.msra.mxu0 0.0
      %1828 = vmatprep.subr.mxu0 0.0
      %1829 = vmatpush1.msra.mxu0 0.0
      %1830 = vmatprep.subr.mxu0 0.0
      %1831 = vmatpush1.msra.mxu0 0.0
      %1832 = vmatprep.subr.mxu0 0.0
      %1833 = vmatpush1.msra.mxu0 0.0
      %1834 = vmatprep.subr.mxu0 0.0
      %1835 = vmatpush1.msra.mxu0 0.0
      %1836 = vmatprep.subr.mxu0 0.0
      %1837 = vmatpush1.msra.mxu0 0.0
      %1838 = vmatprep.subr.mxu0 0.0
      %1839 = vmatpush1.msra.mxu0 0.0
      %1840 = vmatprep.subr.mxu0 0.0
      %1841 = vmatpush1.msra.mxu0 0.0
      %1842 = vmatprep.subr.mxu0 0.0
      %1843 = vmatpush1.msra.mxu0 0.0
      %1844 = vmatprep.subr.mxu0 0.0
      %1845 = vmatpush1.msra.mxu0 0.0
      %1846 = vmatprep.subr.mxu0 0.0
      %1847 = vmatpush1.msra.mxu0 0.0
      %1848 = vmatprep.subr.mxu0 0.0
      %1849 = vmatpush1.msra.mxu0 0.0
      %1850 = vmatprep.subr.mxu0 0.0
      %1851 = vmatpush1.msra.mxu0 0.0
      %1852 = vmatprep.subr.mxu0 0.0
      %1853 = vmatpush1.msra.mxu0 0.0
      %1854 = vmatprep.subr.mxu0 0.0
      %1855 = vmatpush1.msra.mxu0 0.0
      %1856 = vmatprep.subr.mxu0 0.0
      %1857 = vmatpush1.msra.mxu0 0.0
      %1858 = vmatprep.subr.mxu0 0.0
      %1859 = vmatpush1.msra.mxu0 0.0
      %1860 = vmatprep.subr.mxu0 0.0
      %1861 = vmatpush1.msra.mxu0 0.0
      %1862 = vmatprep.subr.mxu0 0.0
      %1863 = vmatpush1.msra.mxu0 0.0
      %1864 = vmatprep.mubr.f32.mxu0 0.0
      %1865 = vmatmul.mubr.f32.gmra.mrb[0].mxu0 %v1702
      %v1866 = vpop.f32.mrb[0].mxu0
      %v1867 = vadd.f32 0.0, %v1866
      %v1868 = vpop.f32.mrb[0].mxu0
      %1869 = vmatprep.mubr.f32.mxu0 0.0
      %1870 = vmatmul.mubr.f32.gmra.mrb[0].mxu0 %v1705
      %v1871 = vpop.f32.mrb[0].mxu0
      %v1872 = vadd.f32 0.0, %v1871
      %v1873 = vpop.f32.mrb[0].mxu0
      %1874 = vmatprep.mubr.f32.mxu0 0.0
      %1875 = vmatmul.mubr.f32.gmra.mrb[0].mxu0 %v1708
      %v1876 = vpop.f32.mrb[0].mxu0
      %v1877 = vadd.f32 0.0, %v1876
      %v1878 = vpop.f32.mrb[0].mxu0
      %1879 = vmatprep.mubr.f32.mxu0 0.0
      %1880 = vmatmul.mubr.f32.gmra.mrb[0].mxu0 %v1711
      %v1881 = vpop.f32.mrb[0].mxu0
      %v1882 = vadd.f32 0.0, %v1881
      %v1883 = vpop.f32.mrb[0].mxu0
      %1884 = vmatprep.mubr.f32.mxu0 0.0
      %1885 = vmatmul.mubr.f32.gmra.mrb[0].mxu0 %v1714
      %v1886 = vpop.f32.mrb[0].mxu0
      %v1887 = vadd.f32 0.0, %v1886
      %v1888 = vpop.f32.mrb[0].mxu0
      %1889 = vmatprep.mubr.f32.mxu0 0.0
      %1890 = vmatmul.mubr.f32.gmra.mrb[0].mxu0 %v1717
      %v1891 = vpop.f32.mrb[0].mxu0
      %v1892 = vadd.f32 0.0, %v1891
      %v1893 = vpop.f32.mrb[0].mxu0
      %1894 = vmatprep.mubr.f32.mxu0 0.0
      %1895 = vmatmul.mubr.f32.gmra.mrb[0].mxu0 %v1720
      %v1896 = vpop.f32.mrb[0].mxu0
      %v1897 = vadd.f32 0.0, %v1896
      %v1898 = vpop.f32.mrb[0].mxu0
      %1899 = vmatprep.mubr.f32.mxu0 0.0
      %1900 = vmatmul.mubr.f32.gmra.mrb[0].mxu0 %v1723
      %v1901 = vpop.f32.mrb[0].mxu0
      %v1902 = vadd.f32 0.0, %v1901
      %v1903 = vpop.f32.mrb[0].mxu0
      %1904 = vmatprep.mubr.f32.mxu0 0.0
      %1905 = vmatmul.mubr.f32.gmra.mrb[0].mxu0 %v1726
      %v1906 = vpop.f32.mrb[0].mxu0
      %v1907 = vadd.f32 0.0, %v1906
      %v1908 = vpop.f32.mrb[0].mxu0
      %1909 = vmatprep.mubr.f32.mxu0 0.0
      %1910 = vmatmul.mubr.f32.gmra.mrb[0].mxu0 %v1729
      %v1911 = vpop.f32.mrb[0].mxu0
      %v1912 = vadd.f32 0.0, %v1911
      %v1913 = vpop.f32.mrb[0].mxu0
      %1914 = vmatprep.mubr.f32.mxu0 0.0
      %1915 = vmatmul.mubr.f32.gmra.mrb[0].mxu0 %v1732
      %v1916 = vpop.f32.mrb[0].mxu0
      %v1917 = vadd.f32 0.0, %v1916
      %v1918 = vpop.f32.mrb[0].mxu0
      %1919 = vmatprep.mubr.f32.mxu0 0.0
      %1920 = vmatmul.mubr.f32.gmra.mrb[0].mxu0 %v1735
      %v1921 = vpop.f32.mrb[0].mxu0
      %v1922 = vadd.f32 0.0, %v1921
      %v1923 = vpop.f32.mrb[0].mxu0
      %1924 = vmatprep.mubr.f32.mxu0 0.0
      %1925 = vmatmul.mubr.f32.gmra.mrb[0].mxu0 %v1738
      %v1926 = vpop.f32.mrb[0].mxu0
      %v1927 = vadd.f32 0.0, %v1926
      %v1928 = vpop.f32.mrb[0].mxu0
      %1929 = vmatprep.mubr.f32.mxu0 0.0
      %1930 = vmatmul.mubr.f32.gmra.mrb[0].mxu0 %v1741
      %v1931 = vpop.f32.mrb[0].mxu0
      %v1932 = vadd.f32 0.0, %v1931
      %v1933 = vpop.f32.mrb[0].mxu0
      %1934 = vmatprep.mubr.f32.mxu0 0.0
      %1935 = vmatmul.mubr.f32.gmra.mrb[0].mxu0 %v1744
      %v1936 = vpop.f32.mrb[0].mxu0
      %v1937 = vadd.f32 0.0, %v1936
      %v1938 = vpop.f32.mrb[0].mxu0
      %1939 = vmatprep.mubr.f32.mxu0 0.0
      %1940 = vmatmul.mubr.f32.gmra.mrb[0].mxu0 %v1747
      %v1941 = vpop.f32.mrb[0].mxu0
      %v1942 = vadd.f32 0.0, %v1941
      %v1943 = vpop.f32.mrb[0].mxu0
      %1944 = vmatprep.mubr.f32.mxu0 0.0
      %1945 = vmatmul.mubr.f32.gmra.mrb[0].mxu0 %v1750
      %v1946 = vpop.f32.mrb[0].mxu0
      %v1947 = vadd.f32 0.0, %v1946
      %v1948 = vpop.f32.mrb[0].mxu0
      %1949 = vmatprep.mubr.f32.mxu0 0.0
      %1950 = vmatmul.mubr.f32.gmra.mrb[0].mxu0 %v1753
      %v1951 = vpop.f32.mrb[0].mxu0
      %v1952 = vadd.f32 0.0, %v1951
      %v1953 = vpop.f32.mrb[0].mxu0
      %1954 = vmatprep.mubr.f32.mxu0 0.0
      %1955 = vmatmul.mubr.f32.gmra.mrb[0].mxu0 %v1756
      %v1956 = vpop.f32.mrb[0].mxu0
      %v1957 = vadd.f32 0.0, %v1956
      %v1958 = vpop.f32.mrb[0].mxu0
      %1959 = vmatprep.mubr.f32.mxu0 0.0
      %1960 = vmatmul.mubr.f32.gmra.mrb[0].mxu0 %v1759
      %v1961 = vpop.f32.mrb[0].mxu0
      %v1962 = vadd.f32 0.0, %v1961
      %v1963 = vpop.f32.mrb[0].mxu0
      %1964 = vmatprep.mubr.f32.mxu0 0.0
      %1965 = vmatmul.mubr.f32.gmra.mrb[0].mxu0 %v1762
      %v1966 = vpop.f32.mrb[0].mxu0
      %v1967 = vadd.f32 0.0, %v1966
      %v1968 = vpop.f32.mrb[0].mxu0
      %1969 = vmatprep.mubr.f32.mxu0 0.0
      %1970 = vmatmul.mubr.f32.gmra.mrb[0].mxu0 %v1765
      %v1971 = vpop.f32.mrb[0].mxu0
      %v1972 = vadd.f32 0.0, %v1971
      %v1973 = vpop.f32.mrb[0].mxu0
      %1974 = vmatprep.mubr.f32.mxu0 0.0
      %1975 = vmatmul.mubr.f32.gmra.mrb[0].mxu0 %v1768
      %v1976 = vpop.f32.mrb[0].mxu0
      %v1977 = vadd.f32 0.0, %v1976
      %v1978 = vpop.f32.mrb[0].mxu0
      %1979 = vmatprep.mubr.f32.mxu0 0.0
      %1980 = vmatmul.mubr.f32.gmra.mrb[0].mxu0 %v1771
      %v1981 = vpop.f32.mrb[0].mxu0
      %v1982 = vadd.f32 0.0, %v1981
      %v1983 = vpop.f32.mrb[0].mxu0
      %1984 = vmatprep.mubr.f32.mxu0 0.0
      %1985 = vmatmul.mubr.f32.gmra.mrb[0].mxu0 %v1774
      %v1986 = vpop.f32.mrb[0].mxu0
      %v1987 = vadd.f32 0.0, %v1986
      %v1988 = vpop.f32.mrb[0].mxu0
      %1989 = vmatprep.mubr.f32.mxu0 0.0
      %1990 = vmatmul.mubr.f32.gmra.mrb[0].mxu0 %v1777
      %v1991 = vpop.f32.mrb[0].mxu0
      %v1992 = vadd.f32 0.0, %v1991
      %v1993 = vpop.f32.mrb[0].mxu0
      %1994 = vmatprep.mubr.f32.mxu0 0.0
      %1995 = vmatmul.mubr.f32.gmra.mrb[0].mxu0 %v1780
      %v1996 = vpop.f32.mrb[0].mxu0
      %v1997 = vadd.f32 0.0, %v1996
      %v1998 = vpop.f32.mrb[0].mxu0
      %1999 = vmatprep.mubr.f32.mxu0 0.0
      %2000 = vmatmul.mubr.f32.gmra.mrb[0].mxu0 %v1783
      %v2001 = vpop.f32.mrb[0].mxu0
      %v2002 = vadd.f32 0.0, %v2001
      %v2003 = vpop.f32.mrb[0].mxu0
      %2004 = vmatprep.mubr.f32.mxu0 0.0
      %2005 = vmatmul.mubr.f32.gmra.mrb[0].mxu0 %v1786
      %v2006 = vpop.f32.mrb[0].mxu0
      %v2007 = vadd.f32 0.0, %v2006
      %v2008 = vpop.f32.mrb[0].mxu0
      %2009 = vmatprep.mubr.f32.mxu0 0.0
      %2010 = vmatmul.mubr.f32.gmra.mrb[0].mxu0 %v1789
      %v2011 = vpop.f32.mrb[0].mxu0
      %v2012 = vadd.f32 0.0, %v2011
      %v2013 = vpop.f32.mrb[0].mxu0
      %2014 = vmatprep.mubr.f32.mxu0 0.0
      %2015 = vmatmul.mubr.f32.gmra.mrb[0].mxu0 %v1792
      %v2016 = vpop.f32.mrb[0].mxu0
      %v2017 = vadd.f32 0.0, %v2016
      %v2018 = vpop.f32.mrb[0].mxu0
      %2019 = vmatprep.mubr.f32.mxu0 0.0
      %2020 = vmatmul.mubr.f32.gmra.mrb[0].mxu0 %v1795
      %v2021 = vpop.f32.mrb[0].mxu0
      %v2022 = vadd.f32 0.0, %v2021
      %v2023 = vpop.f32.mrb[0].mxu0
      %2024 = vdwg.mxu0
      %v2025 = vadd.f32 %v1634, %v1867
      %v2026 = vadd.f32 %v1635, %v1872
      %v2027 = vadd.f32 %v1636, %v1877
      %v2028 = vadd.f32 %v1637, %v1882
      %v2029 = vadd.f32 %v1638, %v1887
      %v2030 = vadd.f32 %v1639, %v1892
      %v2031 = vadd.f32 %v1640, %v1897
      %v2032 = vadd.f32 %v1641, %v1902
      %v2033 = vadd.f32 %v1642, %v1907
      %v2034 = vadd.f32 %v1643, %v1912
      %v2035 = vadd.f32 %v1644, %v1917
      %v2036 = vadd.f32 %v1645, %v1922
      %v2037 = vadd.f32 %v1646, %v1927
      %v2038 = vadd.f32 %v1647, %v1932
      %v2039 = vadd.f32 %v1648, %v1937
      %v2040 = vadd.f32 %v1649, %v1942
      %v2041 = vadd.f32 %v1650, %v1947
      %v2042 = vadd.f32 %v1651, %v1952
      %v2043 = vadd.f32 %v1652, %v1957
      %v2044 = vadd.f32 %v1653, %v1962
      %v2045 = vadd.f32 %v1654, %v1967
      %v2046 = vadd.f32 %v1655, %v1972
      %v2047 = vadd.f32 %v1656, %v1977
      %v2048 = vadd.f32 %v1657, %v1982
      %v2049 = vadd.f32 %v1658, %v1987
      %v2050 = vadd.f32 %v1659, %v1992
      %v2051 = vadd.f32 %v1660, %v1997
      %v2052 = vadd.f32 %v1661, %v2002
      %v2053 = vadd.f32 %v1662, %v2007
      %v2054 = vadd.f32 %v1663, %v2012
      %v2055 = vadd.f32 %v1664, %v2017
      %v2056 = vadd.f32 %v1665, %v2022
      %v2057 = vld [vmem:[%s1275 + $0x1] sm:$0xff]
      %v2058 = vld [vmem:[%s1275 + $0x9] sm:$0xff]
      %v2059 = vld [vmem:[%s1275 + $0x19] sm:$0xff]
      %v2060 = vld [vmem:[%s1275 + $0x21] sm:$0xff]
      %v2061 = vld [vmem:[%s1275 + $0x31] sm:$0xff]
      %v2062 = vld [vmem:[%s1275 + $0x39] sm:$0xff]
      %v2063 = vld [vmem:[%s1275 + $0x49] sm:$0xff]
      %v2064 = vld [vmem:[%s1275 + $0x51] sm:$0xff]
      %v2065 = vld [vmem:[%s1275 + $0x61] sm:$0xff]
      %v2066 = vld [vmem:[%s1275 + $0x69] sm:$0xff]
      %v2067 = vld [vmem:[%s1275 + $0x79] sm:$0xff]
      %v2068 = vld [vmem:[%s1275 + $0x81] sm:$0xff]
      %v2069 = vld [vmem:[%s1275 + $0x91] sm:$0xff]
      %v2070 = vld [vmem:[%s1275 + $0x99] sm:$0xff]
      %v2071 = vld [vmem:[%s1275 + $0xa9] sm:$0xff]
      %v2072 = vld [vmem:[%s1275 + $0xb1] sm:$0xff]
      %v2073 = vld [vmem:[%s1275 + $0xc1] sm:$0xff]
      %v2074 = vld [vmem:[%s1275 + $0xc9] sm:$0xff]
      %v2075 = vld [vmem:[%s1275 + $0xd9] sm:$0xff]
      %v2076 = vld [vmem:[%s1275 + $0xe1] sm:$0xff]
      %v2077 = vld [vmem:[%s1275 + $0xf1] sm:$0xff]
      %v2078 = vld [vmem:[%s1275 + $0xf9] sm:$0xff]
      %v2079 = vld [vmem:[%s1275 + $0x109] sm:$0xff]
      %v2080 = vld [vmem:[%s1275 + $0x111] sm:$0xff]
      %v2081 = vld [vmem:[%s1275 + $0x121] sm:$0xff]
      %v2082 = vld [vmem:[%s1275 + $0x129] sm:$0xff]
      %v2083 = vld [vmem:[%s1275 + $0x139] sm:$0xff]
      %v2084 = vld [vmem:[%s1275 + $0x141] sm:$0xff]
      %v2085 = vld [vmem:[%s1275 + $0x151] sm:$0xff]
      %v2086 = vld [vmem:[%s1275 + $0x159] sm:$0xff]
      %v2087 = vld [vmem:[%s1275 + $0x169] sm:$0xff]
      %v2088 = vld [vmem:[%s1275 + $0x171] sm:$0xff]
      %s2089 = scalar_lea.vmem %s1, 20
      %v2090 = vld [vmem:[%s2089] sm:$0x7]
      %v2092 = vsel %vm235, %v2057, 0
      %v2095 = vsel %vm235, %v2058, 0
      %v2098 = vsel %vm235, %v2059, 0
      %v2101 = vsel %vm235, %v2060, 0
      %v2104 = vsel %vm235, %v2061, 0
      %v2107 = vsel %vm235, %v2062, 0
      %v2110 = vsel %vm235, %v2063, 0
      %v2113 = vsel %vm235, %v2064, 0
      %v2116 = vsel %vm235, %v2065, 0
      %v2119 = vsel %vm235, %v2066, 0
      %v2122 = vsel %vm235, %v2067, 0
      %v2125 = vsel %vm235, %v2068, 0
      %v2128 = vsel %vm235, %v2069, 0
      %v2131 = vsel %vm235, %v2070, 0
      %v2134 = vsel %vm235, %v2071, 0
      %v2137 = vsel %vm235, %v2072, 0
      %v2140 = vsel %vm235, %v2073, 0
      %v2143 = vsel %vm235, %v2074, 0
      %v2146 = vsel %vm235, %v2075, 0
      %v2149 = vsel %vm235, %v2076, 0
      %v2152 = vsel %vm235, %v2077, 0
      %v2155 = vsel %vm235, %v2078, 0
      %v2158 = vsel %vm235, %v2079, 0
      %v2161 = vsel %vm235, %v2080, 0
      %v2164 = vsel %vm235, %v2081, 0
      %v2167 = vsel %vm235, %v2082, 0
      %v2170 = vsel %vm235, %v2083, 0
      %v2173 = vsel %vm235, %v2084, 0
      %v2176 = vsel %vm235, %v2085, 0
      %v2179 = vsel %vm235, %v2086, 0
      %v2182 = vsel %vm235, %v2087, 0
      %v2185 = vsel %vm235, %v2088, 0
      %v2188 = vsel %vm332, %v2090, 0
      %2190 = vmatprep.subr.mxu0 0.0
      %2191 = vmatpush1.msra.mxu0 %v2188
      %2192 = vmatprep.subr.mxu0 0.0
      %2193 = vmatpush1.msra.mxu0 0.0
      %2194 = vmatprep.subr.mxu0 0.0
      %2195 = vmatpush1.msra.mxu0 0.0
      %2196 = vmatprep.subr.mxu0 0.0
      %2197 = vmatpush1.msra.mxu0 0.0
      %2198 = vmatprep.subr.mxu0 0.0
      %2199 = vmatpush1.msra.mxu0 0.0
      %2200 = vmatprep.subr.mxu0 0.0
      %2201 = vmatpush1.msra.mxu0 0.0
      %2202 = vmatprep.subr.mxu0 0.0
      %2203 = vmatpush1.msra.mxu0 0.0
      %2204 = vmatprep.subr.mxu0 0.0
      %2205 = vmatpush1.msra.mxu0 0.0
      %2206 = vmatprep.subr.mxu0 0.0
      %2207 = vmatpush1.msra.mxu0 0.0
      %2208 = vmatprep.subr.mxu0 0.0
      %2209 = vmatpush1.msra.mxu0 0.0
      %2210 = vmatprep.subr.mxu0 0.0
      %2211 = vmatpush1.msra.mxu0 0.0
      %2212 = vmatprep.subr.mxu0 0.0
      %2213 = vmatpush1.msra.mxu0 0.0
      %2214 = vmatprep.subr.mxu0 0.0
      %2215 = vmatpush1.msra.mxu0 0.0
      %2216 = vmatprep.subr.mxu0 0.0
      %2217 = vmatpush1.msra.mxu0 0.0
      %2218 = vmatprep.subr.mxu0 0.0
      %2219 = vmatpush1.msra.mxu0 0.0
      %2220 = vmatprep.subr.mxu0 0.0
      %2221 = vmatpush1.msra.mxu0 0.0
      %2222 = vmatprep.subr.mxu0 0.0
      %2223 = vmatpush1.msra.mxu0 0.0
      %2224 = vmatprep.subr.mxu0 0.0
      %2225 = vmatpush1.msra.mxu0 0.0
      %2226 = vmatprep.subr.mxu0 0.0
      %2227 = vmatpush1.msra.mxu0 0.0
      %2228 = vmatprep.subr.mxu0 0.0
      %2229 = vmatpush1.msra.mxu0 0.0
      %2230 = vmatprep.subr.mxu0 0.0
      %2231 = vmatpush1.msra.mxu0 0.0
      %2232 = vmatprep.subr.mxu0 0.0
      %2233 = vmatpush1.msra.mxu0 0.0
      %2234 = vmatprep.subr.mxu0 0.0
      %2235 = vmatpush1.msra.mxu0 0.0
      %2236 = vmatprep.subr.mxu0 0.0
      %2237 = vmatpush1.msra.mxu0 0.0
      %2238 = vmatprep.subr.mxu0 0.0
      %2239 = vmatpush1.msra.mxu0 0.0
      %2240 = vmatprep.subr.mxu0 0.0
      %2241 = vmatpush1.msra.mxu0 0.0
      %2242 = vmatprep.subr.mxu0 0.0
      %2243 = vmatpush1.msra.mxu0 0.0
      %2244 = vmatprep.subr.mxu0 0.0
      %2245 = vmatpush1.msra.mxu0 0.0
      %2246 = vmatprep.subr.mxu0 0.0
      %2247 = vmatpush1.msra.mxu0 0.0
      %2248 = vmatprep.subr.mxu0 0.0
      %2249 = vmatpush1.msra.mxu0 0.0
      %2250 = vmatprep.subr.mxu0 0.0
      %2251 = vmatpush1.msra.mxu0 0.0
      %2252 = vmatprep.subr.mxu0 0.0
      %2253 = vmatpush1.msra.mxu0 0.0
      %2254 = vmatprep.mubr.f32.mxu0 0.0
      %2255 = vmatmul.mubr.f32.gmra.mrb[0].mxu0 %v2092
      %v2256 = vpop.f32.mrb[0].mxu0
      %v2257 = vadd.f32 0.0, %v2256
      %v2258 = vpop.f32.mrb[0].mxu0
      %2259 = vmatprep.mubr.f32.mxu0 0.0
      %2260 = vmatmul.mubr.f32.gmra.mrb[0].mxu0 %v2095
      %v2261 = vpop.f32.mrb[0].mxu0
      %v2262 = vadd.f32 0.0, %v2261
      %v2263 = vpop.f32.mrb[0].mxu0
      %2264 = vmatprep.mubr.f32.mxu0 0.0
      %2265 = vmatmul.mubr.f32.gmra.mrb[0].mxu0 %v2098
      %v2266 = vpop.f32.mrb[0].mxu0
      %v2267 = vadd.f32 0.0, %v2266
      %v2268 = vpop.f32.mrb[0].mxu0
      %2269 = vmatprep.mubr.f32.mxu0 0.0
      %2270 = vmatmul.mubr.f32.gmra.mrb[0].mxu0 %v2101
      %v2271 = vpop.f32.mrb[0].mxu0
      %v2272 = vadd.f32 0.0, %v2271
      %v2273 = vpop.f32.mrb[0].mxu0
      %2274 = vmatprep.mubr.f32.mxu0 0.0
      %2275 = vmatmul.mubr.f32.gmra.mrb[0].mxu0 %v2104
      %v2276 = vpop.f32.mrb[0].mxu0
      %v2277 = vadd.f32 0.0, %v2276
      %v2278 = vpop.f32.mrb[0].mxu0
      %2279 = vmatprep.mubr.f32.mxu0 0.0
      %2280 = vmatmul.mubr.f32.gmra.mrb[0].mxu0 %v2107
      %v2281 = vpop.f32.mrb[0].mxu0
      %v2282 = vadd.f32 0.0, %v2281
      %v2283 = vpop.f32.mrb[0].mxu0
      %2284 = vmatprep.mubr.f32.mxu0 0.0
      %2285 = vmatmul.mubr.f32.gmra.mrb[0].mxu0 %v2110
      %v2286 = vpop.f32.mrb[0].mxu0
      %v2287 = vadd.f32 0.0, %v2286
      %v2288 = vpop.f32.mrb[0].mxu0
      %2289 = vmatprep.mubr.f32.mxu0 0.0
      %2290 = vmatmul.mubr.f32.gmra.mrb[0].mxu0 %v2113
      %v2291 = vpop.f32.mrb[0].mxu0
      %v2292 = vadd.f32 0.0, %v2291
      %v2293 = vpop.f32.mrb[0].mxu0
      %2294 = vmatprep.mubr.f32.mxu0 0.0
      %2295 = vmatmul.mubr.f32.gmra.mrb[0].mxu0 %v2116
      %v2296 = vpop.f32.mrb[0].mxu0
      %v2297 = vadd.f32 0.0, %v2296
      %v2298 = vpop.f32.mrb[0].mxu0
      %2299 = vmatprep.mubr.f32.mxu0 0.0
      %2300 = vmatmul.mubr.f32.gmra.mrb[0].mxu0 %v2119
      %v2301 = vpop.f32.mrb[0].mxu0
      %v2302 = vadd.f32 0.0, %v2301
      %v2303 = vpop.f32.mrb[0].mxu0
      %2304 = vmatprep.mubr.f32.mxu0 0.0
      %2305 = vmatmul.mubr.f32.gmra.mrb[0].mxu0 %v2122
      %v2306 = vpop.f32.mrb[0].mxu0
      %v2307 = vadd.f32 0.0, %v2306
      %v2308 = vpop.f32.mrb[0].mxu0
      %2309 = vmatprep.mubr.f32.mxu0 0.0
      %2310 = vmatmul.mubr.f32.gmra.mrb[0].mxu0 %v2125
      %v2311 = vpop.f32.mrb[0].mxu0
      %v2312 = vadd.f32 0.0, %v2311
      %v2313 = vpop.f32.mrb[0].mxu0
      %2314 = vmatprep.mubr.f32.mxu0 0.0
      %2315 = vmatmul.mubr.f32.gmra.mrb[0].mxu0 %v2128
      %v2316 = vpop.f32.mrb[0].mxu0
      %v2317 = vadd.f32 0.0, %v2316
      %v2318 = vpop.f32.mrb[0].mxu0
      %2319 = vmatprep.mubr.f32.mxu0 0.0
      %2320 = vmatmul.mubr.f32.gmra.mrb[0].mxu0 %v2131
      %v2321 = vpop.f32.mrb[0].mxu0
      %v2322 = vadd.f32 0.0, %v2321
      %v2323 = vpop.f32.mrb[0].mxu0
      %2324 = vmatprep.mubr.f32.mxu0 0.0
      %2325 = vmatmul.mubr.f32.gmra.mrb[0].mxu0 %v2134
      %v2326 = vpop.f32.mrb[0].mxu0
      %v2327 = vadd.f32 0.0, %v2326
      %v2328 = vpop.f32.mrb[0].mxu0
      %2329 = vmatprep.mubr.f32.mxu0 0.0
      %2330 = vmatmul.mubr.f32.gmra.mrb[0].mxu0 %v2137
      %v2331 = vpop.f32.mrb[0].mxu0
      %v2332 = vadd.f32 0.0, %v2331
      %v2333 = vpop.f32.mrb[0].mxu0
      %2334 = vmatprep.mubr.f32.mxu0 0.0
      %2335 = vmatmul.mubr.f32.gmra.mrb[0].mxu0 %v2140
      %v2336 = vpop.f32.mrb[0].mxu0
      %v2337 = vadd.f32 0.0, %v2336
      %v2338 = vpop.f32.mrb[0].mxu0
      %2339 = vmatprep.mubr.f32.mxu0 0.0
      %2340 = vmatmul.mubr.f32.gmra.mrb[0].mxu0 %v2143
      %v2341 = vpop.f32.mrb[0].mxu0
      %v2342 = vadd.f32 0.0, %v2341
      %v2343 = vpop.f32.mrb[0].mxu0
      %2344 = vmatprep.mubr.f32.mxu0 0.0
      %2345 = vmatmul.mubr.f32.gmra.mrb[0].mxu0 %v2146
      %v2346 = vpop.f32.mrb[0].mxu0
      %v2347 = vadd.f32 0.0, %v2346
      %v2348 = vpop.f32.mrb[0].mxu0
      %2349 = vmatprep.mubr.f32.mxu0 0.0
      %2350 = vmatmul.mubr.f32.gmra.mrb[0].mxu0 %v2149
      %v2351 = vpop.f32.mrb[0].mxu0
      %v2352 = vadd.f32 0.0, %v2351
      %v2353 = vpop.f32.mrb[0].mxu0
      %2354 = vmatprep.mubr.f32.mxu0 0.0
      %2355 = vmatmul.mubr.f32.gmra.mrb[0].mxu0 %v2152
      %v2356 = vpop.f32.mrb[0].mxu0
      %v2357 = vadd.f32 0.0, %v2356
      %v2358 = vpop.f32.mrb[0].mxu0
      %2359 = vmatprep.mubr.f32.mxu0 0.0
      %2360 = vmatmul.mubr.f32.gmra.mrb[0].mxu0 %v2155
      %v2361 = vpop.f32.mrb[0].mxu0
      %v2362 = vadd.f32 0.0, %v2361
      %v2363 = vpop.f32.mrb[0].mxu0
      %2364 = vmatprep.mubr.f32.mxu0 0.0
      %2365 = vmatmul.mubr.f32.gmra.mrb[0].mxu0 %v2158
      %v2366 = vpop.f32.mrb[0].mxu0
      %v2367 = vadd.f32 0.0, %v2366
      %v2368 = vpop.f32.mrb[0].mxu0
      %2369 = vmatprep.mubr.f32.mxu0 0.0
      %2370 = vmatmul.mubr.f32.gmra.mrb[0].mxu0 %v2161
      %v2371 = vpop.f32.mrb[0].mxu0
      %v2372 = vadd.f32 0.0, %v2371
      %v2373 = vpop.f32.mrb[0].mxu0
      %2374 = vmatprep.mubr.f32.mxu0 0.0
      %2375 = vmatmul.mubr.f32.gmra.mrb[0].mxu0 %v2164
      %v2376 = vpop.f32.mrb[0].mxu0
      %v2377 = vadd.f32 0.0, %v2376
      %v2378 = vpop.f32.mrb[0].mxu0
      %2379 = vmatprep.mubr.f32.mxu0 0.0
      %2380 = vmatmul.mubr.f32.gmra.mrb[0].mxu0 %v2167
      %v2381 = vpop.f32.mrb[0].mxu0
      %v2382 = vadd.f32 0.0, %v2381
      %v2383 = vpop.f32.mrb[0].mxu0
      %2384 = vmatprep.mubr.f32.mxu0 0.0
      %2385 = vmatmul.mubr.f32.gmra.mrb[0].mxu0 %v2170
      %v2386 = vpop.f32.mrb[0].mxu0
      %v2387 = vadd.f32 0.0, %v2386
      %v2388 = vpop.f32.mrb[0].mxu0
      %2389 = vmatprep.mubr.f32.mxu0 0.0
      %2390 = vmatmul.mubr.f32.gmra.mrb[0].mxu0 %v2173
      %v2391 = vpop.f32.mrb[0].mxu0
      %v2392 = vadd.f32 0.0, %v2391
      %v2393 = vpop.f32.mrb[0].mxu0
      %2394 = vmatprep.mubr.f32.mxu0 0.0
      %2395 = vmatmul.mubr.f32.gmra.mrb[0].mxu0 %v2176
      %v2396 = vpop.f32.mrb[0].mxu0
      %v2397 = vadd.f32 0.0, %v2396
      %v2398 = vpop.f32.mrb[0].mxu0
      %2399 = vmatprep.mubr.f32.mxu0 0.0
      %2400 = vmatmul.mubr.f32.gmra.mrb[0].mxu0 %v2179
      %v2401 = vpop.f32.mrb[0].mxu0
      %v2402 = vadd.f32 0.0, %v2401
      %v2403 = vpop.f32.mrb[0].mxu0
      %2404 = vmatprep.mubr.f32.mxu0 0.0
      %2405 = vmatmul.mubr.f32.gmra.mrb[0].mxu0 %v2182
      %v2406 = vpop.f32.mrb[0].mxu0
      %v2407 = vadd.f32 0.0, %v2406
      %v2408 = vpop.f32.mrb[0].mxu0
      %2409 = vmatprep.mubr.f32.mxu0 0.0
      %2410 = vmatmul.mubr.f32.gmra.mrb[0].mxu0 %v2185
      %v2411 = vpop.f32.mrb[0].mxu0
      %v2412 = vadd.f32 0.0, %v2411
      %v2413 = vpop.f32.mrb[0].mxu0
      %2414 = vdwg.mxu0
      %v2415 = vadd.f32 %v2025, %v2257
      %v2416 = vadd.f32 %v2026, %v2262
      %v2417 = vadd.f32 %v2027, %v2267
      %v2418 = vadd.f32 %v2028, %v2272
      %v2419 = vadd.f32 %v2029, %v2277
      %v2420 = vadd.f32 %v2030, %v2282
      %v2421 = vadd.f32 %v2031, %v2287
      %v2422 = vadd.f32 %v2032, %v2292
      %v2423 = vadd.f32 %v2033, %v2297
      %v2424 = vadd.f32 %v2034, %v2302
      %v2425 = vadd.f32 %v2035, %v2307
      %v2426 = vadd.f32 %v2036, %v2312
      %v2427 = vadd.f32 %v2037, %v2317
      %v2428 = vadd.f32 %v2038, %v2322
      %v2429 = vadd.f32 %v2039, %v2327
      %v2430 = vadd.f32 %v2040, %v2332
      %v2431 = vadd.f32 %v2041, %v2337
      %v2432 = vadd.f32 %v2042, %v2342
      %v2433 = vadd.f32 %v2043, %v2347
      %v2434 = vadd.f32 %v2044, %v2352
      %v2435 = vadd.f32 %v2045, %v2357
      %v2436 = vadd.f32 %v2046, %v2362
      %v2437 = vadd.f32 %v2047, %v2367
      %v2438 = vadd.f32 %v2048, %v2372
      %v2439 = vadd.f32 %v2049, %v2377
      %v2440 = vadd.f32 %v2050, %v2382
      %v2441 = vadd.f32 %v2051, %v2387
      %v2442 = vadd.f32 %v2052, %v2392
      %v2443 = vadd.f32 %v2053, %v2397
      %v2444 = vadd.f32 %v2054, %v2402
      %v2445 = vadd.f32 %v2055, %v2407
      %v2446 = vadd.f32 %v2056, %v2412
      %s2447 = scalar_lea.vmem %s163, 24
      %v2448 = vld [vmem:[%s2447] sm:$0xff]
      %v2449 = vld [vmem:[%s2447 + $0x8] sm:$0xff]
      %v2450 = vld [vmem:[%s2447 + $0x18] sm:$0xff]
      %v2451 = vld [vmem:[%s2447 + $0x20] sm:$0xff]
      %v2452 = vld [vmem:[%s2447 + $0x30] sm:$0xff]
      %v2453 = vld [vmem:[%s2447 + $0x38] sm:$0xff]
      %v2454 = vld [vmem:[%s2447 + $0x48] sm:$0xff]
      %v2455 = vld [vmem:[%s2447 + $0x50] sm:$0xff]
      %v2456 = vld [vmem:[%s2447 + $0x60] sm:$0xff]
      %v2457 = vld [vmem:[%s2447 + $0x68] sm:$0xff]
      %v2458 = vld [vmem:[%s2447 + $0x78] sm:$0xff]
      %v2459 = vld [vmem:[%s2447 + $0x80] sm:$0xff]
      %v2460 = vld [vmem:[%s2447 + $0x90] sm:$0xff]
      %v2461 = vld [vmem:[%s2447 + $0x98] sm:$0xff]
      %v2462 = vld [vmem:[%s2447 + $0xa8] sm:$0xff]
      %v2463 = vld [vmem:[%s2447 + $0xb0] sm:$0xff]
      %v2464 = vld [vmem:[%s2447 + $0xc0] sm:$0xff]
      %v2465 = vld [vmem:[%s2447 + $0xc8] sm:$0xff]
      %v2466 = vld [vmem:[%s2447 + $0xd8] sm:$0xff]
      %v2467 = vld [vmem:[%s2447 + $0xe0] sm:$0xff]
      %v2468 = vld [vmem:[%s2447 + $0xf0] sm:$0xff]
      %v2469 = vld [vmem:[%s2447 + $0xf8] sm:$0xff]
      %v2470 = vld [vmem:[%s2447 + $0x108] sm:$0xff]
      %v2471 = vld [vmem:[%s2447 + $0x110] sm:$0xff]
      %v2472 = vld [vmem:[%s2447 + $0x120] sm:$0xff]
      %v2473 = vld [vmem:[%s2447 + $0x128] sm:$0xff]
      %v2474 = vld [vmem:[%s2447 + $0x138] sm:$0xff]
      %v2475 = vld [vmem:[%s2447 + $0x140] sm:$0xff]
      %v2476 = vld [vmem:[%s2447 + $0x150] sm:$0xff]
      %v2477 = vld [vmem:[%s2447 + $0x158] sm:$0xff]
      %v2478 = vld [vmem:[%s2447 + $0x168] sm:$0xff]
      %v2479 = vld [vmem:[%s2447 + $0x170] sm:$0xff]
      %s2480 = scalar_lea.vmem %s1, 24
      %v2481 = vld [vmem:[%s2480] sm:$0x7]
      %v2483 = vsel %vm235, %v2448, 0
      %v2486 = vsel %vm235, %v2449, 0
      %v2489 = vsel %vm235, %v2450, 0
      %v2492 = vsel %vm235, %v2451, 0
      %v2495 = vsel %vm235, %v2452, 0
      %v2498 = vsel %vm235, %v2453, 0
      %v2501 = vsel %vm235, %v2454, 0
      %v2504 = vsel %vm235, %v2455, 0
      %v2507 = vsel %vm235, %v2456, 0
      %v2510 = vsel %vm235, %v2457, 0
      %v2513 = vsel %vm235, %v2458, 0
      %v2516 = vsel %vm235, %v2459, 0
      %v2519 = vsel %vm235, %v2460, 0
      %v2522 = vsel %vm235, %v2461, 0
      %v2525 = vsel %vm235, %v2462, 0
      %v2528 = vsel %vm235, %v2463, 0
      %v2531 = vsel %vm235, %v2464, 0
      %v2534 = vsel %vm235, %v2465, 0
      %v2537 = vsel %vm235, %v2466, 0
      %v2540 = vsel %vm235, %v2467, 0
      %v2543 = vsel %vm235, %v2468, 0
      %v2546 = vsel %vm235, %v2469, 0
      %v2549 = vsel %vm235, %v2470, 0
      %v2552 = vsel %vm235, %v2471, 0
      %v2555 = vsel %vm235, %v2472, 0
      %v2558 = vsel %vm235, %v2473, 0
      %v2561 = vsel %vm235, %v2474, 0
      %v2564 = vsel %vm235, %v2475, 0
      %v2567 = vsel %vm235, %v2476, 0
      %v2570 = vsel %vm235, %v2477, 0
      %v2573 = vsel %vm235, %v2478, 0
      %v2576 = vsel %vm235, %v2479, 0
      %v2579 = vsel %vm332, %v2481, 0
      %2581 = vmatprep.subr.mxu0 0.0
      %2582 = vmatpush1.msra.mxu0 %v2579
      %2583 = vmatprep.subr.mxu0 0.0
      %2584 = vmatpush1.msra.mxu0 0.0
      %2585 = vmatprep.subr.mxu0 0.0
      %2586 = vmatpush1.msra.mxu0 0.0
      %2587 = vmatprep.subr.mxu0 0.0
      %2588 = vmatpush1.msra.mxu0 0.0
      %2589 = vmatprep.subr.mxu0 0.0
      %2590 = vmatpush1.msra.mxu0 0.0
      %2591 = vmatprep.subr.mxu0 0.0
      %2592 = vmatpush1.msra.mxu0 0.0
      %2593 = vmatprep.subr.mxu0 0.0
      %2594 = vmatpush1.msra.mxu0 0.0
      %2595 = vmatprep.subr.mxu0 0.0
      %2596 = vmatpush1.msra.mxu0 0.0
      %2597 = vmatprep.subr.mxu0 0.0
      %2598 = vmatpush1.msra.mxu0 0.0
      %2599 = vmatprep.subr.mxu0 0.0
      %2600 = vmatpush1.msra.mxu0 0.0
      %2601 = vmatprep.subr.mxu0 0.0
      %2602 = vmatpush1.msra.mxu0 0.0
      %2603 = vmatprep.subr.mxu0 0.0
      %2604 = vmatpush1.msra.mxu0 0.0
      %2605 = vmatprep.subr.mxu0 0.0
      %2606 = vmatpush1.msra.mxu0 0.0
      %2607 = vmatprep.subr.mxu0 0.0
      %2608 = vmatpush1.msra.mxu0 0.0
      %2609 = vmatprep.subr.mxu0 0.0
      %2610 = vmatpush1.msra.mxu0 0.0
      %2611 = vmatprep.subr.mxu0 0.0
      %2612 = vmatpush1.msra.mxu0 0.0
      %2613 = vmatprep.subr.mxu0 0.0
      %2614 = vmatpush1.msra.mxu0 0.0
      %2615 = vmatprep.subr.mxu0 0.0
      %2616 = vmatpush1.msra.mxu0 0.0
      %2617 = vmatprep.subr.mxu0 0.0
      %2618 = vmatpush1.msra.mxu0 0.0
      %2619 = vmatprep.subr.mxu0 0.0
      %2620 = vmatpush1.msra.mxu0 0.0
      %2621 = vmatprep.subr.mxu0 0.0
      %2622 = vmatpush1.msra.mxu0 0.0
      %2623 = vmatprep.subr.mxu0 0.0
      %2624 = vmatpush1.msra.mxu0 0.0
      %2625 = vmatprep.subr.mxu0 0.0
      %2626 = vmatpush1.msra.mxu0 0.0
      %2627 = vmatprep.subr.mxu0 0.0
      %2628 = vmatpush1.msra.mxu0 0.0
      %2629 = vmatprep.subr.mxu0 0.0
      %2630 = vmatpush1.msra.mxu0 0.0
      %2631 = vmatprep.subr.mxu0 0.0
      %2632 = vmatpush1.msra.mxu0 0.0
      %2633 = vmatprep.subr.mxu0 0.0
      %2634 = vmatpush1.msra.mxu0 0.0
      %2635 = vmatprep.subr.mxu0 0.0
      %2636 = vmatpush1.msra.mxu0 0.0
      %2637 = vmatprep.subr.mxu0 0.0
      %2638 = vmatpush1.msra.mxu0 0.0
      %2639 = vmatprep.subr.mxu0 0.0
      %2640 = vmatpush1.msra.mxu0 0.0
      %2641 = vmatprep.subr.mxu0 0.0
      %2642 = vmatpush1.msra.mxu0 0.0
      %2643 = vmatprep.subr.mxu0 0.0
      %2644 = vmatpush1.msra.mxu0 0.0
      %2645 = vmatprep.mubr.f32.mxu0 0.0
      %2646 = vmatmul.mubr.f32.gmra.mrb[0].mxu0 %v2483
      %v2647 = vpop.f32.mrb[0].mxu0
      %v2648 = vadd.f32 0.0, %v2647
      %v2649 = vpop.f32.mrb[0].mxu0
      %2650 = vmatprep.mubr.f32.mxu0 0.0
      %2651 = vmatmul.mubr.f32.gmra.mrb[0].mxu0 %v2486
      %v2652 = vpop.f32.mrb[0].mxu0
      %v2653 = vadd.f32 0.0, %v2652
      %v2654 = vpop.f32.mrb[0].mxu0
      %2655 = vmatprep.mubr.f32.mxu0 0.0
      %2656 = vmatmul.mubr.f32.gmra.mrb[0].mxu0 %v2489
      %v2657 = vpop.f32.mrb[0].mxu0
      %v2658 = vadd.f32 0.0, %v2657
      %v2659 = vpop.f32.mrb[0].mxu0
      %2660 = vmatprep.mubr.f32.mxu0 0.0
      %2661 = vmatmul.mubr.f32.gmra.mrb[0].mxu0 %v2492
      %v2662 = vpop.f32.mrb[0].mxu0
      %v2663 = vadd.f32 0.0, %v2662
      %v2664 = vpop.f32.mrb[0].mxu0
      %2665 = vmatprep.mubr.f32.mxu0 0.0
      %2666 = vmatmul.mubr.f32.gmra.mrb[0].mxu0 %v2495
      %v2667 = vpop.f32.mrb[0].mxu0
      %v2668 = vadd.f32 0.0, %v2667
      %v2669 = vpop.f32.mrb[0].mxu0
      %2670 = vmatprep.mubr.f32.mxu0 0.0
      %2671 = vmatmul.mubr.f32.gmra.mrb[0].mxu0 %v2498
      %v2672 = vpop.f32.mrb[0].mxu0
      %v2673 = vadd.f32 0.0, %v2672
      %v2674 = vpop.f32.mrb[0].mxu0
      %2675 = vmatprep.mubr.f32.mxu0 0.0
      %2676 = vmatmul.mubr.f32.gmra.mrb[0].mxu0 %v2501
      %v2677 = vpop.f32.mrb[0].mxu0
      %v2678 = vadd.f32 0.0, %v2677
      %v2679 = vpop.f32.mrb[0].mxu0
      %2680 = vmatprep.mubr.f32.mxu0 0.0
      %2681 = vmatmul.mubr.f32.gmra.mrb[0].mxu0 %v2504
      %v2682 = vpop.f32.mrb[0].mxu0
      %v2683 = vadd.f32 0.0, %v2682
      %v2684 = vpop.f32.mrb[0].mxu0
      %2685 = vmatprep.mubr.f32.mxu0 0.0
      %2686 = vmatmul.mubr.f32.gmra.mrb[0].mxu0 %v2507
      %v2687 = vpop.f32.mrb[0].mxu0
      %v2688 = vadd.f32 0.0, %v2687
      %v2689 = vpop.f32.mrb[0].mxu0
      %2690 = vmatprep.mubr.f32.mxu0 0.0
      %2691 = vmatmul.mubr.f32.gmra.mrb[0].mxu0 %v2510
      %v2692 = vpop.f32.mrb[0].mxu0
      %v2693 = vadd.f32 0.0, %v2692
      %v2694 = vpop.f32.mrb[0].mxu0
      %2695 = vmatprep.mubr.f32.mxu0 0.0
      %2696 = vmatmul.mubr.f32.gmra.mrb[0].mxu0 %v2513
      %v2697 = vpop.f32.mrb[0].mxu0
      %v2698 = vadd.f32 0.0, %v2697
      %v2699 = vpop.f32.mrb[0].mxu0
      %2700 = vmatprep.mubr.f32.mxu0 0.0
      %2701 = vmatmul.mubr.f32.gmra.mrb[0].mxu0 %v2516
      %v2702 = vpop.f32.mrb[0].mxu0
      %v2703 = vadd.f32 0.0, %v2702
      %v2704 = vpop.f32.mrb[0].mxu0
      %2705 = vmatprep.mubr.f32.mxu0 0.0
      %2706 = vmatmul.mubr.f32.gmra.mrb[0].mxu0 %v2519
      %v2707 = vpop.f32.mrb[0].mxu0
      %v2708 = vadd.f32 0.0, %v2707
      %v2709 = vpop.f32.mrb[0].mxu0
      %2710 = vmatprep.mubr.f32.mxu0 0.0
      %2711 = vmatmul.mubr.f32.gmra.mrb[0].mxu0 %v2522
      %v2712 = vpop.f32.mrb[0].mxu0
      %v2713 = vadd.f32 0.0, %v2712
      %v2714 = vpop.f32.mrb[0].mxu0
      %2715 = vmatprep.mubr.f32.mxu0 0.0
      %2716 = vmatmul.mubr.f32.gmra.mrb[0].mxu0 %v2525
      %v2717 = vpop.f32.mrb[0].mxu0
      %v2718 = vadd.f32 0.0, %v2717
      %v2719 = vpop.f32.mrb[0].mxu0
      %2720 = vmatprep.mubr.f32.mxu0 0.0
      %2721 = vmatmul.mubr.f32.gmra.mrb[0].mxu0 %v2528
      %v2722 = vpop.f32.mrb[0].mxu0
      %v2723 = vadd.f32 0.0, %v2722
      %v2724 = vpop.f32.mrb[0].mxu0
      %2725 = vmatprep.mubr.f32.mxu0 0.0
      %2726 = vmatmul.mubr.f32.gmra.mrb[0].mxu0 %v2531
      %v2727 = vpop.f32.mrb[0].mxu0
      %v2728 = vadd.f32 0.0, %v2727
      %v2729 = vpop.f32.mrb[0].mxu0
      %2730 = vmatprep.mubr.f32.mxu0 0.0
      %2731 = vmatmul.mubr.f32.gmra.mrb[0].mxu0 %v2534
      %v2732 = vpop.f32.mrb[0].mxu0
      %v2733 = vadd.f32 0.0, %v2732
      %v2734 = vpop.f32.mrb[0].mxu0
      %2735 = vmatprep.mubr.f32.mxu0 0.0
      %2736 = vmatmul.mubr.f32.gmra.mrb[0].mxu0 %v2537
      %v2737 = vpop.f32.mrb[0].mxu0
      %v2738 = vadd.f32 0.0, %v2737
      %v2739 = vpop.f32.mrb[0].mxu0
      %2740 = vmatprep.mubr.f32.mxu0 0.0
      %2741 = vmatmul.mubr.f32.gmra.mrb[0].mxu0 %v2540
      %v2742 = vpop.f32.mrb[0].mxu0
      %v2743 = vadd.f32 0.0, %v2742
      %v2744 = vpop.f32.mrb[0].mxu0
      %2745 = vmatprep.mubr.f32.mxu0 0.0
      %2746 = vmatmul.mubr.f32.gmra.mrb[0].mxu0 %v2543
      %v2747 = vpop.f32.mrb[0].mxu0
      %v2748 = vadd.f32 0.0, %v2747
      %v2749 = vpop.f32.mrb[0].mxu0
      %2750 = vmatprep.mubr.f32.mxu0 0.0
      %2751 = vmatmul.mubr.f32.gmra.mrb[0].mxu0 %v2546
      %v2752 = vpop.f32.mrb[0].mxu0
      %v2753 = vadd.f32 0.0, %v2752
      %v2754 = vpop.f32.mrb[0].mxu0
      %2755 = vmatprep.mubr.f32.mxu0 0.0
      %2756 = vmatmul.mubr.f32.gmra.mrb[0].mxu0 %v2549
      %v2757 = vpop.f32.mrb[0].mxu0
      %v2758 = vadd.f32 0.0, %v2757
      %v2759 = vpop.f32.mrb[0].mxu0
      %2760 = vmatprep.mubr.f32.mxu0 0.0
      %2761 = vmatmul.mubr.f32.gmra.mrb[0].mxu0 %v2552
      %v2762 = vpop.f32.mrb[0].mxu0
      %v2763 = vadd.f32 0.0, %v2762
      %v2764 = vpop.f32.mrb[0].mxu0
      %2765 = vmatprep.mubr.f32.mxu0 0.0
      %2766 = vmatmul.mubr.f32.gmra.mrb[0].mxu0 %v2555
      %v2767 = vpop.f32.mrb[0].mxu0
      %v2768 = vadd.f32 0.0, %v2767
      %v2769 = vpop.f32.mrb[0].mxu0
      %2770 = vmatprep.mubr.f32.mxu0 0.0
      %2771 = vmatmul.mubr.f32.gmra.mrb[0].mxu0 %v2558
      %v2772 = vpop.f32.mrb[0].mxu0
      %v2773 = vadd.f32 0.0, %v2772
      %v2774 = vpop.f32.mrb[0].mxu0
      %2775 = vmatprep.mubr.f32.mxu0 0.0
      %2776 = vmatmul.mubr.f32.gmra.mrb[0].mxu0 %v2561
      %v2777 = vpop.f32.mrb[0].mxu0
      %v2778 = vadd.f32 0.0, %v2777
      %v2779 = vpop.f32.mrb[0].mxu0
      %2780 = vmatprep.mubr.f32.mxu0 0.0
      %2781 = vmatmul.mubr.f32.gmra.mrb[0].mxu0 %v2564
      %v2782 = vpop.f32.mrb[0].mxu0
      %v2783 = vadd.f32 0.0, %v2782
      %v2784 = vpop.f32.mrb[0].mxu0
      %2785 = vmatprep.mubr.f32.mxu0 0.0
      %2786 = vmatmul.mubr.f32.gmra.mrb[0].mxu0 %v2567
      %v2787 = vpop.f32.mrb[0].mxu0
      %v2788 = vadd.f32 0.0, %v2787
      %v2789 = vpop.f32.mrb[0].mxu0
      %2790 = vmatprep.mubr.f32.mxu0 0.0
      %2791 = vmatmul.mubr.f32.gmra.mrb[0].mxu0 %v2570
      %v2792 = vpop.f32.mrb[0].mxu0
      %v2793 = vadd.f32 0.0, %v2792
      %v2794 = vpop.f32.mrb[0].mxu0
      %2795 = vmatprep.mubr.f32.mxu0 0.0
      %2796 = vmatmul.mubr.f32.gmra.mrb[0].mxu0 %v2573
      %v2797 = vpop.f32.mrb[0].mxu0
      %v2798 = vadd.f32 0.0, %v2797
      %v2799 = vpop.f32.mrb[0].mxu0
      %2800 = vmatprep.mubr.f32.mxu0 0.0
      %2801 = vmatmul.mubr.f32.gmra.mrb[0].mxu0 %v2576
      %v2802 = vpop.f32.mrb[0].mxu0
      %v2803 = vadd.f32 0.0, %v2802
      %v2804 = vpop.f32.mrb[0].mxu0
      %2805 = vdwg.mxu0
      %v2806 = vadd.f32 %v2415, %v2648
      %v2807 = vadd.f32 %v2416, %v2653
      %v2808 = vadd.f32 %v2417, %v2658
      %v2809 = vadd.f32 %v2418, %v2663
      %v2810 = vadd.f32 %v2419, %v2668
      %v2811 = vadd.f32 %v2420, %v2673
      %v2812 = vadd.f32 %v2421, %v2678
      %v2813 = vadd.f32 %v2422, %v2683
      %v2814 = vadd.f32 %v2423, %v2688
      %v2815 = vadd.f32 %v2424, %v2693
      %v2816 = vadd.f32 %v2425, %v2698
      %v2817 = vadd.f32 %v2426, %v2703
      %v2818 = vadd.f32 %v2427, %v2708
      %v2819 = vadd.f32 %v2428, %v2713
      %v2820 = vadd.f32 %v2429, %v2718
      %v2821 = vadd.f32 %v2430, %v2723
      %v2822 = vadd.f32 %v2431, %v2728
      %v2823 = vadd.f32 %v2432, %v2733
      %v2824 = vadd.f32 %v2433, %v2738
      %v2825 = vadd.f32 %v2434, %v2743
      %v2826 = vadd.f32 %v2435, %v2748
      %v2827 = vadd.f32 %v2436, %v2753
      %v2828 = vadd.f32 %v2437, %v2758
      %v2829 = vadd.f32 %v2438, %v2763
      %v2830 = vadd.f32 %v2439, %v2768
      %v2831 = vadd.f32 %v2440, %v2773
      %v2832 = vadd.f32 %v2441, %v2778
      %v2833 = vadd.f32 %v2442, %v2783
      %v2834 = vadd.f32 %v2443, %v2788
      %v2835 = vadd.f32 %v2444, %v2793
      %v2836 = vadd.f32 %v2445, %v2798
      %v2837 = vadd.f32 %v2446, %v2803
      %s2838 = scalar_lea.vmem %s163, 432
      %v2839 = vld [vmem:[%s2838] sm:$0xff]
      %v2840 = vld [vmem:[%s2838 + $0x8] sm:$0xff]
      %v2841 = vld [vmem:[%s2838 + $0x18] sm:$0xff]
      %v2842 = vld [vmem:[%s2838 + $0x20] sm:$0xff]
      %v2843 = vld [vmem:[%s2838 + $0x30] sm:$0xff]
      %v2844 = vld [vmem:[%s2838 + $0x38] sm:$0xff]
      %v2845 = vld [vmem:[%s2838 + $0x48] sm:$0xff]
      %v2846 = vld [vmem:[%s2838 + $0x50] sm:$0xff]
      %v2847 = vld [vmem:[%s2838 + $0x60] sm:$0xff]
      %v2848 = vld [vmem:[%s2838 + $0x68] sm:$0xff]
      %v2849 = vld [vmem:[%s2838 + $0x78] sm:$0xff]
      %v2850 = vld [vmem:[%s2838 + $0x80] sm:$0xff]
      %v2851 = vld [vmem:[%s2838 + $0x90] sm:$0xff]
      %v2852 = vld [vmem:[%s2838 + $0x98] sm:$0xff]
      %v2853 = vld [vmem:[%s2838 + $0xa8] sm:$0xff]
      %v2854 = vld [vmem:[%s2838 + $0xb0] sm:$0xff]
      %v2855 = vld [vmem:[%s2838 + $0xc0] sm:$0xff]
      %v2856 = vld [vmem:[%s2838 + $0xc8] sm:$0xff]
      %v2857 = vld [vmem:[%s2838 + $0xd8] sm:$0xff]
      %v2858 = vld [vmem:[%s2838 + $0xe0] sm:$0xff]
      %v2859 = vld [vmem:[%s2838 + $0xf0] sm:$0xff]
      %v2860 = vld [vmem:[%s2838 + $0xf8] sm:$0xff]
      %v2861 = vld [vmem:[%s2838 + $0x108] sm:$0xff]
      %v2862 = vld [vmem:[%s2838 + $0x110] sm:$0xff]
      %v2863 = vld [vmem:[%s2838 + $0x120] sm:$0xff]
      %v2864 = vld [vmem:[%s2838 + $0x128] sm:$0xff]
      %v2865 = vld [vmem:[%s2838 + $0x138] sm:$0xff]
      %v2866 = vld [vmem:[%s2838 + $0x140] sm:$0xff]
      %v2867 = vld [vmem:[%s2838 + $0x150] sm:$0xff]
      %v2868 = vld [vmem:[%s2838 + $0x158] sm:$0xff]
      %v2869 = vld [vmem:[%s2838 + $0x168] sm:$0xff]
      %v2870 = vld [vmem:[%s2838 + $0x170] sm:$0xff]
      %s2871 = scalar_lea.vmem %s1, 28
      %v2872 = vld [vmem:[%s2871] sm:$0x7]
      %v2874 = vsel %vm235, %v2839, 0
      %v2877 = vsel %vm235, %v2840, 0
      %v2880 = vsel %vm235, %v2841, 0
      %v2883 = vsel %vm235, %v2842, 0
      %v2886 = vsel %vm235, %v2843, 0
      %v2889 = vsel %vm235, %v2844, 0
      %v2892 = vsel %vm235, %v2845, 0
      %v2895 = vsel %vm235, %v2846, 0
      %v2898 = vsel %vm235, %v2847, 0
      %v2901 = vsel %vm235, %v2848, 0
      %v2904 = vsel %vm235, %v2849, 0
      %v2907 = vsel %vm235, %v2850, 0
      %v2910 = vsel %vm235, %v2851, 0
      %v2913 = vsel %vm235, %v2852, 0
      %v2916 = vsel %vm235, %v2853, 0
      %v2919 = vsel %vm235, %v2854, 0
      %v2922 = vsel %vm235, %v2855, 0
      %v2925 = vsel %vm235, %v2856, 0
      %v2928 = vsel %vm235, %v2857, 0
      %v2931 = vsel %vm235, %v2858, 0
      %v2934 = vsel %vm235, %v2859, 0
      %v2937 = vsel %vm235, %v2860, 0
      %v2940 = vsel %vm235, %v2861, 0
      %v2943 = vsel %vm235, %v2862, 0
      %v2946 = vsel %vm235, %v2863, 0
      %v2949 = vsel %vm235, %v2864, 0
      %v2952 = vsel %vm235, %v2865, 0
      %v2955 = vsel %vm235, %v2866, 0
      %v2958 = vsel %vm235, %v2867, 0
      %v2961 = vsel %vm235, %v2868, 0
      %v2964 = vsel %vm235, %v2869, 0
      %v2967 = vsel %vm235, %v2870, 0
      %v2970 = vsel %vm332, %v2872, 0
      %2972 = vmatprep.subr.mxu0 0.0
      %2973 = vmatpush1.msra.mxu0 %v2970
      %2974 = vmatprep.subr.mxu0 0.0
      %2975 = vmatpush1.msra.mxu0 0.0
      %2976 = vmatprep.subr.mxu0 0.0
      %2977 = vmatpush1.msra.mxu0 0.0
      %2978 = vmatprep.subr.mxu0 0.0
      %2979 = vmatpush1.msra.mxu0 0.0
      %2980 = vmatprep.subr.mxu0 0.0
      %2981 = vmatpush1.msra.mxu0 0.0
      %2982 = vmatprep.subr.mxu0 0.0
      %2983 = vmatpush1.msra.mxu0 0.0
      %2984 = vmatprep.subr.mxu0 0.0
      %2985 = vmatpush1.msra.mxu0 0.0
      %2986 = vmatprep.subr.mxu0 0.0
      %2987 = vmatpush1.msra.mxu0 0.0
      %2988 = vmatprep.subr.mxu0 0.0
      %2989 = vmatpush1.msra.mxu0 0.0
      %2990 = vmatprep.subr.mxu0 0.0
      %2991 = vmatpush1.msra.mxu0 0.0
      %2992 = vmatprep.subr.mxu0 0.0
      %2993 = vmatpush1.msra.mxu0 0.0
      %2994 = vmatprep.subr.mxu0 0.0
      %2995 = vmatpush1.msra.mxu0 0.0
      %2996 = vmatprep.subr.mxu0 0.0
      %2997 = vmatpush1.msra.mxu0 0.0
      %2998 = vmatprep.subr.mxu0 0.0
      %2999 = vmatpush1.msra.mxu0 0.0
      %3000 = vmatprep.subr.mxu0 0.0
      %3001 = vmatpush1.msra.mxu0 0.0
      %3002 = vmatprep.subr.mxu0 0.0
      %3003 = vmatpush1.msra.mxu0 0.0
      %3004 = vmatprep.subr.mxu0 0.0
      %3005 = vmatpush1.msra.mxu0 0.0
      %3006 = vmatprep.subr.mxu0 0.0
      %3007 = vmatpush1.msra.mxu0 0.0
      %3008 = vmatprep.subr.mxu0 0.0
      %3009 = vmatpush1.msra.mxu0 0.0
      %3010 = vmatprep.subr.mxu0 0.0
      %3011 = vmatpush1.msra.mxu0 0.0
      %3012 = vmatprep.subr.mxu0 0.0
      %3013 = vmatpush1.msra.mxu0 0.0
      %3014 = vmatprep.subr.mxu0 0.0
      %3015 = vmatpush1.msra.mxu0 0.0
      %3016 = vmatprep.subr.mxu0 0.0
      %3017 = vmatpush1.msra.mxu0 0.0
      %3018 = vmatprep.subr.mxu0 0.0
      %3019 = vmatpush1.msra.mxu0 0.0
      %3020 = vmatprep.subr.mxu0 0.0
      %3021 = vmatpush1.msra.mxu0 0.0
      %3022 = vmatprep.subr.mxu0 0.0
      %3023 = vmatpush1.msra.mxu0 0.0
      %3024 = vmatprep.subr.mxu0 0.0
      %3025 = vmatpush1.msra.mxu0 0.0
      %3026 = vmatprep.subr.mxu0 0.0
      %3027 = vmatpush1.msra.mxu0 0.0
      %3028 = vmatprep.subr.mxu0 0.0
      %3029 = vmatpush1.msra.mxu0 0.0
      %3030 = vmatprep.subr.mxu0 0.0
      %3031 = vmatpush1.msra.mxu0 0.0
      %3032 = vmatprep.subr.mxu0 0.0
      %3033 = vmatpush1.msra.mxu0 0.0
      %3034 = vmatprep.subr.mxu0 0.0
      %3035 = vmatpush1.msra.mxu0 0.0
      %3036 = vmatprep.mubr.f32.mxu0 0.0
      %3037 = vmatmul.mubr.f32.gmra.mrb[0].mxu0 %v2874
      %v3038 = vpop.f32.mrb[0].mxu0
      %v3039 = vadd.f32 0.0, %v3038
      %v3040 = vpop.f32.mrb[0].mxu0
      %3041 = vmatprep.mubr.f32.mxu0 0.0
      %3042 = vmatmul.mubr.f32.gmra.mrb[0].mxu0 %v2877
      %v3043 = vpop.f32.mrb[0].mxu0
      %v3044 = vadd.f32 0.0, %v3043
      %v3045 = vpop.f32.mrb[0].mxu0
      %3046 = vmatprep.mubr.f32.mxu0 0.0
      %3047 = vmatmul.mubr.f32.gmra.mrb[0].mxu0 %v2880
      %v3048 = vpop.f32.mrb[0].mxu0
      %v3049 = vadd.f32 0.0, %v3048
      %v3050 = vpop.f32.mrb[0].mxu0
      %3051 = vmatprep.mubr.f32.mxu0 0.0
      %3052 = vmatmul.mubr.f32.gmra.mrb[0].mxu0 %v2883
      %v3053 = vpop.f32.mrb[0].mxu0
      %v3054 = vadd.f32 0.0, %v3053
      %v3055 = vpop.f32.mrb[0].mxu0
      %3056 = vmatprep.mubr.f32.mxu0 0.0
      %3057 = vmatmul.mubr.f32.gmra.mrb[0].mxu0 %v2886
      %v3058 = vpop.f32.mrb[0].mxu0
      %v3059 = vadd.f32 0.0, %v3058
      %v3060 = vpop.f32.mrb[0].mxu0
      %3061 = vmatprep.mubr.f32.mxu0 0.0
      %3062 = vmatmul.mubr.f32.gmra.mrb[0].mxu0 %v2889
      %v3063 = vpop.f32.mrb[0].mxu0
      %v3064 = vadd.f32 0.0, %v3063
      %v3065 = vpop.f32.mrb[0].mxu0
      %3066 = vmatprep.mubr.f32.mxu0 0.0
      %3067 = vmatmul.mubr.f32.gmra.mrb[0].mxu0 %v2892
      %v3068 = vpop.f32.mrb[0].mxu0
      %v3069 = vadd.f32 0.0, %v3068
      %v3070 = vpop.f32.mrb[0].mxu0
      %3071 = vmatprep.mubr.f32.mxu0 0.0
      %3072 = vmatmul.mubr.f32.gmra.mrb[0].mxu0 %v2895
      %v3073 = vpop.f32.mrb[0].mxu0
      %v3074 = vadd.f32 0.0, %v3073
      %v3075 = vpop.f32.mrb[0].mxu0
      %3076 = vmatprep.mubr.f32.mxu0 0.0
      %3077 = vmatmul.mubr.f32.gmra.mrb[0].mxu0 %v2898
      %v3078 = vpop.f32.mrb[0].mxu0
      %v3079 = vadd.f32 0.0, %v3078
      %v3080 = vpop.f32.mrb[0].mxu0
      %3081 = vmatprep.mubr.f32.mxu0 0.0
      %3082 = vmatmul.mubr.f32.gmra.mrb[0].mxu0 %v2901
      %v3083 = vpop.f32.mrb[0].mxu0
      %v3084 = vadd.f32 0.0, %v3083
      %v3085 = vpop.f32.mrb[0].mxu0
      %3086 = vmatprep.mubr.f32.mxu0 0.0
      %3087 = vmatmul.mubr.f32.gmra.mrb[0].mxu0 %v2904
      %v3088 = vpop.f32.mrb[0].mxu0
      %v3089 = vadd.f32 0.0, %v3088
      %v3090 = vpop.f32.mrb[0].mxu0
      %3091 = vmatprep.mubr.f32.mxu0 0.0
      %3092 = vmatmul.mubr.f32.gmra.mrb[0].mxu0 %v2907
      %v3093 = vpop.f32.mrb[0].mxu0
      %v3094 = vadd.f32 0.0, %v3093
      %v3095 = vpop.f32.mrb[0].mxu0
      %3096 = vmatprep.mubr.f32.mxu0 0.0
      %3097 = vmatmul.mubr.f32.gmra.mrb[0].mxu0 %v2910
      %v3098 = vpop.f32.mrb[0].mxu0
      %v3099 = vadd.f32 0.0, %v3098
      %v3100 = vpop.f32.mrb[0].mxu0
      %3101 = vmatprep.mubr.f32.mxu0 0.0
      %3102 = vmatmul.mubr.f32.gmra.mrb[0].mxu0 %v2913
      %v3103 = vpop.f32.mrb[0].mxu0
      %v3104 = vadd.f32 0.0, %v3103
      %v3105 = vpop.f32.mrb[0].mxu0
      %3106 = vmatprep.mubr.f32.mxu0 0.0
      %3107 = vmatmul.mubr.f32.gmra.mrb[0].mxu0 %v2916
      %v3108 = vpop.f32.mrb[0].mxu0
      %v3109 = vadd.f32 0.0, %v3108
      %v3110 = vpop.f32.mrb[0].mxu0
      %3111 = vmatprep.mubr.f32.mxu0 0.0
      %3112 = vmatmul.mubr.f32.gmra.mrb[0].mxu0 %v2919
      %v3113 = vpop.f32.mrb[0].mxu0
      %v3114 = vadd.f32 0.0, %v3113
      %v3115 = vpop.f32.mrb[0].mxu0
      %3116 = vmatprep.mubr.f32.mxu0 0.0
      %3117 = vmatmul.mubr.f32.gmra.mrb[0].mxu0 %v2922
      %v3118 = vpop.f32.mrb[0].mxu0
      %v3119 = vadd.f32 0.0, %v3118
      %v3120 = vpop.f32.mrb[0].mxu0
      %3121 = vmatprep.mubr.f32.mxu0 0.0
      %3122 = vmatmul.mubr.f32.gmra.mrb[0].mxu0 %v2925
      %v3123 = vpop.f32.mrb[0].mxu0
      %v3124 = vadd.f32 0.0, %v3123
      %v3125 = vpop.f32.mrb[0].mxu0
      %3126 = vmatprep.mubr.f32.mxu0 0.0
      %3127 = vmatmul.mubr.f32.gmra.mrb[0].mxu0 %v2928
      %v3128 = vpop.f32.mrb[0].mxu0
      %v3129 = vadd.f32 0.0, %v3128
      %v3130 = vpop.f32.mrb[0].mxu0
      %3131 = vmatprep.mubr.f32.mxu0 0.0
      %3132 = vmatmul.mubr.f32.gmra.mrb[0].mxu0 %v2931
      %v3133 = vpop.f32.mrb[0].mxu0
      %v3134 = vadd.f32 0.0, %v3133
      %v3135 = vpop.f32.mrb[0].mxu0
      %3136 = vmatprep.mubr.f32.mxu0 0.0
      %3137 = vmatmul.mubr.f32.gmra.mrb[0].mxu0 %v2934
      %v3138 = vpop.f32.mrb[0].mxu0
      %v3139 = vadd.f32 0.0, %v3138
      %v3140 = vpop.f32.mrb[0].mxu0
      %3141 = vmatprep.mubr.f32.mxu0 0.0
      %3142 = vmatmul.mubr.f32.gmra.mrb[0].mxu0 %v2937
      %v3143 = vpop.f32.mrb[0].mxu0
      %v3144 = vadd.f32 0.0, %v3143
      %v3145 = vpop.f32.mrb[0].mxu0
      %3146 = vmatprep.mubr.f32.mxu0 0.0
      %3147 = vmatmul.mubr.f32.gmra.mrb[0].mxu0 %v2940
      %v3148 = vpop.f32.mrb[0].mxu0
      %v3149 = vadd.f32 0.0, %v3148
      %v3150 = vpop.f32.mrb[0].mxu0
      %3151 = vmatprep.mubr.f32.mxu0 0.0
      %3152 = vmatmul.mubr.f32.gmra.mrb[0].mxu0 %v2943
      %v3153 = vpop.f32.mrb[0].mxu0
      %v3154 = vadd.f32 0.0, %v3153
      %v3155 = vpop.f32.mrb[0].mxu0
      %3156 = vmatprep.mubr.f32.mxu0 0.0
      %3157 = vmatmul.mubr.f32.gmra.mrb[0].mxu0 %v2946
      %v3158 = vpop.f32.mrb[0].mxu0
      %v3159 = vadd.f32 0.0, %v3158
      %v3160 = vpop.f32.mrb[0].mxu0
      %3161 = vmatprep.mubr.f32.mxu0 0.0
      %3162 = vmatmul.mubr.f32.gmra.mrb[0].mxu0 %v2949
      %v3163 = vpop.f32.mrb[0].mxu0
      %v3164 = vadd.f32 0.0, %v3163
      %v3165 = vpop.f32.mrb[0].mxu0
      %3166 = vmatprep.mubr.f32.mxu0 0.0
      %3167 = vmatmul.mubr.f32.gmra.mrb[0].mxu0 %v2952
      %v3168 = vpop.f32.mrb[0].mxu0
      %v3169 = vadd.f32 0.0, %v3168
      %v3170 = vpop.f32.mrb[0].mxu0
      %3171 = vmatprep.mubr.f32.mxu0 0.0
      %3172 = vmatmul.mubr.f32.gmra.mrb[0].mxu0 %v2955
      %v3173 = vpop.f32.mrb[0].mxu0
      %v3174 = vadd.f32 0.0, %v3173
      %v3175 = vpop.f32.mrb[0].mxu0
      %3176 = vmatprep.mubr.f32.mxu0 0.0
      %3177 = vmatmul.mubr.f32.gmra.mrb[0].mxu0 %v2958
      %v3178 = vpop.f32.mrb[0].mxu0
      %v3179 = vadd.f32 0.0, %v3178
      %v3180 = vpop.f32.mrb[0].mxu0
      %3181 = vmatprep.mubr.f32.mxu0 0.0
      %3182 = vmatmul.mubr.f32.gmra.mrb[0].mxu0 %v2961
      %v3183 = vpop.f32.mrb[0].mxu0
      %v3184 = vadd.f32 0.0, %v3183
      %v3185 = vpop.f32.mrb[0].mxu0
      %3186 = vmatprep.mubr.f32.mxu0 0.0
      %3187 = vmatmul.mubr.f32.gmra.mrb[0].mxu0 %v2964
      %v3188 = vpop.f32.mrb[0].mxu0
      %v3189 = vadd.f32 0.0, %v3188
      %v3190 = vpop.f32.mrb[0].mxu0
      %3191 = vmatprep.mubr.f32.mxu0 0.0
      %3192 = vmatmul.mubr.f32.gmra.mrb[0].mxu0 %v2967
      %v3193 = vpop.f32.mrb[0].mxu0
      %v3194 = vadd.f32 0.0, %v3193
      %v3195 = vpop.f32.mrb[0].mxu0
      %3196 = vdwg.mxu0
      %v3197 = vadd.f32 %v2806, %v3039
      %v3198 = vadd.f32 %v2807, %v3044
      %v3199 = vadd.f32 %v2808, %v3049
      %v3200 = vadd.f32 %v2809, %v3054
      %v3201 = vadd.f32 %v2810, %v3059
      %v3202 = vadd.f32 %v2811, %v3064
      %v3203 = vadd.f32 %v2812, %v3069
      %v3204 = vadd.f32 %v2813, %v3074
      %v3205 = vadd.f32 %v2814, %v3079
      %v3206 = vadd.f32 %v2815, %v3084
      %v3207 = vadd.f32 %v2816, %v3089
      %v3208 = vadd.f32 %v2817, %v3094
      %v3209 = vadd.f32 %v2818, %v3099
      %v3210 = vadd.f32 %v2819, %v3104
      %v3211 = vadd.f32 %v2820, %v3109
      %v3212 = vadd.f32 %v2821, %v3114
      %v3213 = vadd.f32 %v2822, %v3119
      %v3214 = vadd.f32 %v2823, %v3124
      %v3215 = vadd.f32 %v2824, %v3129
      %v3216 = vadd.f32 %v2825, %v3134
      %v3217 = vadd.f32 %v2826, %v3139
      %v3218 = vadd.f32 %v2827, %v3144
      %v3219 = vadd.f32 %v2828, %v3149
      %v3220 = vadd.f32 %v2829, %v3154
      %v3221 = vadd.f32 %v2830, %v3159
      %v3222 = vadd.f32 %v2831, %v3164
      %v3223 = vadd.f32 %v2832, %v3169
      %v3224 = vadd.f32 %v2833, %v3174
      %v3225 = vadd.f32 %v2834, %v3179
      %v3226 = vadd.f32 %v2835, %v3184
      %v3227 = vadd.f32 %v2836, %v3189
      %v3228 = vadd.f32 %v2837, %v3194
      %v3229 = vld [vmem:[%s2447 + $0x1] sm:$0xff]
      %v3230 = vld [vmem:[%s2447 + $0x9] sm:$0xff]
      %v3231 = vld [vmem:[%s2447 + $0x19] sm:$0xff]
      %v3232 = vld [vmem:[%s2447 + $0x21] sm:$0xff]
      %v3233 = vld [vmem:[%s2447 + $0x31] sm:$0xff]
      %v3234 = vld [vmem:[%s2447 + $0x39] sm:$0xff]
      %v3235 = vld [vmem:[%s2447 + $0x49] sm:$0xff]
      %v3236 = vld [vmem:[%s2447 + $0x51] sm:$0xff]
      %v3237 = vld [vmem:[%s2447 + $0x61] sm:$0xff]
      %v3238 = vld [vmem:[%s2447 + $0x69] sm:$0xff]
      %v3239 = vld [vmem:[%s2447 + $0x79] sm:$0xff]
      %v3240 = vld [vmem:[%s2447 + $0x81] sm:$0xff]
      %v3241 = vld [vmem:[%s2447 + $0x91] sm:$0xff]
      %v3242 = vld [vmem:[%s2447 + $0x99] sm:$0xff]
      %v3243 = vld [vmem:[%s2447 + $0xa9] sm:$0xff]
      %v3244 = vld [vmem:[%s2447 + $0xb1] sm:$0xff]
      %v3245 = vld [vmem:[%s2447 + $0xc1] sm:$0xff]
      %v3246 = vld [vmem:[%s2447 + $0xc9] sm:$0xff]
      %v3247 = vld [vmem:[%s2447 + $0xd9] sm:$0xff]
      %v3248 = vld [vmem:[%s2447 + $0xe1] sm:$0xff]
      %v3249 = vld [vmem:[%s2447 + $0xf1] sm:$0xff]
      %v3250 = vld [vmem:[%s2447 + $0xf9] sm:$0xff]
      %v3251 = vld [vmem:[%s2447 + $0x109] sm:$0xff]
      %v3252 = vld [vmem:[%s2447 + $0x111] sm:$0xff]
      %v3253 = vld [vmem:[%s2447 + $0x121] sm:$0xff]
      %v3254 = vld [vmem:[%s2447 + $0x129] sm:$0xff]
      %v3255 = vld [vmem:[%s2447 + $0x139] sm:$0xff]
      %v3256 = vld [vmem:[%s2447 + $0x141] sm:$0xff]
      %v3257 = vld [vmem:[%s2447 + $0x151] sm:$0xff]
      %v3258 = vld [vmem:[%s2447 + $0x159] sm:$0xff]
      %v3259 = vld [vmem:[%s2447 + $0x169] sm:$0xff]
      %v3260 = vld [vmem:[%s2447 + $0x171] sm:$0xff]
      %s3261 = scalar_lea.vmem %s1, 32
      %v3262 = vld [vmem:[%s3261] sm:$0x7]
      %v3264 = vsel %vm235, %v3229, 0
      %v3267 = vsel %vm235, %v3230, 0
      %v3270 = vsel %vm235, %v3231, 0
      %v3273 = vsel %vm235, %v3232, 0
      %v3276 = vsel %vm235, %v3233, 0
      %v3279 = vsel %vm235, %v3234, 0
      %v3282 = vsel %vm235, %v3235, 0
      %v3285 = vsel %vm235, %v3236, 0
      %v3288 = vsel %vm235, %v3237, 0
      %v3291 = vsel %vm235, %v3238, 0
      %v3294 = vsel %vm235, %v3239, 0
      %v3297 = vsel %vm235, %v3240, 0
      %v3300 = vsel %vm235, %v3241, 0
      %v3303 = vsel %vm235, %v3242, 0
      %v3306 = vsel %vm235, %v3243, 0
      %v3309 = vsel %vm235, %v3244, 0
      %v3312 = vsel %vm235, %v3245, 0
      %v3315 = vsel %vm235, %v3246, 0
      %v3318 = vsel %vm235, %v3247, 0
      %v3321 = vsel %vm235, %v3248, 0
      %v3324 = vsel %vm235, %v3249, 0
      %v3327 = vsel %vm235, %v3250, 0
      %v3330 = vsel %vm235, %v3251, 0
      %v3333 = vsel %vm235, %v3252, 0
      %v3336 = vsel %vm235, %v3253, 0
      %v3339 = vsel %vm235, %v3254, 0
      %v3342 = vsel %vm235, %v3255, 0
      %v3345 = vsel %vm235, %v3256, 0
      %v3348 = vsel %vm235, %v3257, 0
      %v3351 = vsel %vm235, %v3258, 0
      %v3354 = vsel %vm235, %v3259, 0
      %v3357 = vsel %vm235, %v3260, 0
      %v3360 = vsel %vm332, %v3262, 0
      %3362 = vmatprep.subr.mxu0 0.0
      %3363 = vmatpush1.msra.mxu0 %v3360
      %3364 = vmatprep.subr.mxu0 0.0
      %3365 = vmatpush1.msra.mxu0 0.0
      %3366 = vmatprep.subr.mxu0 0.0
      %3367 = vmatpush1.msra.mxu0 0.0
      %3368 = vmatprep.subr.mxu0 0.0
      %3369 = vmatpush1.msra.mxu0 0.0
      %3370 = vmatprep.subr.mxu0 0.0
      %3371 = vmatpush1.msra.mxu0 0.0
      %3372 = vmatprep.subr.mxu0 0.0
      %3373 = vmatpush1.msra.mxu0 0.0
      %3374 = vmatprep.subr.mxu0 0.0
      %3375 = vmatpush1.msra.mxu0 0.0
      %3376 = vmatprep.subr.mxu0 0.0
      %3377 = vmatpush1.msra.mxu0 0.0
      %3378 = vmatprep.subr.mxu0 0.0
      %3379 = vmatpush1.msra.mxu0 0.0
      %3380 = vmatprep.subr.mxu0 0.0
      %3381 = vmatpush1.msra.mxu0 0.0
      %3382 = vmatprep.subr.mxu0 0.0
      %3383 = vmatpush1.msra.mxu0 0.0
      %3384 = vmatprep.subr.mxu0 0.0
      %3385 = vmatpush1.msra.mxu0 0.0
      %3386 = vmatprep.subr.mxu0 0.0
      %3387 = vmatpush1.msra.mxu0 0.0
      %3388 = vmatprep.subr.mxu0 0.0
      %3389 = vmatpush1.msra.mxu0 0.0
      %3390 = vmatprep.subr.mxu0 0.0
      %3391 = vmatpush1.msra.mxu0 0.0
      %3392 = vmatprep.subr.mxu0 0.0
      %3393 = vmatpush1.msra.mxu0 0.0
      %3394 = vmatprep.subr.mxu0 0.0
      %3395 = vmatpush1.msra.mxu0 0.0
      %3396 = vmatprep.subr.mxu0 0.0
      %3397 = vmatpush1.msra.mxu0 0.0
      %3398 = vmatprep.subr.mxu0 0.0
      %3399 = vmatpush1.msra.mxu0 0.0
      %3400 = vmatprep.subr.mxu0 0.0
      %3401 = vmatpush1.msra.mxu0 0.0
      %3402 = vmatprep.subr.mxu0 0.0
      %3403 = vmatpush1.msra.mxu0 0.0
      %3404 = vmatprep.subr.mxu0 0.0
      %3405 = vmatpush1.msra.mxu0 0.0
      %3406 = vmatprep.subr.mxu0 0.0
      %3407 = vmatpush1.msra.mxu0 0.0
      %3408 = vmatprep.subr.mxu0 0.0
      %3409 = vmatpush1.msra.mxu0 0.0
      %3410 = vmatprep.subr.mxu0 0.0
      %3411 = vmatpush1.msra.mxu0 0.0
      %3412 = vmatprep.subr.mxu0 0.0
      %3413 = vmatpush1.msra.mxu0 0.0
      %3414 = vmatprep.subr.mxu0 0.0
      %3415 = vmatpush1.msra.mxu0 0.0
      %3416 = vmatprep.subr.mxu0 0.0
      %3417 = vmatpush1.msra.mxu0 0.0
      %3418 = vmatprep.subr.mxu0 0.0
      %3419 = vmatpush1.msra.mxu0 0.0
      %3420 = vmatprep.subr.mxu0 0.0
      %3421 = vmatpush1.msra.mxu0 0.0
      %3422 = vmatprep.subr.mxu0 0.0
      %3423 = vmatpush1.msra.mxu0 0.0
      %3424 = vmatprep.subr.mxu0 0.0
      %3425 = vmatpush1.msra.mxu0 0.0
      %3426 = vmatprep.mubr.f32.mxu0 0.0
      %3427 = vmatmul.mubr.f32.gmra.mrb[0].mxu0 %v3264
      %v3428 = vpop.f32.mrb[0].mxu0
      %v3429 = vadd.f32 0.0, %v3428
      %v3430 = vpop.f32.mrb[0].mxu0
      %3431 = vmatprep.mubr.f32.mxu0 0.0
      %3432 = vmatmul.mubr.f32.gmra.mrb[0].mxu0 %v3267
      %v3433 = vpop.f32.mrb[0].mxu0
      %v3434 = vadd.f32 0.0, %v3433
      %v3435 = vpop.f32.mrb[0].mxu0
      %3436 = vmatprep.mubr.f32.mxu0 0.0
      %3437 = vmatmul.mubr.f32.gmra.mrb[0].mxu0 %v3270
      %v3438 = vpop.f32.mrb[0].mxu0
      %v3439 = vadd.f32 0.0, %v3438
      %v3440 = vpop.f32.mrb[0].mxu0
      %3441 = vmatprep.mubr.f32.mxu0 0.0
      %3442 = vmatmul.mubr.f32.gmra.mrb[0].mxu0 %v3273
      %v3443 = vpop.f32.mrb[0].mxu0
      %v3444 = vadd.f32 0.0, %v3443
      %v3445 = vpop.f32.mrb[0].mxu0
      %3446 = vmatprep.mubr.f32.mxu0 0.0
      %3447 = vmatmul.mubr.f32.gmra.mrb[0].mxu0 %v3276
      %v3448 = vpop.f32.mrb[0].mxu0
      %v3449 = vadd.f32 0.0, %v3448
      %v3450 = vpop.f32.mrb[0].mxu0
      %3451 = vmatprep.mubr.f32.mxu0 0.0
      %3452 = vmatmul.mubr.f32.gmra.mrb[0].mxu0 %v3279
      %v3453 = vpop.f32.mrb[0].mxu0
      %v3454 = vadd.f32 0.0, %v3453
      %v3455 = vpop.f32.mrb[0].mxu0
      %3456 = vmatprep.mubr.f32.mxu0 0.0
      %3457 = vmatmul.mubr.f32.gmra.mrb[0].mxu0 %v3282
      %v3458 = vpop.f32.mrb[0].mxu0
      %v3459 = vadd.f32 0.0, %v3458
      %v3460 = vpop.f32.mrb[0].mxu0
      %3461 = vmatprep.mubr.f32.mxu0 0.0
      %3462 = vmatmul.mubr.f32.gmra.mrb[0].mxu0 %v3285
      %v3463 = vpop.f32.mrb[0].mxu0
      %v3464 = vadd.f32 0.0, %v3463
      %v3465 = vpop.f32.mrb[0].mxu0
      %3466 = vmatprep.mubr.f32.mxu0 0.0
      %3467 = vmatmul.mubr.f32.gmra.mrb[0].mxu0 %v3288
      %v3468 = vpop.f32.mrb[0].mxu0
      %v3469 = vadd.f32 0.0, %v3468
      %v3470 = vpop.f32.mrb[0].mxu0
      %3471 = vmatprep.mubr.f32.mxu0 0.0
      %3472 = vmatmul.mubr.f32.gmra.mrb[0].mxu0 %v3291
      %v3473 = vpop.f32.mrb[0].mxu0
      %v3474 = vadd.f32 0.0, %v3473
      %v3475 = vpop.f32.mrb[0].mxu0
      %3476 = vmatprep.mubr.f32.mxu0 0.0
      %3477 = vmatmul.mubr.f32.gmra.mrb[0].mxu0 %v3294
      %v3478 = vpop.f32.mrb[0].mxu0
      %v3479 = vadd.f32 0.0, %v3478
      %v3480 = vpop.f32.mrb[0].mxu0
      %3481 = vmatprep.mubr.f32.mxu0 0.0
      %3482 = vmatmul.mubr.f32.gmra.mrb[0].mxu0 %v3297
      %v3483 = vpop.f32.mrb[0].mxu0
      %v3484 = vadd.f32 0.0, %v3483
      %v3485 = vpop.f32.mrb[0].mxu0
      %3486 = vmatprep.mubr.f32.mxu0 0.0
      %3487 = vmatmul.mubr.f32.gmra.mrb[0].mxu0 %v3300
      %v3488 = vpop.f32.mrb[0].mxu0
      %v3489 = vadd.f32 0.0, %v3488
      %v3490 = vpop.f32.mrb[0].mxu0
      %3491 = vmatprep.mubr.f32.mxu0 0.0
      %3492 = vmatmul.mubr.f32.gmra.mrb[0].mxu0 %v3303
      %v3493 = vpop.f32.mrb[0].mxu0
      %v3494 = vadd.f32 0.0, %v3493
      %v3495 = vpop.f32.mrb[0].mxu0
      %3496 = vmatprep.mubr.f32.mxu0 0.0
      %3497 = vmatmul.mubr.f32.gmra.mrb[0].mxu0 %v3306
      %v3498 = vpop.f32.mrb[0].mxu0
      %v3499 = vadd.f32 0.0, %v3498
      %v3500 = vpop.f32.mrb[0].mxu0
      %3501 = vmatprep.mubr.f32.mxu0 0.0
      %3502 = vmatmul.mubr.f32.gmra.mrb[0].mxu0 %v3309
      %v3503 = vpop.f32.mrb[0].mxu0
      %v3504 = vadd.f32 0.0, %v3503
      %v3505 = vpop.f32.mrb[0].mxu0
      %3506 = vmatprep.mubr.f32.mxu0 0.0
      %3507 = vmatmul.mubr.f32.gmra.mrb[0].mxu0 %v3312
      %v3508 = vpop.f32.mrb[0].mxu0
      %v3509 = vadd.f32 0.0, %v3508
      %v3510 = vpop.f32.mrb[0].mxu0
      %3511 = vmatprep.mubr.f32.mxu0 0.0
      %3512 = vmatmul.mubr.f32.gmra.mrb[0].mxu0 %v3315
      %v3513 = vpop.f32.mrb[0].mxu0
      %v3514 = vadd.f32 0.0, %v3513
      %v3515 = vpop.f32.mrb[0].mxu0
      %3516 = vmatprep.mubr.f32.mxu0 0.0
      %3517 = vmatmul.mubr.f32.gmra.mrb[0].mxu0 %v3318
      %v3518 = vpop.f32.mrb[0].mxu0
      %v3519 = vadd.f32 0.0, %v3518
      %v3520 = vpop.f32.mrb[0].mxu0
      %3521 = vmatprep.mubr.f32.mxu0 0.0
      %3522 = vmatmul.mubr.f32.gmra.mrb[0].mxu0 %v3321
      %v3523 = vpop.f32.mrb[0].mxu0
      %v3524 = vadd.f32 0.0, %v3523
      %v3525 = vpop.f32.mrb[0].mxu0
      %3526 = vmatprep.mubr.f32.mxu0 0.0
      %3527 = vmatmul.mubr.f32.gmra.mrb[0].mxu0 %v3324
      %v3528 = vpop.f32.mrb[0].mxu0
      %v3529 = vadd.f32 0.0, %v3528
      %v3530 = vpop.f32.mrb[0].mxu0
      %3531 = vmatprep.mubr.f32.mxu0 0.0
      %3532 = vmatmul.mubr.f32.gmra.mrb[0].mxu0 %v3327
      %v3533 = vpop.f32.mrb[0].mxu0
      %v3534 = vadd.f32 0.0, %v3533
      %v3535 = vpop.f32.mrb[0].mxu0
      %3536 = vmatprep.mubr.f32.mxu0 0.0
      %3537 = vmatmul.mubr.f32.gmra.mrb[0].mxu0 %v3330
      %v3538 = vpop.f32.mrb[0].mxu0
      %v3539 = vadd.f32 0.0, %v3538
      %v3540 = vpop.f32.mrb[0].mxu0
      %3541 = vmatprep.mubr.f32.mxu0 0.0
      %3542 = vmatmul.mubr.f32.gmra.mrb[0].mxu0 %v3333
      %v3543 = vpop.f32.mrb[0].mxu0
      %v3544 = vadd.f32 0.0, %v3543
      %v3545 = vpop.f32.mrb[0].mxu0
      %3546 = vmatprep.mubr.f32.mxu0 0.0
      %3547 = vmatmul.mubr.f32.gmra.mrb[0].mxu0 %v3336
      %v3548 = vpop.f32.mrb[0].mxu0
      %v3549 = vadd.f32 0.0, %v3548
      %v3550 = vpop.f32.mrb[0].mxu0
      %3551 = vmatprep.mubr.f32.mxu0 0.0
      %3552 = vmatmul.mubr.f32.gmra.mrb[0].mxu0 %v3339
      %v3553 = vpop.f32.mrb[0].mxu0
      %v3554 = vadd.f32 0.0, %v3553
      %v3555 = vpop.f32.mrb[0].mxu0
      %3556 = vmatprep.mubr.f32.mxu0 0.0
      %3557 = vmatmul.mubr.f32.gmra.mrb[0].mxu0 %v3342
      %v3558 = vpop.f32.mrb[0].mxu0
      %v3559 = vadd.f32 0.0, %v3558
      %v3560 = vpop.f32.mrb[0].mxu0
      %3561 = vmatprep.mubr.f32.mxu0 0.0
      %3562 = vmatmul.mubr.f32.gmra.mrb[0].mxu0 %v3345
      %v3563 = vpop.f32.mrb[0].mxu0
      %v3564 = vadd.f32 0.0, %v3563
      %v3565 = vpop.f32.mrb[0].mxu0
      %3566 = vmatprep.mubr.f32.mxu0 0.0
      %3567 = vmatmul.mubr.f32.gmra.mrb[0].mxu0 %v3348
      %v3568 = vpop.f32.mrb[0].mxu0
      %v3569 = vadd.f32 0.0, %v3568
      %v3570 = vpop.f32.mrb[0].mxu0
      %3571 = vmatprep.mubr.f32.mxu0 0.0
      %3572 = vmatmul.mubr.f32.gmra.mrb[0].mxu0 %v3351
      %v3573 = vpop.f32.mrb[0].mxu0
      %v3574 = vadd.f32 0.0, %v3573
      %v3575 = vpop.f32.mrb[0].mxu0
      %3576 = vmatprep.mubr.f32.mxu0 0.0
      %3577 = vmatmul.mubr.f32.gmra.mrb[0].mxu0 %v3354
      %v3578 = vpop.f32.mrb[0].mxu0
      %v3579 = vadd.f32 0.0, %v3578
      %v3580 = vpop.f32.mrb[0].mxu0
      %3581 = vmatprep.mubr.f32.mxu0 0.0
      %3582 = vmatmul.mubr.f32.gmra.mrb[0].mxu0 %v3357
      %v3583 = vpop.f32.mrb[0].mxu0
      %v3584 = vadd.f32 0.0, %v3583
      %v3585 = vpop.f32.mrb[0].mxu0
      %3586 = vdwg.mxu0
      %v3587 = vadd.f32 %v3197, %v3429
      %v3588 = vadd.f32 %v3198, %v3434
      %v3589 = vadd.f32 %v3199, %v3439
      %v3590 = vadd.f32 %v3200, %v3444
      %v3591 = vadd.f32 %v3201, %v3449
      %v3592 = vadd.f32 %v3202, %v3454
      %v3593 = vadd.f32 %v3203, %v3459
      %v3594 = vadd.f32 %v3204, %v3464
      %v3595 = vadd.f32 %v3205, %v3469
      %v3596 = vadd.f32 %v3206, %v3474
      %v3597 = vadd.f32 %v3207, %v3479
      %v3598 = vadd.f32 %v3208, %v3484
      %v3599 = vadd.f32 %v3209, %v3489
      %v3600 = vadd.f32 %v3210, %v3494
      %v3601 = vadd.f32 %v3211, %v3499
      %v3602 = vadd.f32 %v3212, %v3504
      %v3603 = vadd.f32 %v3213, %v3509
      %v3604 = vadd.f32 %v3214, %v3514
      %v3605 = vadd.f32 %v3215, %v3519
      %v3606 = vadd.f32 %v3216, %v3524
      %v3607 = vadd.f32 %v3217, %v3529
      %v3608 = vadd.f32 %v3218, %v3534
      %v3609 = vadd.f32 %v3219, %v3539
      %v3610 = vadd.f32 %v3220, %v3544
      %v3611 = vadd.f32 %v3221, %v3549
      %v3612 = vadd.f32 %v3222, %v3554
      %v3613 = vadd.f32 %v3223, %v3559
      %v3614 = vadd.f32 %v3224, %v3564
      %v3615 = vadd.f32 %v3225, %v3569
      %v3616 = vadd.f32 %v3226, %v3574
      %v3617 = vadd.f32 %v3227, %v3579
      %v3618 = vadd.f32 %v3228, %v3584
      %v3619 = vld [vmem:[%s2] sm:$0x1]
      %v3621 = vlaneseq
      %v3622 = vshrl.u32 %v3621, 7
      %v3623 = vsub.s32 0, %v3622
      %v3624 = vrot.slane %v3619, %v3623
      %v3626 = vadd.f32 %v3587, %v3624
      %v3627 = vadd.f32 %v3588, %v3624
      %v3628 = vadd.f32 %v3589, %v3624
      %v3629 = vadd.f32 %v3590, %v3624
      %v3630 = vadd.f32 %v3591, %v3624
      %v3631 = vadd.f32 %v3592, %v3624
      %v3632 = vadd.f32 %v3593, %v3624
      %v3633 = vadd.f32 %v3594, %v3624
      %v3634 = vadd.f32 %v3595, %v3624
      %v3635 = vadd.f32 %v3596, %v3624
      %v3636 = vadd.f32 %v3597, %v3624
      %v3637 = vadd.f32 %v3598, %v3624
      %v3638 = vadd.f32 %v3599, %v3624
      %v3639 = vadd.f32 %v3600, %v3624
      %v3640 = vadd.f32 %v3601, %v3624
      %v3641 = vadd.f32 %v3602, %v3624
      %v3642 = vadd.f32 %v3603, %v3624
      %v3643 = vadd.f32 %v3604, %v3624
      %v3644 = vadd.f32 %v3605, %v3624
      %v3645 = vadd.f32 %v3606, %v3624
      %v3646 = vadd.f32 %v3607, %v3624
      %v3647 = vadd.f32 %v3608, %v3624
      %v3648 = vadd.f32 %v3609, %v3624
      %v3649 = vadd.f32 %v3610, %v3624
      %v3650 = vadd.f32 %v3611, %v3624
      %v3651 = vadd.f32 %v3612, %v3624
      %v3652 = vadd.f32 %v3613, %v3624
      %v3653 = vadd.f32 %v3614, %v3624
      %v3654 = vadd.f32 %v3615, %v3624
      %v3655 = vadd.f32 %v3616, %v3624
      %v3656 = vadd.f32 %v3617, %v3624
      %v3657 = vadd.f32 %v3618, %v3624
      %v3658 = vadd.f32 %v3626, 3.0
      %v3659 = vadd.f32 %v3627, 3.0
      %v3660 = vadd.f32 %v3628, 3.0
      %v3661 = vadd.f32 %v3629, 3.0
      %v3662 = vadd.f32 %v3630, 3.0
      %v3663 = vadd.f32 %v3631, 3.0
      %v3664 = vadd.f32 %v3632, 3.0
      %v3665 = vadd.f32 %v3633, 3.0
      %v3666 = vadd.f32 %v3634, 3.0
      %v3667 = vadd.f32 %v3635, 3.0
      %v3668 = vadd.f32 %v3636, 3.0
      %v3669 = vadd.f32 %v3637, 3.0
      %v3670 = vadd.f32 %v3638, 3.0
      %v3671 = vadd.f32 %v3639, 3.0
      %v3672 = vadd.f32 %v3640, 3.0
      %v3673 = vadd.f32 %v3641, 3.0
      %v3674 = vadd.f32 %v3642, 3.0
      %v3675 = vadd.f32 %v3643, 3.0
      %v3676 = vadd.f32 %v3644, 3.0
      %v3677 = vadd.f32 %v3645, 3.0
      %v3678 = vadd.f32 %v3646, 3.0
      %v3679 = vadd.f32 %v3647, 3.0
      %v3680 = vadd.f32 %v3648, 3.0
      %v3681 = vadd.f32 %v3649, 3.0
      %v3682 = vadd.f32 %v3650, 3.0
      %v3683 = vadd.f32 %v3651, 3.0
      %v3684 = vadd.f32 %v3652, 3.0
      %v3685 = vadd.f32 %v3653, 3.0
      %v3686 = vadd.f32 %v3654, 3.0
      %v3687 = vadd.f32 %v3655, 3.0
      %v3688 = vadd.f32 %v3656, 3.0
      %v3689 = vadd.f32 %v3657, 3.0
      %v3690 = vmax.f32 %v3658, 0.0
      %v3691 = vmax.f32 %v3659, 0.0
      %v3692 = vmax.f32 %v3660, 0.0
      %v3693 = vmax.f32 %v3661, 0.0
      %v3694 = vmax.f32 %v3662, 0.0
      %v3695 = vmax.f32 %v3663, 0.0
      %v3696 = vmax.f32 %v3664, 0.0
      %v3697 = vmax.f32 %v3665, 0.0
      %v3698 = vmax.f32 %v3666, 0.0
      %v3699 = vmax.f32 %v3667, 0.0
      %v3700 = vmax.f32 %v3668, 0.0
      %v3701 = vmax.f32 %v3669, 0.0
      %v3702 = vmax.f32 %v3670, 0.0
      %v3703 = vmax.f32 %v3671, 0.0
      %v3704 = vmax.f32 %v3672, 0.0
      %v3705 = vmax.f32 %v3673, 0.0
      %v3706 = vmax.f32 %v3674, 0.0
      %v3707 = vmax.f32 %v3675, 0.0
      %v3708 = vmax.f32 %v3676, 0.0
      %v3709 = vmax.f32 %v3677, 0.0
      %v3710 = vmax.f32 %v3678, 0.0
      %v3711 = vmax.f32 %v3679, 0.0
      %v3712 = vmax.f32 %v3680, 0.0
      %v3713 = vmax.f32 %v3681, 0.0
      %v3714 = vmax.f32 %v3682, 0.0
      %v3715 = vmax.f32 %v3683, 0.0
      %v3716 = vmax.f32 %v3684, 0.0
      %v3717 = vmax.f32 %v3685, 0.0
      %v3718 = vmax.f32 %v3686, 0.0
      %v3719 = vmax.f32 %v3687, 0.0
      %v3720 = vmax.f32 %v3688, 0.0
      %v3721 = vmax.f32 %v3689, 0.0
      %v3722 = vmin.f32 %v3690, 6.0
      %v3723 = vmin.f32 %v3691, 6.0
      %v3724 = vmin.f32 %v3692, 6.0
      %v3725 = vmin.f32 %v3693, 6.0
      %v3726 = vmin.f32 %v3694, 6.0
      %v3727 = vmin.f32 %v3695, 6.0
      %v3728 = vmin.f32 %v3696, 6.0
      %v3729 = vmin.f32 %v3697, 6.0
      %v3730 = vmin.f32 %v3698, 6.0
      %v3731 = vmin.f32 %v3699, 6.0
      %v3732 = vmin.f32 %v3700, 6.0
      %v3733 = vmin.f32 %v3701, 6.0
      %v3734 = vmin.f32 %v3702, 6.0
      %v3735 = vmin.f32 %v3703, 6.0
      %v3736 = vmin.f32 %v3704, 6.0
      %v3737 = vmin.f32 %v3705, 6.0
      %v3738 = vmin.f32 %v3706, 6.0
      %v3739 = vmin.f32 %v3707, 6.0
      %v3740 = vmin.f32 %v3708, 6.0
      %v3741 = vmin.f32 %v3709, 6.0
      %v3742 = vmin.f32 %v3710, 6.0
      %v3743 = vmin.f32 %v3711, 6.0
      %v3744 = vmin.f32 %v3712, 6.0
      %v3745 = vmin.f32 %v3713, 6.0
      %v3746 = vmin.f32 %v3714, 6.0
      %v3747 = vmin.f32 %v3715, 6.0
      %v3748 = vmin.f32 %v3716, 6.0
      %v3749 = vmin.f32 %v3717, 6.0
      %v3750 = vmin.f32 %v3718, 6.0
      %v3751 = vmin.f32 %v3719, 6.0
      %v3752 = vmin.f32 %v3720, 6.0
      %v3753 = vmin.f32 %v3721, 6.0
      %v3754 = vmul.f32 %v3626, %v3722
      %v3755 = vmul.f32 %v3627, %v3723
      %v3756 = vmul.f32 %v3628, %v3724
      %v3757 = vmul.f32 %v3629, %v3725
      %v3758 = vmul.f32 %v3630, %v3726
      %v3759 = vmul.f32 %v3631, %v3727
      %v3760 = vmul.f32 %v3632, %v3728
      %v3761 = vmul.f32 %v3633, %v3729
      %v3762 = vmul.f32 %v3634, %v3730
      %v3763 = vmul.f32 %v3635, %v3731
      %v3764 = vmul.f32 %v3636, %v3732
      %v3765 = vmul.f32 %v3637, %v3733
      %v3766 = vmul.f32 %v3638, %v3734
      %v3767 = vmul.f32 %v3639, %v3735
      %v3768 = vmul.f32 %v3640, %v3736
      %v3769 = vmul.f32 %v3641, %v3737
      %v3770 = vmul.f32 %v3642, %v3738
      %v3771 = vmul.f32 %v3643, %v3739
      %v3772 = vmul.f32 %v3644, %v3740
      %v3773 = vmul.f32 %v3645, %v3741
      %v3774 = vmul.f32 %v3646, %v3742
      %v3775 = vmul.f32 %v3647, %v3743
      %v3776 = vmul.f32 %v3648, %v3744
      %v3777 = vmul.f32 %v3649, %v3745
      %v3778 = vmul.f32 %v3650, %v3746
      %v3779 = vmul.f32 %v3651, %v3747
      %v3780 = vmul.f32 %v3652, %v3748
      %v3781 = vmul.f32 %v3653, %v3749
      %v3782 = vmul.f32 %v3654, %v3750
      %v3783 = vmul.f32 %v3655, %v3751
      %v3784 = vmul.f32 %v3656, %v3752
      %v3785 = vmul.f32 %v3657, %v3753
      %v3786 = vmul.f32 %v3754, 0.16666667
      %v3787 = vmul.f32 %v3755, 0.16666667
      %v3788 = vmul.f32 %v3756, 0.16666667
      %v3789 = vmul.f32 %v3757, 0.16666667
      %v3790 = vmul.f32 %v3758, 0.16666667
      %v3791 = vmul.f32 %v3759, 0.16666667
      %v3792 = vmul.f32 %v3760, 0.16666667
      %v3793 = vmul.f32 %v3761, 0.16666667
      %v3794 = vmul.f32 %v3762, 0.16666667
      %v3795 = vmul.f32 %v3763, 0.16666667
      %v3796 = vmul.f32 %v3764, 0.16666667
      %v3797 = vmul.f32 %v3765, 0.16666667
      %v3798 = vmul.f32 %v3766, 0.16666667
      %v3799 = vmul.f32 %v3767, 0.16666667
      %v3800 = vmul.f32 %v3768, 0.16666667
      %v3801 = vmul.f32 %v3769, 0.16666667
      %v3802 = vmul.f32 %v3770, 0.16666667
      %v3803 = vmul.f32 %v3771, 0.16666667
      %v3804 = vmul.f32 %v3772, 0.16666667
      %v3805 = vmul.f32 %v3773, 0.16666667
      %v3806 = vmul.f32 %v3774, 0.16666667
      %v3807 = vmul.f32 %v3775, 0.16666667
      %v3808 = vmul.f32 %v3776, 0.16666667
      %v3809 = vmul.f32 %v3777, 0.16666667
      %v3810 = vmul.f32 %v3778, 0.16666667
      %v3811 = vmul.f32 %v3779, 0.16666667
      %v3812 = vmul.f32 %v3780, 0.16666667
      %v3813 = vmul.f32 %v3781, 0.16666667
      %v3814 = vmul.f32 %v3782, 0.16666667
      %v3815 = vmul.f32 %v3783, 0.16666667
      %v3816 = vmul.f32 %v3784, 0.16666667
      %v3817 = vmul.f32 %v3785, 0.16666667
      %vm3818 = vcmask 130048
      %v3819 = vsel %vm3818, %v3786, 0.0
      %v3820 = vsel %vm3818, %v3787, 0.0
      %v3821 = vadd.f32 %v3819, %v3820
      %v3822 = vsel %vm3818, %v3788, 0.0
      %v3823 = vadd.f32 %v3821, %v3822
      %v3824 = vsel %vm3818, %v3789, 0.0
      %v3825 = vadd.f32 %v3823, %v3824
      %v3826 = vsel %vm3818, %v3790, 0.0
      %v3827 = vadd.f32 %v3825, %v3826
      %v3828 = vsel %vm3818, %v3791, 0.0
      %v3829 = vadd.f32 %v3827, %v3828
      %v3830 = vsel %vm3818, %v3792, 0.0
      %v3831 = vadd.f32 %v3829, %v3830
      %v3832 = vsel %vm3818, %v3793, 0.0
      %v3833 = vadd.f32 %v3831, %v3832
      %v3834 = vsel %vm3818, %v3794, 0.0
      %v3835 = vadd.f32 %v3833, %v3834
      %v3836 = vsel %vm3818, %v3795, 0.0
      %v3837 = vadd.f32 %v3835, %v3836
      %v3838 = vsel %vm3818, %v3796, 0.0
      %v3839 = vadd.f32 %v3837, %v3838
      %v3840 = vsel %vm3818, %v3797, 0.0
      %v3841 = vadd.f32 %v3839, %v3840
      %v3842 = vsel %vm3818, %v3798, 0.0
      %v3843 = vadd.f32 %v3841, %v3842
      %v3844 = vsel %vm3818, %v3799, 0.0
      %v3845 = vadd.f32 %v3843, %v3844
      %v3846 = vsel %vm3818, %v3800, 0.0
      %v3847 = vadd.f32 %v3845, %v3846
      %v3848 = vsel %vm3818, %v3801, 0.0
      %v3849 = vadd.f32 %v3847, %v3848
      %v3850 = vsel %vm3818, %v3802, 0.0
      %v3851 = vadd.f32 %v3849, %v3850
      %v3852 = vsel %vm3818, %v3803, 0.0
      %v3853 = vadd.f32 %v3851, %v3852
      %v3854 = vsel %vm3818, %v3804, 0.0
      %v3855 = vadd.f32 %v3853, %v3854
      %v3856 = vsel %vm3818, %v3805, 0.0
      %v3857 = vadd.f32 %v3855, %v3856
      %v3858 = vsel %vm3818, %v3806, 0.0
      %v3859 = vadd.f32 %v3857, %v3858
      %v3860 = vsel %vm3818, %v3807, 0.0
      %v3861 = vadd.f32 %v3859, %v3860
      %v3862 = vsel %vm3818, %v3808, 0.0
      %v3863 = vadd.f32 %v3861, %v3862
      %v3864 = vsel %vm3818, %v3809, 0.0
      %v3865 = vadd.f32 %v3863, %v3864
      %v3866 = vsel %vm3818, %v3810, 0.0
      %v3867 = vadd.f32 %v3865, %v3866
      %v3868 = vsel %vm3818, %v3811, 0.0
      %v3869 = vadd.f32 %v3867, %v3868
      %v3870 = vsel %vm3818, %v3812, 0.0
      %v3871 = vadd.f32 %v3869, %v3870
      %v3872 = vsel %vm3818, %v3813, 0.0
      %v3873 = vadd.f32 %v3871, %v3872
      %v3874 = vsel %vm3818, %v3814, 0.0
      %v3875 = vadd.f32 %v3873, %v3874
      %v3876 = vsel %vm3818, %v3815, 0.0
      %v3877 = vadd.f32 %v3875, %v3876
      %v3878 = vsel %vm3818, %v3816, 0.0
      %v3879 = vadd.f32 %v3877, %v3878
      %v3880 = vsel %vm3818, %v3817, 0.0
      %v3881 = vadd.f32 %v3879, %v3880
      %v3882 = vrot.slane %v3881, 4
      %v3883 = vadd.f32 %v3881, %v3882
      %v3884 = vrot.slane %v3883, 2
      %v3885 = vadd.f32 %v3883, %v3884
      %v3886 = vrot.slane %v3885, 1
      %v3887 = vadd.f32 %v3885, %v3886
      %v3888 = vrcp.pop 256.0
      %v3889 = vmul.f32 %v3887, %v3888
      %vm3890 = vcmask 122880
      %3891 = vst.msk [vmem:[%s166] sm:$0x1] %vm3890, %v3889
      %p3892 = scmp.lt.s32.totalorder %s14, 1
      %s3893 = scalar_select %p3892, %s14, 1
      %s3894 = scalar_lea.vmem %s3, %s3893
      // Predicated region
      $region33: #{net_forward.2} parent=31 // pred_check
        %p3895 = pneg %p100
      $region34: #{net_forward.2} parent=31 // pred_check_branch
        %3897 = sbr.rel (%p3895) target = $region36
      $region35: #{net_forward.2} parent=31 // pred_region
        _
      $region36: #{net_forward.2} parent=31 // pred_fallthru
        _
    $region32: #{net_forward.2} parent=5 // pred_fallthru
      _
    %p3898 = scmp.le.s32.totalorder 2, %s9
    // Predicated region
    $region37: #{net_forward.2} parent=5 // pred_check
      %p3899 = pneg %p3898
    $region38: #{net_forward.2} parent=5 // pred_check_branch
      %3901 = sbr.rel (%p3899) target = $region40
    $region39: #{net_forward.2} parent=5 // pred_region
      %s3902 = ssub.s32 %s9, 2
      // Predicated region
      $region41: #{net_forward.2} parent=39 // pred_check
        %p3903 = pneg %p106
      $region42: #{net_forward.2} parent=39 // pred_check_branch
        %3905 = sbr.rel (%p3903) target = $region44
      $region43: #{net_forward.2} parent=39 // pred_region
        %p3906 = scmp.lt.s32.totalorder %s15, 1
        %s3907 = scalar_select %p3906, %s15, 1
        %s3908 = scalar_lea.vmem %s3, %s3907
      $region44: #{net_forward.2} parent=39 // pred_fallthru
        _
    $region40: #{net_forward.2} parent=5 // pred_fallthru
      _
  $region6: #{net_forward.2} parent=0 // loop_footer
    %s13 = sadd.s32 1, %s9
  $region7: #{net_forward.2} parent=0 // loop_footer_branch
    %8 = sbr.rel target = $region3
  $region8: #{net_forward.2} parent=0 // loop_exit
    _

// kernel: net_forward.3
$region0: #{net_forward.3}
  #allocation0 [shape = 'u32[]', space=smem, size = 0x4, offset = 0x4, fixed_abs, tag = 'smem constant byte address 0x4 - core index']
  #allocation1 [shape = 'u32[144,128]{1,0:T(1,128)}', space=vmem, size = 0x12000, scoped, tag = 'internal scratch']
  #allocation2 [shape = 'f32[2,1024]{1,0:T(2,128)}', space=vmem, size = 0x2000, scoped, tag = 'scratch operand']
  %s0 = inlined_call_operand.vmem [shape: f32[2,16], index: 0, kind: input, shape index: {}]
  %s1 = inlined_call_operand.vmem [shape: bf16[16,1024], index: 1, kind: input, shape index: {}]
  %s2 = inlined_call_operand.vmem [shape: f32[1,1024], index: 2, kind: input, shape index: {}]
  %s3 = inlined_call_operand.vmem [shape: bf16[1024,1024], index: 3, kind: input, shape index: {}]
  %s4 = inlined_call_operand.vmem [shape: f32[1,1024], index: 4, kind: input, shape index: {}]
  %s5 = inlined_call_operand.vmem [shape: bf16[1024,128], index: 5, kind: input, shape index: {}]
  %s6 = inlined_call_operand.vmem [shape: f32[1,128], index: 6, kind: input, shape index: {}]
  %s7 = inlined_call_operand.hbm [shape: f32[2,128], index: 7, kind: output, shape index: {}]
  %s8 = sld [smem:[#allocation0]]
  $region107: #{net_forward.3} parent=0
    _
  %s10 = ssub.s32 1, %s8
  %s11 = scalar_select 0, %s10, %s8
  $region1: #{net_forward.3} parent=0
    #allocation3 [shape = 'u8[16384]{0}', space=vmem, size = 0x4000, scoped, tag = 'input window, operand 1']
    #allocation4 [shape = 'u8[1024]{0}', space=vmem, size = 0x400, scoped, tag = 'output window, operand 0, single buffered']
    #allocation5 [shape = 's32[2]{0}', space=sflag, size = 0x8, scoped, tag = 'scoped memory for net_forward.3']
    %12 = vsyncpa [#allocation5], 0
    loop: start=0, step=1, limit=6
    $region2: #{net_forward.3} parent=1 // loop_pre_header
      _
    $region3: #{net_forward.3} parent=1 // loop_header
      %s14 = sphi 0, %s18
      %p15 = scmp.ge.s32.totalorder %s14, 6
      %s22 = sphi 0, %s22
      %s24 = sphi 0, %s22
      %s25 = sphi 0, %s24
      %s39 = sphi 0, %s25
      %s45 = sphi 0, %s47
      %s48 = sphi 0, %s45
      %s49 = sphi 0, %s48
      %s65 = sphi 0, %s49
      %s71 = sphi 0, %s73
      %s74 = sphi 0, %s71
      %s75 = sphi 0, %s74
      %s91 = sphi 0, %s75
      %s97 = sphi 0, %s99
      %s100 = sphi 0, %s97
      %s101 = sphi 0, %s100
      %s117 = sphi 0, %s101
      %s121 = sphi 0, %s121
      %s123 = sphi 0, %s121
      %s124 = sphi 0, %s123
      %s138 = sphi 0, %s124
      %s142 = sphi 0, %s142
      %s144 = sphi 0, %s142
      %s145 = sphi 0, %s144
      %s159 = sphi 0, %s145
      %s163 = sphi 0, %s163
      %s165 = sphi 0, %s163
      %s166 = sphi 0, %s165
      %s180 = sphi 0, %s166
      %s184 = sphi 0, %s184
      %s186 = sphi 0, %s184
      %s187 = sphi 0, %s186
      %s201 = sphi 0, %s187
    $region4: #{net_forward.3} parent=1 // loop_header_branch
      %17 = sbr.rel (%p15) target = $region8
    $region5: #{net_forward.3} parent=1 // loop_body
      %s19 = ssub.s32 %s14, 1
      %s20 = ssub.s32 %s14, 2
      %s21 = sadd.s32 %s14, 1
      %s23 = sadd.s32 %s22, 1
      %p26 = scmp.eq.s32.totalorder %s14, 3
      %p27 = scmp.ne.s32.totalorder %s22, %s24
      %p28 = scmp.eq.s32.totalorder %s14, 0
      %p29 = por %p27, %p28
      %p30 = scmp.ne.s32.totalorder %s22, %s24
      %p31 = scmp.eq.s32.totalorder %s19, 3
      %p32 = por %p30, %p31
      %p33 = scmp.ne.s32.totalorder %s24, %s25
      %p34 = scmp.eq.s32.totalorder %s19, 0
      %p35 = por %p33, %p34
      %p36 = scmp.ne.s32.totalorder %s24, %s25
      %p37 = scmp.eq.s32.totalorder %s20, 3
      %p38 = por %p36, %p37
      %p40 = scmp.ne.s32.totalorder %s25, %s39
      %p41 = scmp.eq.s32.totalorder %s20, 0
      %p42 = por %p40, %p41
      %s43 = ssub.s32 %s14, %s21
      %p44 = scmp.eq.s32.totalorder %s43, 0
      %s46 = sadd.s32 %s45, 1
      %s47 = scalar_select %p44, %s45, %s46
      %p50 = pneg %p44
      %p51 = scmp.eq.s32.totalorder %s14, 3
      %p52 = por %p50, %p51
      %p53 = scmp.ne.s32.totalorder %s45, %s48
      %p54 = scmp.eq.s32.totalorder %s14, 0
      %p55 = por %p53, %p54
      %p56 = scmp.ne.s32.totalorder %s45, %s48
      %p57 = scmp.eq.s32.totalorder %s19, 3
      %p58 = por %p56, %p57
      %p59 = scmp.ne.s32.totalorder %s48, %s49
      %p60 = scmp.eq.s32.totalorder %s19, 0
      %p61 = por %p59, %p60
      %p62 = scmp.ne.s32.totalorder %s48, %s49
      %p63 = scmp.eq.s32.totalorder %s20, 3
      %p64 = por %p62, %p63
      %p66 = scmp.ne.s32.totalorder %s49, %s65
      %p67 = scmp.eq.s32.totalorder %s20, 0
      %p68 = por %p66, %p67
      %s69 = ssub.s32 %s14, %s21
      %p70 = scmp.eq.s32.totalorder %s69, 0
      %s72 = sadd.s32 %s71, 1
      %s73 = scalar_select %p70, %s71, %s72
      %p76 = pneg %p70
      %p77 = scmp.eq.s32.totalorder %s14, 3
      %p78 = por %p76, %p77
      %p79 = scmp.ne.s32.totalorder %s71, %s74
      %p80 = scmp.eq.s32.totalorder %s14, 0
      %p81 = por %p79, %p80
      %p82 = scmp.ne.s32.totalorder %s71, %s74
      %p83 = scmp.eq.s32.totalorder %s19, 3
      %p84 = por %p82, %p83
      %p85 = scmp.ne.s32.totalorder %s74, %s75
      %p86 = scmp.eq.s32.totalorder %s19, 0
      %p87 = por %p85, %p86
      %p88 = scmp.ne.s32.totalorder %s74, %s75
      %p89 = scmp.eq.s32.totalorder %s20, 3
      %p90 = por %p88, %p89
      %p92 = scmp.ne.s32.totalorder %s75, %s91
      %p93 = scmp.eq.s32.totalorder %s20, 0
      %p94 = por %p92, %p93
      %s95 = ssub.s32 %s14, %s21
      %p96 = scmp.eq.s32.totalorder %s95, 0
      %s98 = sadd.s32 %s97, 1
      %s99 = scalar_select %p96, %s97, %s98
      %p102 = pneg %p96
      %p103 = scmp.eq.s32.totalorder %s14, 3
      %p104 = por %p102, %p103
      %p105 = scmp.ne.s32.totalorder %s97, %s100
      %p106 = scmp.eq.s32.totalorder %s14, 0
      %p107 = por %p105, %p106
      %p108 = scmp.ne.s32.totalorder %s97, %s100
      %p109 = scmp.eq.s32.totalorder %s19, 3
      %p110 = por %p108, %p109
      %p111 = scmp.ne.s32.totalorder %s100, %s101
      %p112 = scmp.eq.s32.totalorder %s19, 0
      %p113 = por %p111, %p112
      %p114 = scmp.ne.s32.totalorder %s100, %s101
      %p115 = scmp.eq.s32.totalorder %s20, 3
      %p116 = por %p114, %p115
      %p118 = scmp.ne.s32.totalorder %s101, %s117
      %p119 = scmp.eq.s32.totalorder %s20, 0
      %p120 = por %p118, %p119
      %s122 = sadd.s32 %s121, 1
      %p125 = scmp.eq.s32.totalorder %s14, 3
      %p126 = scmp.ne.s32.totalorder %s121, %s123
      %p127 = scmp.eq.s32.totalorder %s14, 0
      %p128 = por %p126, %p127
      %p129 = scmp.ne.s32.totalorder %s121, %s123
      %p130 = scmp.eq.s32.totalorder %s19, 3
      %p131 = por %p129, %p130
      %p132 = scmp.ne.s32.totalorder %s123, %s124
      %p133 = scmp.eq.s32.totalorder %s19, 0
      %p134 = por %p132, %p133
      %p135 = scmp.ne.s32.totalorder %s123, %s124
      %p136 = scmp.eq.s32.totalorder %s20, 3
      %p137 = por %p135, %p136
      %p139 = scmp.ne.s32.totalorder %s124, %s138
      %p140 = scmp.eq.s32.totalorder %s20, 0
      %p141 = por %p139, %p140
      %s143 = sadd.s32 %s142, 1
      %p146 = scmp.eq.s32.totalorder %s14, 3
      %p147 = scmp.ne.s32.totalorder %s142, %s144
      %p148 = scmp.eq.s32.totalorder %s14, 0
      %p149 = por %p147, %p148
      %p150 = scmp.ne.s32.totalorder %s142, %s144
      %p151 = scmp.eq.s32.totalorder %s19, 3
      %p152 = por %p150, %p151
      %p153 = scmp.ne.s32.totalorder %s144, %s145
      %p154 = scmp.eq.s32.totalorder %s19, 0
      %p155 = por %p153, %p154
      %p156 = scmp.ne.s32.totalorder %s144, %s145
      %p157 = scmp.eq.s32.totalorder %s20, 3
      %p158 = por %p156, %p157
      %p160 = scmp.ne.s32.totalorder %s145, %s159
      %p161 = scmp.eq.s32.totalorder %s20, 0
      %p162 = por %p160, %p161
      %s164 = sadd.s32 %s163, 1
      %p167 = scmp.eq.s32.totalorder %s14, 3
      %p168 = scmp.ne.s32.totalorder %s163, %s165
      %p169 = scmp.eq.s32.totalorder %s14, 0
      %p170 = por %p168, %p169
      %p171 = scmp.ne.s32.totalorder %s163, %s165
      %p172 = scmp.eq.s32.totalorder %s19, 3
      %p173 = por %p171, %p172
      %p174 = scmp.ne.s32.totalorder %s165, %s166
      %p175 = scmp.eq.s32.totalorder %s19, 0
      %p176 = por %p174, %p175
      %p177 = scmp.ne.s32.totalorder %s165, %s166
      %p178 = scmp.eq.s32.totalorder %s20, 3
      %p179 = por %p177, %p178
      %p181 = scmp.ne.s32.totalorder %s166, %s180
      %p182 = scmp.eq.s32.totalorder %s20, 0
      %p183 = por %p181, %p182
      %s185 = sadd.s32 %s184, 1
      %p188 = scmp.eq.s32.totalorder %s14, 3
      %p189 = scmp.ne.s32.totalorder %s184, %s186
      %p190 = scmp.eq.s32.totalorder %s14, 0
      %p191 = por %p189, %p190
      %p192 = scmp.ne.s32.totalorder %s184, %s186
      %p193 = scmp.eq.s32.totalorder %s19, 3
      %p194 = por %p192, %p193
      %p195 = scmp.ne.s32.totalorder %s186, %s187
      %p196 = scmp.eq.s32.totalorder %s19, 0
      %p197 = por %p195, %p196
      %p198 = scmp.ne.s32.totalorder %s186, %s187
      %p199 = scmp.eq.s32.totalorder %s20, 3
      %p200 = por %p198, %p199
      %p202 = scmp.ne.s32.totalorder %s187, %s201
      %p203 = scmp.eq.s32.totalorder %s20, 0
      %p204 = por %p202, %p203
      %p205 = scmp.le.s32.totalorder 1, %s14
      %p206 = scmp.lt.s32.totalorder %s14, 5
      %p207 = pnand %p205, %p206
      %p208 = pneg %p207
      // Predicated region
      $region9: #{net_forward.3} parent=5 // pred_check
        _
      $region10: #{net_forward.3} parent=5 // pred_check_branch
        %210 = sbr.rel (%p207) target = $region12
      $region11: #{net_forward.3} parent=5 // pred_region
        %s211 = ssub.s32 %s14, 1
        // Predicated region
        $region13: #{net_forward.3} parent=11 // pred_check
          %p212 = pneg %p35
        $region14: #{net_forward.3} parent=11 // pred_check_branch
          %214 = sbr.rel (%p212) target = $region16
        $region15: #{net_forward.3} parent=11 // pred_region
          _
        $region16: #{net_forward.3} parent=11 // pred_fallthru
          _
        // Predicated region
        $region17: #{net_forward.3} parent=11 // pred_check
          %p215 = pneg %p134
        $region18: #{net_forward.3} parent=11 // pred_check_branch
          %217 = sbr.rel (%p215) target = $region20
        $region19: #{net_forward.3} parent=11 // pred_region
          _
        $region20: #{net_forward.3} parent=11 // pred_fallthru
          _
        // Predicated region
        $region21: #{net_forward.3} parent=11 // pred_check
          %p218 = pneg %p155
        $region22: #{net_forward.3} parent=11 // pred_check_branch
          %220 = sbr.rel (%p218) target = $region24
        $region23: #{net_forward.3} parent=11 // pred_region
          _
        $region24: #{net_forward.3} parent=11 // pred_fallthru
          _
        // Predicated region
        $region25: #{net_forward.3} parent=11 // pred_check
          %p221 = pneg %p176
        $region26: #{net_forward.3} parent=11 // pred_check_branch
          %223 = sbr.rel (%p221) target = $region28
        $region27: #{net_forward.3} parent=11 // pred_region
          _
        $region28: #{net_forward.3} parent=11 // pred_fallthru
          _
      $region12: #{net_forward.3} parent=5 // pred_fallthru
        _
      %p224 = scmp.lt.s32.totalorder %s14, 4
      // Predicated region
      $region29: #{net_forward.3} parent=5 // pred_check
        %p225 = pneg %p224
      $region30: #{net_forward.3} parent=5 // pred_check_branch
        %227 = sbr.rel (%p225) target = $region32
      $region31: #{net_forward.3} parent=5 // pred_region
        // Predicated region
        $region33: #{net_forward.3} parent=31 // pred_check
          %p228 = pneg %p55
        $region34: #{net_forward.3} parent=31 // pred_check_branch
          %230 = sbr.rel (%p228) target = $region36
        $region35: #{net_forward.3} parent=31 // pred_region
          %s231 = sand.u32 %s45, 1
          %s232 = sand.u32 %s45, 1
          %s233 = smul.addr %s232, 16
          %s234 = scalar_lea.vmem [#allocation3], %s233
          %s235 = smul.u32 2, %s14
          %s236 = smul.addr %s235, 4
          %s237 = scalar_lea.vmem %s1, %s236
          // Predicated region
          $region37: #{net_forward.3} parent=35 // pred_check
            _
          $region38: #{net_forward.3} parent=35 // pred_check_branch
            %239 = sbr.rel (0) target = $region40
          $region39: #{net_forward.3} parent=35 // pred_region
            // Predicated region
            $region41: #{net_forward.3} parent=39 // pred_check
              _
            $region42: #{net_forward.3} parent=39 // pred_check_branch
              %241 = sbr.rel (0) target = $region44
            $region43: #{net_forward.3} parent=39 // pred_region
              // Predicated region
              $region56: #{net_forward.3} parent=43 // pred_check
                _
              $region57: #{net_forward.3} parent=43 // pred_check_branch
                %258 = sbr.rel (0) target = $region59
              $region58: #{net_forward.3} parent=43 // pred_region
                loop: start=0, step=1, limit=1
                $region60: #{net_forward.3} parent=58 // loop_pre_header
                  _
                $region61: #{net_forward.3} parent=58 // loop_header
                  %s260 = sphi 0, %s264
                  %p261 = scmp.ge.s32.totalorder %s260, 1
                  %s265 = sphi %s237, %s237
                  %s266 = sphi %s234, %s234
                $region62: #{net_forward.3} parent=58 // loop_header_branch
                  %263 = sbr.rel (%p261) target = $region66
                $region63: #{net_forward.3} parent=58 // loop_body
                  %v267 = vld [vmem:[%s265] sm:$0xff]
                  %268 = vst [vmem:[%s266] sm:$0xff] %v267
                  %v269 = vld [vmem:[%s265 + $0x20] sm:$0xff]
                  %270 = vst [vmem:[%s266 + $0x8] sm:$0xff] %v269
                $region64: #{net_forward.3} parent=58 // loop_footer
                  %s264 = sadd.s32 1, %s260
                $region65: #{net_forward.3} parent=58 // loop_footer_branch
                  %259 = sbr.rel target = $region61
                $region66: #{net_forward.3} parent=58 // loop_exit
                  _
              $region59: #{net_forward.3} parent=43 // pred_fallthru
                _
              // Predicated region
              $region67: #{net_forward.3} parent=43 // pred_check
                _
              $region68: #{net_forward.3} parent=43 // pred_check_branch
                %272 = sbr.rel target = $region70
              $region69: #{net_forward.3} parent=43 // pred_region
                _
              $region70: #{net_forward.3} parent=43 // pred_fallthru
                _
            $region44: #{net_forward.3} parent=39 // pred_fallthru
              _
            // Predicated region
            $region45: #{net_forward.3} parent=39 // pred_check
              _
            $region46: #{net_forward.3} parent=39 // pred_check_branch
              %243 = sbr.rel target = $region48
            $region47: #{net_forward.3} parent=39 // pred_region
              loop: start=0, step=1, limit=1
              $region49: #{net_forward.3} parent=47 // loop_pre_header
                _
              $region50: #{net_forward.3} parent=47 // loop_header
                %s246 = sphi 0, %s250
                %p247 = scmp.ge.s32.totalorder %s246, 1
                %s251 = sphi %s237, %s237
                %s252 = sphi %s234, %s234
              $region51: #{net_forward.3} parent=47 // loop_header_branch
                %249 = sbr.rel (%p247) target = $region55
              $region52: #{net_forward.3} parent=47 // loop_body
                %v253 = vld [vmem:[%s251] sm:$0xff]
                %254 = vst [vmem:[%s252] sm:$0xff] %v253
                %v255 = vld [vmem:[%s251 + $0x20] sm:$0xff]
                %256 = vst [vmem:[%s252 + $0x8] sm:$0xff] %v255
              $region53: #{net_forward.3} parent=47 // loop_footer
                %s250 = sadd.s32 1, %s246
              $region54: #{net_forward.3} parent=47 // loop_footer_branch
                %245 = sbr.rel target = $region50
              $region55: #{net_forward.3} parent=47 // loop_exit
                _
            $region48: #{net_forward.3} parent=39 // pred_fallthru
              _
          $region40: #{net_forward.3} parent=35 // pred_fallthru
            _
          %273 = vnop
        $region36: #{net_forward.3} parent=31 // pred_fallthru
          _
        // Predicated region
        $region71: #{net_forward.3} parent=31 // pred_check
          %p274 = pneg %p81
        $region72: #{net_forward.3} parent=31 // pred_check_branch
          %276 = sbr.rel (%p274) target = $region74
        $region73: #{net_forward.3} parent=31 // pred_region
          %s277 = smul.u32 2, %s14
          %p278 = scmp.lt.s32.totalorder %s277, 7
          %s279 = scalar_select %p278, %s277, 7
          %s280 = scalar_lea.vmem %s2, %s279
          %s281 = smul.u32 2, %s14
        $region74: #{net_forward.3} parent=31 // pred_fallthru
          _
        // Predicated region
        $region75: #{net_forward.3} parent=31 // pred_check
          %p282 = pneg %p107
        $region76: #{net_forward.3} parent=31 // pred_check_branch
          %284 = sbr.rel (%p282) target = $region78
        $region77: #{net_forward.3} parent=31 // pred_region
          %s285 = smul.u32 32, %s14
          %p286 = scmp.lt.s32.totalorder %s285, 127
          %s287 = scalar_select %p286, %s285, 127
          %s288 = smul.addr %s287, 8
          %s289 = smul.addr %s288, 4
          %s290 = scalar_lea.vmem %s3, %s289
          %s291 = smul.u32 32, %s14
        $region78: #{net_forward.3} parent=31 // pred_fallthru
          _
      $region32: #{net_forward.3} parent=5 // pred_fallthru
        _
      %p292 = scmp.le.s32.totalorder 1, %s14
      %p293 = scmp.lt.s32.totalorder %s14, 5
      %p294 = pnand %p292, %p293
      %p295 = pneg %p294
      // Predicated region
      $region79: #{net_forward.3} parent=5 // pred_check
        _
      $region80: #{net_forward.3} parent=5 // pred_check_branch
        %297 = sbr.rel (%p294) target = $region82
      $region81: #{net_forward.3} parent=5 // pred_region
        %s298 = ssub.s32 %s14, 1
        %s299 = sand.u32 %s48, 1
        %s300 = sand.u32 %s48, 1
        %s301 = smul.addr %s300, 16
        %s302 = scalar_lea.vmem [#allocation3], %s301
        // Predicated region
        $region83: #{net_forward.3} parent=81 // pred_check
          %p303 = pneg %p61
        $region84: #{net_forward.3} parent=81 // pred_check_branch
          %305 = sbr.rel (%p303) target = $region86
        $region85: #{net_forward.3} parent=81 // pred_region
          _
        $region86: #{net_forward.3} parent=81 // pred_fallthru
          _
        %p306 = pneg %p35
        %p307 = pneg %p32
        %s308 = sand.u32 %s48, 1
        %s309 = sand.u32 %s48, 1
        %s310 = smul.addr %s309, 16
        %s311 = scalar_lea.vmem [#allocation3], %s310
        %p312 = pneg %p61
        %p313 = pneg %p58
        %s314 = smul.u32 2, %s19
        %p315 = scmp.lt.s32.totalorder %s314, 7
        %s316 = scalar_select %p315, %s314, 7
        %s317 = scalar_lea.vmem %s2, %s316
        %p318 = pneg %p87
        %p319 = pneg %p84
        %s320 = smul.u32 32, %s19
        %p321 = scmp.lt.s32.totalorder %s320, 127
        %s322 = scalar_select %p321, %s320, 127
        %s323 = smul.addr %s322, 8
        %s324 = smul.addr %s323, 4
        %s325 = scalar_lea.vmem %s3, %s324
        %p326 = pneg %p113
        %p327 = pneg %p110
        %p328 = pneg %p134
        %p329 = pneg %p131
        %p330 = pneg %p155
        %p331 = pneg %p152
        %p332 = pneg %p176
        %p333 = pneg %p173
        %p334 = pneg %p197
        %p335 = pneg %p194
        %s336 = smul.u32 2, %s19
        %s337 = smul.u32 2, %s19
        %p338 = scmp.lt.s32.totalorder %s337, 7
        %s339 = scalar_select %p338, %s337, 7
        %s340 = scalar_lea.vmem %s2, %s339
        %s341 = smul.u32 2, %s19
        %s342 = smul.u32 32, %s19
        %p343 = scmp.lt.s32.totalorder %s342, 127
        %s344 = scalar_select %p343, %s342, 127
        %s345 = smul.addr %s344, 8
        %s346 = smul.addr %s345, 4
        %s347 = scalar_lea.vmem %s3, %s346
        %s348 = smul.u32 32, %s19
        %p350 = scmp.eq.s32.totalorder %s19, 0
        // Predicated region
        $region87: #{net_forward.3} parent=81 // pred_check
          %p351 = pneg %p350
        $region88: #{net_forward.3} parent=81 // pred_check_branch
          %353 = sbr.rel (%p351) target = $region90
        $region89: #{net_forward.3} parent=81 // pred_region
          %354 = vst [vmem:[#allocation2] sm:$0xff] 0.0
          %355 = vst [vmem:[#allocation2 + $0x8] sm:$0xff] 0.0
        $region90: #{net_forward.3} parent=81 // pred_fallthru
          _
        %v356 = vld [vmem:[%s0] sm:$0x3]
        %v357 = vpack.c.bf16 %v356, %v356
        %v358 = vld [vmem:[%s302] sm:$0xff]
        %v359 = vld [vmem:[%s302 + $0x8] sm:$0xff]
        %v360 = vld [vmem:[%s340] sm:$0x3]
        %v362 = vlaneseq
        %v363 = vshrl.u32 %v362, 7
        %v364 = vsub.s32 0, %v363
        %v365 = vrot.slane %v360, %v364
        %v366 = vlaneseq
        %v367 = vshrl.u32 %v366, 7
        %v368 = vsub.s32 1, %v367
        %v369 = vrot.slane %v360, %v368
        %v374 = vunpack.c.l.b16 %v358
        %v375 = vunpack.c.h.b16 %v358
        %v376 = vunpack.c.l.b16 %v359
        %v377 = vunpack.c.h.b16 %v359
        %v378 = vpack.c.b16 %v376, %v374
        %v379 = vpack.c.b16 %v377, %v375
        %vm382 = vcmask 130048
        %v384 = vsel %vm382, %v357, 0
        %386 = vmatprep.subr.bf16.mxu0 %v379
        %387 = vmatpush1.bf16.msra.mxu0 %v378
        %388 = vmatprep.subr.bf16.mxu0 0
        %389 = vmatpush1.bf16.msra.mxu0 0
        %390 = vmatprep.subr.bf16.mxu0 0
        %391 = vmatpush1.bf16.msra.mxu0 0
        %392 = vmatprep.subr.bf16.mxu0 0
        %393 = vmatpush1.bf16.msra.mxu0 0
        %394 = vmatprep.subr.bf16.mxu0 0
        %395 = vmatpush1.bf16.msra.mxu0 0
        %396 = vmatprep.subr.bf16.mxu0 0
        %397 = vmatpush1.bf16.msra.mxu0 0
        %398 = vmatprep.subr.bf16.mxu0 0
        %399 = vmatpush1.bf16.msra.mxu0 0
        %400 = vmatprep.subr.bf16.mxu0 0
        %401 = vmatpush1.bf16.msra.mxu0 0
        %402 = vmatprep.subr.bf16.mxu0 0
        %403 = vmatpush1.bf16.msra.mxu0 0
        %404 = vmatprep.subr.bf16.mxu0 0
        %405 = vmatpush1.bf16.msra.mxu0 0
        %406 = vmatprep.subr.bf16.mxu0 0
        %407 = vmatpush1.bf16.msra.mxu0 0
        %408 = vmatprep.subr.bf16.mxu0 0
        %409 = vmatpush1.bf16.msra.mxu0 0
        %410 = vmatprep.subr.bf16.mxu0 0
        %411 = vmatpush1.bf16.msra.mxu0 0
        %412 = vmatprep.subr.bf16.mxu0 0
        %413 = vmatpush1.bf16.msra.mxu0 0
        %414 = vmatprep.subr.bf16.mxu0 0
        %415 = vmatpush1.bf16.msra.mxu0 0
        %416 = vmatprep.subr.bf16.mxu0 0
        %417 = vmatpush1.bf16.msra.mxu0 0
        %418 = vmatprep.mubr.bf16.mxu0 0
        %419 = vmatmul.mubr.bf16.gmra.mrb[0].mxu0 %v384
        %v420 = vpop.f32.mrb[0].mxu0
        %v421 = vadd.f32 %v365, %v420
        %v422 = vpop.f32.mrb[0].mxu0
        %v423 = vadd.f32 %v369, %v422
        %v424 = vpop.f32.mrb[0].mxu0
        %v425 = vpop.f32.mrb[0].mxu0
        %426 = vdwg.mxu0
        %v427 = vadd.f32 %v421, 3.0
        %v428 = vadd.f32 %v423, 3.0
        %v429 = vmax.f32 %v427, 0.0
        %v430 = vmax.f32 %v428, 0.0
        %v431 = vmin.f32 %v429, 6.0
        %v432 = vmin.f32 %v430, 6.0
        %v433 = vmul.f32 %v421, %v431
        %v434 = vmul.f32 %v423, %v432
        %v435 = vmul.f32 %v433, 0.16666667
        %v436 = vmul.f32 %v434, 0.16666667
        %v437 = vld [vmem:[#allocation2] sm:$0xff]
        %v438 = vld [vmem:[#allocation2 + $0x8] sm:$0xff]
        %v439 = vpack.c.bf16 %v435, %v435
        %v440 = vpack.c.bf16 %v436, %v436
        %v441 = vld [vmem:[%s347] sm:$0xff]
        %v442 = vld [vmem:[%s347 + $0x8] sm:$0xff]
        %v443 = vld [vmem:[%s347 + $0x10] sm:$0xff]
        %v444 = vld [vmem:[%s347 + $0x18] sm:$0xff]
        %v445 = vld [vmem:[%s347 + $0x20] sm:$0xff]
        %v446 = vld [vmem:[%s347 + $0x28] sm:$0xff]
        %v447 = vld [vmem:[%s347 + $0x30] sm:$0xff]
        %v448 = vld [vmem:[%s347 + $0x38] sm:$0xff]
        %v449 = vld [vmem:[%s347 + $0x40] sm:$0xff]
        %v450 = vld [vmem:[%s347 + $0x48] sm:$0xff]
        %v451 = vld [vmem:[%s347 + $0x50] sm:$0xff]
        %v452 = vld [vmem:[%s347 + $0x58] sm:$0xff]
        %v453 = vld [vmem:[%s347 + $0x60] sm:$0xff]
        %v454 = vld [vmem:[%s347 + $0x68] sm:$0xff]
        %v455 = vld [vmem:[%s347 + $0x70] sm:$0xff]
        %v456 = vld [vmem:[%s347 + $0x78] sm:$0xff]
        %v457 = vld [vmem:[%s347 + $0x80] sm:$0xff]
        %v458 = vld [vmem:[%s347 + $0x88] sm:$0xff]
        %v459 = vld [vmem:[%s347 + $0x90] sm:$0xff]
        %v460 = vld [vmem:[%s347 + $0x98] sm:$0xff]
        %v461 = vld [vmem:[%s347 + $0xa0] sm:$0xff]
        %v462 = vld [vmem:[%s347 + $0xa8] sm:$0xff]
        %v463 = vld [vmem:[%s347 + $0xb0] sm:$0xff]
        %v464 = vld [vmem:[%s347 + $0xb8] sm:$0xff]
        %v465 = vld [vmem:[%s347 + $0xc0] sm:$0xff]
        %v466 = vld [vmem:[%s347 + $0xc8] sm:$0xff]
        %v467 = vld [vmem:[%s347 + $0xd0] sm:$0xff]
        %v468 = vld [vmem:[%s347 + $0xd8] sm:$0xff]
        %v469 = vld [vmem:[%s347 + $0xe0] sm:$0xff]
        %v470 = vld [vmem:[%s347 + $0xe8] sm:$0xff]
        %v471 = vld [vmem:[%s347 + $0xf0] sm:$0xff]
        %v472 = vld [vmem:[%s347 + $0xf8] sm:$0xff]
        %v473 = vld [vmem:[%s347 + $0x100] sm:$0xff]
        %v474 = vld [vmem:[%s347 + $0x108] sm:$0xff]
        %v475 = vld [vmem:[%s347 + $0x110] sm:$0xff]
        %v476 = vld [vmem:[%s347 + $0x118] sm:$0xff]
        %v477 = vld [vmem:[%s347 + $0x120] sm:$0xff]
        %v478 = vld [vmem:[%s347 + $0x128] sm:$0xff]
        %v479 = vld [vmem:[%s347 + $0x130] sm:$0xff]
        %v480 = vld [vmem:[%s347 + $0x138] sm:$0xff]
        %v481 = vld [vmem:[%s347 + $0x140] sm:$0xff]
        %v482 = vld [vmem:[%s347 + $0x148] sm:$0xff]
        %v483 = vld [vmem:[%s347 + $0x150] sm:$0xff]
        %v484 = vld [vmem:[%s347 + $0x158] sm:$0xff]
        %v485 = vld [vmem:[%s347 + $0x160] sm:$0xff]
        %v486 = vld [vmem:[%s347 + $0x168] sm:$0xff]
        %v487 = vld [vmem:[%s347 + $0x170] sm:$0xff]
        %v488 = vld [vmem:[%s347 + $0x178] sm:$0xff]
        %v489 = vld [vmem:[%s347 + $0x180] sm:$0xff]
        %v490 = vld [vmem:[%s347 + $0x188] sm:$0xff]
        %v491 = vld [vmem:[%s347 + $0x190] sm:$0xff]
        %v492 = vld [vmem:[%s347 + $0x198] sm:$0xff]
        %v493 = vld [vmem:[%s347 + $0x1a0] sm:$0xff]
        %v494 = vld [vmem:[%s347 + $0x1a8] sm:$0xff]
        %v495 = vld [vmem:[%s347 + $0x1b0] sm:$0xff]
        %v496 = vld [vmem:[%s347 + $0x1b8] sm:$0xff]
        %v497 = vld [vmem:[%s347 + $0x1c0] sm:$0xff]
        %v498 = vld [vmem:[%s347 + $0x1c8] sm:$0xff]
        %v499 = vld [vmem:[%s347 + $0x1d0] sm:$0xff]
        %v500 = vld [vmem:[%s347 + $0x1d8] sm:$0xff]
        %v501 = vld [vmem:[%s347 + $0x1e0] sm:$0xff]
        %v502 = vld [vmem:[%s347 + $0x1e8] sm:$0xff]
        %v503 = vld [vmem:[%s347 + $0x1f0] sm:$0xff]
        %v504 = vld [vmem:[%s347 + $0x1f8] sm:$0xff]
        %v505 = vld [vmem:[%s347 + $0x200] sm:$0xff]
        %v506 = vld [vmem:[%s347 + $0x208] sm:$0xff]
        %v507 = vld [vmem:[%s347 + $0x210] sm:$0xff]
        %v508 = vld [vmem:[%s347 + $0x218] sm:$0xff]
        %v509 = vld [vmem:[%s347 + $0x220] sm:$0xff]
        %v510 = vld [vmem:[%s347 + $0x228] sm:$0xff]
        %v511 = vld [vmem:[%s347 + $0x230] sm:$0xff]
        %v512 = vld [vmem:[%s347 + $0x238] sm:$0xff]
        %v513 = vld [vmem:[%s347 + $0x240] sm:$0xff]
        %v514 = vld [vmem:[%s347 + $0x248] sm:$0xff]
        %v515 = vld [vmem:[%s347 + $0x250] sm:$0xff]
        %v516 = vld [vmem:[%s347 + $0x258] sm:$0xff]
        %v517 = vld [vmem:[%s347 + $0x260] sm:$0xff]
        %v518 = vld [vmem:[%s347 + $0x268] sm:$0xff]
        %v519 = vld [vmem:[%s347 + $0x270] sm:$0xff]
        %v520 = vld [vmem:[%s347 + $0x278] sm:$0xff]
        %v521 = vld [vmem:[%s347 + $0x280] sm:$0xff]
        %v522 = vld [vmem:[%s347 + $0x288] sm:$0xff]
        %v523 = vld [vmem:[%s347 + $0x290] sm:$0xff]
        %v524 = vld [vmem:[%s347 + $0x298] sm:$0xff]
        %v525 = vld [vmem:[%s347 + $0x2a0] sm:$0xff]
        %v526 = vld [vmem:[%s347 + $0x2a8] sm:$0xff]
        %v527 = vld [vmem:[%s347 + $0x2b0] sm:$0xff]
        %v528 = vld [vmem:[%s347 + $0x2b8] sm:$0xff]
        %v529 = vld [vmem:[%s347 + $0x2c0] sm:$0xff]
        %v530 = vld [vmem:[%s347 + $0x2c8] sm:$0xff]
        %v531 = vld [vmem:[%s347 + $0x2d0] sm:$0xff]
        %v532 = vld [vmem:[%s347 + $0x2d8] sm:$0xff]
        %v533 = vld [vmem:[%s347 + $0x2e0] sm:$0xff]
        %v534 = vld [vmem:[%s347 + $0x2e8] sm:$0xff]
        %v535 = vld [vmem:[%s347 + $0x2f0] sm:$0xff]
        %v536 = vld [vmem:[%s347 + $0x2f8] sm:$0xff]
        %v537 = vld [vmem:[%s347 + $0x300] sm:$0xff]
        %v538 = vld [vmem:[%s347 + $0x308] sm:$0xff]
        %v539 = vld [vmem:[%s347 + $0x310] sm:$0xff]
        %v540 = vld [vmem:[%s347 + $0x318] sm:$0xff]
        %v541 = vld [vmem:[%s347 + $0x320] sm:$0xff]
        %v542 = vld [vmem:[%s347 + $0x328] sm:$0xff]
        %v543 = vld [vmem:[%s347 + $0x330] sm:$0xff]
        %v544 = vld [vmem:[%s347 + $0x338] sm:$0xff]
        %v545 = vld [vmem:[%s347 + $0x340] sm:$0xff]
        %v546 = vld [vmem:[%s347 + $0x348] sm:$0xff]
        %v547 = vld [vmem:[%s347 + $0x350] sm:$0xff]
        %v548 = vld [vmem:[%s347 + $0x358] sm:$0xff]
        %v549 = vld [vmem:[%s347 + $0x360] sm:$0xff]
        %v550 = vld [vmem:[%s347 + $0x368] sm:$0xff]
        %v551 = vld [vmem:[%s347 + $0x370] sm:$0xff]
        %v552 = vld [vmem:[%s347 + $0x378] sm:$0xff]
        %v553 = vld [vmem:[%s347 + $0x380] sm:$0xff]
        %v554 = vld [vmem:[%s347 + $0x388] sm:$0xff]
        %v555 = vld [vmem:[%s347 + $0x390] sm:$0xff]
        %v556 = vld [vmem:[%s347 + $0x398] sm:$0xff]
        %v557 = vld [vmem:[%s347 + $0x3a0] sm:$0xff]
        %v558 = vld [vmem:[%s347 + $0x3a8] sm:$0xff]
        %v559 = vld [vmem:[%s347 + $0x3b0] sm:$0xff]
        %v560 = vld [vmem:[%s347 + $0x3b8] sm:$0xff]
        %v561 = vld [vmem:[%s347 + $0x3c0] sm:$0xff]
        %v562 = vld [vmem:[%s347 + $0x3c8] sm:$0xff]
        %v563 = vld [vmem:[%s347 + $0x3d0] sm:$0xff]
        %v564 = vld [vmem:[%s347 + $0x3d8] sm:$0xff]
        %v565 = vld [vmem:[%s347 + $0x3e0] sm:$0xff]
        %v566 = vld [vmem:[%s347 + $0x3e8] sm:$0xff]
        %v567 = vld [vmem:[%s347 + $0x3f0] sm:$0xff]
        %v568 = vld [vmem:[%s347 + $0x3f8] sm:$0xff]
        %v697 = vunpack.c.l.b16 %v441
        %v698 = vunpack.c.h.b16 %v441
        %v699 = vunpack.c.l.b16 %v442
        %v700 = vunpack.c.h.b16 %v442
        %v701 = vunpack.c.l.b16 %v443
        %v702 = vunpack.c.h.b16 %v443
        %v703 = vunpack.c.l.b16 %v444
        %v704 = vunpack.c.h.b16 %v444
        %v705 = vunpack.c.l.b16 %v445
        %v706 = vunpack.c.h.b16 %v445
        %v707 = vunpack.c.l.b16 %v446
        %v708 = vunpack.c.h.b16 %v446
        %v709 = vunpack.c.l.b16 %v447
        %v710 = vunpack.c.h.b16 %v447
        %v711 = vunpack.c.l.b16 %v448
        %v712 = vunpack.c.h.b16 %v448
        %v713 = vunpack.c.l.b16 %v449
        %v714 = vunpack.c.h.b16 %v449
        %v715 = vunpack.c.l.b16 %v450
        %v716 = vunpack.c.h.b16 %v450
        %v717 = vunpack.c.l.b16 %v451
        %v718 = vunpack.c.h.b16 %v451
        %v719 = vunpack.c.l.b16 %v452
        %v720 = vunpack.c.h.b16 %v452
        %v721 = vunpack.c.l.b16 %v453
        %v722 = vunpack.c.h.b16 %v453
        %v723 = vunpack.c.l.b16 %v454
        %v724 = vunpack.c.h.b16 %v454
        %v725 = vunpack.c.l.b16 %v455
        %v726 = vunpack.c.h.b16 %v455
        %v727 = vunpack.c.l.b16 %v456
        %v728 = vunpack.c.h.b16 %v456
        %v729 = vunpack.c.l.b16 %v457
        %v730 = vunpack.c.h.b16 %v457
        %v731 = vunpack.c.l.b16 %v458
        %v732 = vunpack.c.h.b16 %v458
        %v733 = vunpack.c.l.b16 %v459
        %v734 = vunpack.c.h.b16 %v459
        %v735 = vunpack.c.l.b16 %v460
        %v736 = vunpack.c.h.b16 %v460
        %v737 = vunpack.c.l.b16 %v461
        %v738 = vunpack.c.h.b16 %v461
        %v739 = vunpack.c.l.b16 %v462
        %v740 = vunpack.c.h.b16 %v462
        %v741 = vunpack.c.l.b16 %v463
        %v742 = vunpack.c.h.b16 %v463
        %v743 = vunpack.c.l.b16 %v464
        %v744 = vunpack.c.h.b16 %v464
        %v745 = vunpack.c.l.b16 %v465
        %v746 = vunpack.c.h.b16 %v465
        %v747 = vunpack.c.l.b16 %v466
        %v748 = vunpack.c.h.b16 %v466
        %v749 = vunpack.c.l.b16 %v467
        %v750 = vunpack.c.h.b16 %v467
        %v751 = vunpack.c.l.b16 %v468
        %v752 = vunpack.c.h.b16 %v468
        %v753 = vunpack.c.l.b16 %v469
        %v754 = vunpack.c.h.b16 %v469
        %v755 = vunpack.c.l.b16 %v470
        %v756 = vunpack.c.h.b16 %v470
        %v757 = vunpack.c.l.b16 %v471
        %v758 = vunpack.c.h.b16 %v471
        %v759 = vunpack.c.l.b16 %v472
        %v760 = vunpack.c.h.b16 %v472
        %v761 = vunpack.c.l.b16 %v473
        %v762 = vunpack.c.h.b16 %v473
        %v763 = vunpack.c.l.b16 %v474
        %v764 = vunpack.c.h.b16 %v474
        %v765 = vunpack.c.l.b16 %v475
        %v766 = vunpack.c.h.b16 %v475
        %v767 = vunpack.c.l.b16 %v476
        %v768 = vunpack.c.h.b16 %v476
        %v769 = vunpack.c.l.b16 %v477
        %v770 = vunpack.c.h.b16 %v477
        %v771 = vunpack.c.l.b16 %v478
        %v772 = vunpack.c.h.b16 %v478
        %v773 = vunpack.c.l.b16 %v479
        %v774 = vunpack.c.h.b16 %v479
        %v775 = vunpack.c.l.b16 %v480
        %v776 = vunpack.c.h.b16 %v480
        %v777 = vunpack.c.l.b16 %v481
        %v778 = vunpack.c.h.b16 %v481
        %v779 = vunpack.c.l.b16 %v482
        %v780 = vunpack.c.h.b16 %v482
        %v781 = vunpack.c.l.b16 %v483
        %v782 = vunpack.c.h.b16 %v483
        %v783 = vunpack.c.l.b16 %v484
        %v784 = vunpack.c.h.b16 %v484
        %v785 = vunpack.c.l.b16 %v485
        %v786 = vunpack.c.h.b16 %v485
        %v787 = vunpack.c.l.b16 %v486
        %v788 = vunpack.c.h.b16 %v486
        %v789 = vunpack.c.l.b16 %v487
        %v790 = vunpack.c.h.b16 %v487
        %v791 = vunpack.c.l.b16 %v488
        %v792 = vunpack.c.h.b16 %v488
        %v793 = vunpack.c.l.b16 %v489
        %v794 = vunpack.c.h.b16 %v489
        %v795 = vunpack.c.l.b16 %v490
        %v796 = vunpack.c.h.b16 %v490
        %v797 = vunpack.c.l.b16 %v491
        %v798 = vunpack.c.h.b16 %v491
        %v799 = vunpack.c.l.b16 %v492
        %v800 = vunpack.c.h.b16 %v492
        %v801 = vunpack.c.l.b16 %v493
        %v802 = vunpack.c.h.b16 %v493
        %v803 = vunpack.c.l.b16 %v494
        %v804 = vunpack.c.h.b16 %v494
        %v805 = vunpack.c.l.b16 %v495
        %v806 = vunpack.c.h.b16 %v495
        %v807 = vunpack.c.l.b16 %v496
        %v808 = vunpack.c.h.b16 %v496
        %v809 = vunpack.c.l.b16 %v497
        %v810 = vunpack.c.h.b16 %v497
        %v811 = vunpack.c.l.b16 %v498
        %v812 = vunpack.c.h.b16 %v498
        %v813 = vunpack.c.l.b16 %v499
        %v814 = vunpack.c.h.b16 %v499
        %v815 = vunpack.c.l.b16 %v500
        %v816 = vunpack.c.h.b16 %v500
        %v817 = vunpack.c.l.b16 %v501
        %v818 = vunpack.c.h.b16 %v501
        %v819 = vunpack.c.l.b16 %v502
        %v820 = vunpack.c.h.b16 %v502
        %v821 = vunpack.c.l.b16 %v503
        %v822 = vunpack.c.h.b16 %v503
        %v823 = vunpack.c.l.b16 %v504
        %v824 = vunpack.c.h.b16 %v504
        %v825 = vunpack.c.l.b16 %v505
        %v826 = vunpack.c.h.b16 %v505
        %v827 = vunpack.c.l.b16 %v506
        %v828 = vunpack.c.h.b16 %v506
        %v829 = vunpack.c.l.b16 %v507
        %v830 = vunpack.c.h.b16 %v507
        %v831 = vunpack.c.l.b16 %v508
        %v832 = vunpack.c.h.b16 %v508
        %v833 = vunpack.c.l.b16 %v509
        %v834 = vunpack.c.h.b16 %v509
        %v835 = vunpack.c.l.b16 %v510
        %v836 = vunpack.c.h.b16 %v510
        %v837 = vunpack.c.l.b16 %v511
        %v838 = vunpack.c.h.b16 %v511
        %v839 = vunpack.c.l.b16 %v512
        %v840 = vunpack.c.h.b16 %v512
        %v841 = vunpack.c.l.b16 %v513
        %v842 = vunpack.c.h.b16 %v513
        %v843 = vunpack.c.l.b16 %v514
        %v844 = vunpack.c.h.b16 %v514
        %v845 = vunpack.c.l.b16 %v515
        %v846 = vunpack.c.h.b16 %v515
        %v847 = vunpack.c.l.b16 %v516
        %v848 = vunpack.c.h.b16 %v516
        %v849 = vunpack.c.l.b16 %v517
        %v850 = vunpack.c.h.b16 %v517
        %v851 = vunpack.c.l.b16 %v518
        %v852 = vunpack.c.h.b16 %v518
        %v853 = vunpack.c.l.b16 %v519
        %v854 = vunpack.c.h.b16 %v519
        %v855 = vunpack.c.l.b16 %v520
        %v856 = vunpack.c.h.b16 %v520
        %v857 = vunpack.c.l.b16 %v521
        %v858 = vunpack.c.h.b16 %v521
        %v859 = vunpack.c.l.b16 %v522
        %v860 = vunpack.c.h.b16 %v522
        %v861 = vunpack.c.l.b16 %v523
        %v862 = vunpack.c.h.b16 %v523
        %v863 = vunpack.c.l.b16 %v524
        %v864 = vunpack.c.h.b16 %v524
        %v865 = vunpack.c.l.b16 %v525
        %v866 = vunpack.c.h.b16 %v525
        %v867 = vunpack.c.l.b16 %v526
        %v868 = vunpack.c.h.b16 %v526
        %v869 = vunpack.c.l.b16 %v527
        %v870 = vunpack.c.h.b16 %v527
        %v871 = vunpack.c.l.b16 %v528
        %v872 = vunpack.c.h.b16 %v528
        %v873 = vunpack.c.l.b16 %v529
        %v874 = vunpack.c.h.b16 %v529
        %v875 = vunpack.c.l.b16 %v530
        %v876 = vunpack.c.h.b16 %v530
        %v877 = vunpack.c.l.b16 %v531
        %v878 = vunpack.c.h.b16 %v531
        %v879 = vunpack.c.l.b16 %v532
        %v880 = vunpack.c.h.b16 %v532
        %v881 = vunpack.c.l.b16 %v533
        %v882 = vunpack.c.h.b16 %v533
        %v883 = vunpack.c.l.b16 %v534
        %v884 = vunpack.c.h.b16 %v534
        %v885 = vunpack.c.l.b16 %v535
        %v886 = vunpack.c.h.b16 %v535
        %v887 = vunpack.c.l.b16 %v536
        %v888 = vunpack.c.h.b16 %v536
        %v889 = vunpack.c.l.b16 %v537
        %v890 = vunpack.c.h.b16 %v537
        %v891 = vunpack.c.l.b16 %v538
        %v892 = vunpack.c.h.b16 %v538
        %v893 = vunpack.c.l.b16 %v539
        %v894 = vunpack.c.h.b16 %v539
        %v895 = vunpack.c.l.b16 %v540
        %v896 = vunpack.c.h.b16 %v540
        %v897 = vunpack.c.l.b16 %v541
        %v898 = vunpack.c.h.b16 %v541
        %v899 = vunpack.c.l.b16 %v542
        %v900 = vunpack.c.h.b16 %v542
        %v901 = vunpack.c.l.b16 %v543
        %v902 = vunpack.c.h.b16 %v543
        %v903 = vunpack.c.l.b16 %v544
        %v904 = vunpack.c.h.b16 %v544
        %v905 = vunpack.c.l.b16 %v545
        %v906 = vunpack.c.h.b16 %v545
        %v907 = vunpack.c.l.b16 %v546
        %v908 = vunpack.c.h.b16 %v546
        %v909 = vunpack.c.l.b16 %v547
        %v910 = vunpack.c.h.b16 %v547
        %v911 = vunpack.c.l.b16 %v548
        %v912 = vunpack.c.h.b16 %v548
        %v913 = vunpack.c.l.b16 %v549
        %v914 = vunpack.c.h.b16 %v549
        %v915 = vunpack.c.l.b16 %v550
        %v916 = vunpack.c.h.b16 %v550
        %v917 = vunpack.c.l.b16 %v551
        %v918 = vunpack.c.h.b16 %v551
        %v919 = vunpack.c.l.b16 %v552
        %v920 = vunpack.c.h.b16 %v552
        %v921 = vunpack.c.l.b16 %v553
        %v922 = vunpack.c.h.b16 %v553
        %v923 = vunpack.c.l.b16 %v554
        %v924 = vunpack.c.h.b16 %v554
        %v925 = vunpack.c.l.b16 %v555
        %v926 = vunpack.c.h.b16 %v555
        %v927 = vunpack.c.l.b16 %v556
        %v928 = vunpack.c.h.b16 %v556
        %v929 = vunpack.c.l.b16 %v557
        %v930 = vunpack.c.h.b16 %v557
        %v931 = vunpack.c.l.b16 %v558
        %v932 = vunpack.c.h.b16 %v558
        %v933 = vunpack.c.l.b16 %v559
        %v934 = vunpack.c.h.b16 %v559
        %v935 = vunpack.c.l.b16 %v560
        %v936 = vunpack.c.h.b16 %v560
        %v937 = vunpack.c.l.b16 %v561
        %v938 = vunpack.c.h.b16 %v561
        %v939 = vunpack.c.l.b16 %v562
        %v940 = vunpack.c.h.b16 %v562
        %v941 = vunpack.c.l.b16 %v563
        %v942 = vunpack.c.h.b16 %v563
        %v943 = vunpack.c.l.b16 %v564
        %v944 = vunpack.c.h.b16 %v564
        %v945 = vunpack.c.l.b16 %v565
        %v946 = vunpack.c.h.b16 %v565
        %v947 = vunpack.c.l.b16 %v566
        %v948 = vunpack.c.h.b16 %v566
        %v949 = vunpack.c.l.b16 %v567
        %v950 = vunpack.c.h.b16 %v567
        %v951 = vunpack.c.l.b16 %v568
        %v952 = vunpack.c.h.b16 %v568
        %v953 = vpack.c.b16 %v705, %v697
        %v954 = vpack.c.b16 %v706, %v698
        %v955 = vpack.c.b16 %v707, %v699
        %v956 = vpack.c.b16 %v708, %v700
        %v957 = vpack.c.b16 %v709, %v701
        %v958 = vpack.c.b16 %v710, %v702
        %v959 = vpack.c.b16 %v711, %v703
        %v960 = vpack.c.b16 %v712, %v704
        %v961 = vpack.c.b16 %v721, %v713
        %v962 = vpack.c.b16 %v722, %v714
        %v963 = vpack.c.b16 %v723, %v715
        %v964 = vpack.c.b16 %v724, %v716
        %v965 = vpack.c.b16 %v725, %v717
        %v966 = vpack.c.b16 %v726, %v718
        %v967 = vpack.c.b16 %v727, %v719
        %v968 = vpack.c.b16 %v728, %v720
        %v969 = vpack.c.b16 %v737, %v729
        %v970 = vpack.c.b16 %v738, %v730
        %v971 = vpack.c.b16 %v739, %v731
        %v972 = vpack.c.b16 %v740, %v732
        %v973 = vpack.c.b16 %v741, %v733
        %v974 = vpack.c.b16 %v742, %v734
        %v975 = vpack.c.b16 %v743, %v735
        %v976 = vpack.c.b16 %v744, %v736
        %v977 = vpack.c.b16 %v753, %v745
        %v978 = vpack.c.b16 %v754, %v746
        %v979 = vpack.c.b16 %v755, %v747
        %v980 = vpack.c.b16 %v756, %v748
        %v981 = vpack.c.b16 %v757, %v749
        %v982 = vpack.c.b16 %v758, %v750
        %v983 = vpack.c.b16 %v759, %v751
        %v984 = vpack.c.b16 %v760, %v752
        %v985 = vpack.c.b16 %v769, %v761
        %v986 = vpack.c.b16 %v770, %v762
        %v987 = vpack.c.b16 %v771, %v763
        %v988 = vpack.c.b16 %v772, %v764
        %v989 = vpack.c.b16 %v773, %v765
        %v990 = vpack.c.b16 %v774, %v766
        %v991 = vpack.c.b16 %v775, %v767
        %v992 = vpack.c.b16 %v776, %v768
        %v993 = vpack.c.b16 %v785, %v777
        %v994 = vpack.c.b16 %v786, %v778
        %v995 = vpack.c.b16 %v787, %v779
        %v996 = vpack.c.b16 %v788, %v780
        %v997 = vpack.c.b16 %v789, %v781
        %v998 = vpack.c.b16 %v790, %v782
        %v999 = vpack.c.b16 %v791, %v783
        %v1000 = vpack.c.b16 %v792, %v784
        %v1001 = vpack.c.b16 %v801, %v793
        %v1002 = vpack.c.b16 %v802, %v794
        %v1003 = vpack.c.b16 %v803, %v795
        %v1004 = vpack.c.b16 %v804, %v796
        %v1005 = vpack.c.b16 %v805, %v797
        %v1006 = vpack.c.b16 %v806, %v798
        %v1007 = vpack.c.b16 %v807, %v799
        %v1008 = vpack.c.b16 %v808, %v800
        %v1009 = vpack.c.b16 %v817, %v809
        %v1010 = vpack.c.b16 %v818, %v810
        %v1011 = vpack.c.b16 %v819, %v811
        %v1012 = vpack.c.b16 %v820, %v812
        %v1013 = vpack.c.b16 %v821, %v813
        %v1014 = vpack.c.b16 %v822, %v814
        %v1015 = vpack.c.b16 %v823, %v815
        %v1016 = vpack.c.b16 %v824, %v816
        %v1017 = vpack.c.b16 %v833, %v825
        %v1018 = vpack.c.b16 %v834, %v826
        %v1019 = vpack.c.b16 %v835, %v827
        %v1020 = vpack.c.b16 %v836, %v828
        %v1021 = vpack.c.b16 %v837, %v829
        %v1022 = vpack.c.b16 %v838, %v830
        %v1023 = vpack.c.b16 %v839, %v831
        %v1024 = vpack.c.b16 %v840, %v832
        %v1025 = vpack.c.b16 %v849, %v841
        %v1026 = vpack.c.b16 %v850, %v842
        %v1027 = vpack.c.b16 %v851, %v843
        %v1028 = vpack.c.b16 %v852, %v844
        %v1029 = vpack.c.b16 %v853, %v845
        %v1030 = vpack.c.b16 %v854, %v846
        %v1031 = vpack.c.b16 %v855, %v847
        %v1032 = vpack.c.b16 %v856, %v848
        %v1033 = vpack.c.b16 %v865, %v857
        %v1034 = vpack.c.b16 %v866, %v858
        %v1035 = vpack.c.b16 %v867, %v859
        %v1036 = vpack.c.b16 %v868, %v860
        %v1037 = vpack.c.b16 %v869, %v861
        %v1038 = vpack.c.b16 %v870, %v862
        %v1039 = vpack.c.b16 %v871, %v863
        %v1040 = vpack.c.b16 %v872, %v864
        %v1041 = vpack.c.b16 %v881, %v873
        %v1042 = vpack.c.b16 %v882, %v874
        %v1043 = vpack.c.b16 %v883, %v875
        %v1044 = vpack.c.b16 %v884, %v876
        %v1045 = vpack.c.b16 %v885, %v877
        %v1046 = vpack.c.b16 %v886, %v878
        %v1047 = vpack.c.b16 %v887, %v879
        %v1048 = vpack.c.b16 %v888, %v880
        %v1049 = vpack.c.b16 %v897, %v889
        %v1050 = vpack.c.b16 %v898, %v890
        %v1051 = vpack.c.b16 %v899, %v891
        %v1052 = vpack.c.b16 %v900, %v892
        %v1053 = vpack.c.b16 %v901, %v893
        %v1054 = vpack.c.b16 %v902, %v894
        %v1055 = vpack.c.b16 %v903, %v895
        %v1056 = vpack.c.b16 %v904, %v896
        %v1057 = vpack.c.b16 %v913, %v905
        %v1058 = vpack.c.b16 %v914, %v906
        %v1059 = vpack.c.b16 %v915, %v907
        %v1060 = vpack.c.b16 %v916, %v908
        %v1061 = vpack.c.b16 %v917, %v909
        %v1062 = vpack.c.b16 %v918, %v910
        %v1063 = vpack.c.b16 %v919, %v911
        %v1064 = vpack.c.b16 %v920, %v912
        %v1065 = vpack.c.b16 %v929, %v921
        %v1066 = vpack.c.b16 %v930, %v922
        %v1067 = vpack.c.b16 %v931, %v923
        %v1068 = vpack.c.b16 %v932, %v924
        %v1069 = vpack.c.b16 %v933, %v925
        %v1070 = vpack.c.b16 %v934, %v926
        %v1071 = vpack.c.b16 %v935, %v927
        %v1072 = vpack.c.b16 %v936, %v928
        %v1073 = vpack.c.b16 %v945, %v937
        %v1074 = vpack.c.b16 %v946, %v938
        %v1075 = vpack.c.b16 %v947, %v939
        %v1076 = vpack.c.b16 %v948, %v940
        %v1077 = vpack.c.b16 %v949, %v941
        %v1078 = vpack.c.b16 %v950, %v942
        %v1079 = vpack.c.b16 %v951, %v943
        %v1080 = vpack.c.b16 %v952, %v944
        %1209 = vmatprep.subr.bf16.mxu0 %v954
        %1210 = vmatpush1.bf16.msra.mxu0 %v953
        %1211 = vmatprep.subr.bf16.mxu0 %v962
        %1212 = vmatpush1.bf16.msra.mxu0 %v961
        %1213 = vmatprep.subr.bf16.mxu0 %v970
        %1214 = vmatpush1.bf16.msra.mxu0 %v969
        %1215 = vmatprep.subr.bf16.mxu0 %v978
        %1216 = vmatpush1.bf16.msra.mxu0 %v977
        %1217 = vmatprep.subr.bf16.mxu0 %v986
        %1218 = vmatpush1.bf16.msra.mxu0 %v985
        %1219 = vmatprep.subr.bf16.mxu0 %v994
        %1220 = vmatpush1.bf16.msra.mxu0 %v993
        %1221 = vmatprep.subr.bf16.mxu0 %v1002
        %1222 = vmatpush1.bf16.msra.mxu0 %v1001
        %1223 = vmatprep.subr.bf16.mxu0 %v1010
        %1224 = vmatpush1.bf16.msra.mxu0 %v1009
        %1225 = vmatprep.subr.bf16.mxu0 %v1018
        %1226 = vmatpush1.bf16.msra.mxu0 %v1017
        %1227 = vmatprep.subr.bf16.mxu0 %v1026
        %1228 = vmatpush1.bf16.msra.mxu0 %v1025
        %1229 = vmatprep.subr.bf16.mxu0 %v1034
        %1230 = vmatpush1.bf16.msra.mxu0 %v1033
        %1231 = vmatprep.subr.bf16.mxu0 %v1042
        %1232 = vmatpush1.bf16.msra.mxu0 %v1041
        %1233 = vmatprep.subr.bf16.mxu0 %v1050
        %1234 = vmatpush1.bf16.msra.mxu0 %v1049
        %1235 = vmatprep.subr.bf16.mxu0 %v1058
        %1236 = vmatpush1.bf16.msra.mxu0 %v1057
        %1237 = vmatprep.subr.bf16.mxu0 %v1066
        %1238 = vmatpush1.bf16.msra.mxu0 %v1065
        %1239 = vmatprep.subr.bf16.mxu0 %v1074
        %1240 = vmatpush1.bf16.msra.mxu0 %v1073
        %1241 = vmatprep.mubr.bf16.mxu0 %v440
        %1242 = vmatmul.mubr.bf16.gmra.mrb[0].mxu0 %v439
        %v1243 = vpop.f32.mrb[0].mxu0
        %v1244 = vadd.f32 0.0, %v1243
        %v1245 = vpop.f32.mrb[0].mxu0
        %v1246 = vadd.f32 0.0, %v1245
        %v1247 = vpop.f32.mrb[0].mxu0
        %v1248 = vpop.f32.mrb[0].mxu0
        %1249 = vdwg.mxu0
        %1250 = vmatprep.subr.bf16.mxu0 %v956
        %1251 = vmatpush1.bf16.msra.mxu0 %v955
        %1252 = vmatprep.subr.bf16.mxu0 %v964
        %1253 = vmatpush1.bf16.msra.mxu0 %v963
        %1254 = vmatprep.subr.bf16.mxu0 %v972
        %1255 = vmatpush1.bf16.msra.mxu0 %v971
        %1256 = vmatprep.subr.bf16.mxu0 %v980
        %1257 = vmatpush1.bf16.msra.mxu0 %v979
        %1258 = vmatprep.subr.bf16.mxu0 %v988
        %1259 = vmatpush1.bf16.msra.mxu0 %v987
        %1260 = vmatprep.subr.bf16.mxu0 %v996
        %1261 = vmatpush1.bf16.msra.mxu0 %v995
        %1262 = vmatprep.subr.bf16.mxu0 %v1004
        %1263 = vmatpush1.bf16.msra.mxu0 %v1003
        %1264 = vmatprep.subr.bf16.mxu0 %v1012
        %1265 = vmatpush1.bf16.msra.mxu0 %v1011
        %1266 = vmatprep.subr.bf16.mxu0 %v1020
        %1267 = vmatpush1.bf16.msra.mxu0 %v1019
        %1268 = vmatprep.subr.bf16.mxu0 %v1028
        %1269 = vmatpush1.bf16.msra.mxu0 %v1027
        %1270 = vmatprep.subr.bf16.mxu0 %v1036
        %1271 = vmatpush1.bf16.msra.mxu0 %v1035
        %1272 = vmatprep.subr.bf16.mxu0 %v1044
        %1273 = vmatpush1.bf16.msra.mxu0 %v1043
        %1274 = vmatprep.subr.bf16.mxu0 %v1052
        %1275 = vmatpush1.bf16.msra.mxu0 %v1051
        %1276 = vmatprep.subr.bf16.mxu0 %v1060
        %1277 = vmatpush1.bf16.msra.mxu0 %v1059
        %1278 = vmatprep.subr.bf16.mxu0 %v1068
        %1279 = vmatpush1.bf16.msra.mxu0 %v1067
        %1280 = vmatprep.subr.bf16.mxu0 %v1076
        %1281 = vmatpush1.bf16.msra.mxu0 %v1075
        %1282 = vmatprep.mubr.bf16.mxu0 %v440
        %1283 = vmatmul.mubr.bf16.gmra.mrb[0].mxu0 %v439
        %v1284 = vpop.f32.mrb[0].mxu0
        %v1285 = vadd.f32 0.0, %v1284
        %v1286 = vpop.f32.mrb[0].mxu0
        %v1287 = vadd.f32 0.0, %v1286
        %v1288 = vpop.f32.mrb[0].mxu0
        %v1289 = vpop.f32.mrb[0].mxu0
        %1290 = vdwg.mxu0
        %1291 = vmatprep.subr.bf16.mxu0 %v958
        %1292 = vmatpush1.bf16.msra.mxu0 %v957
        %1293 = vmatprep.subr.bf16.mxu0 %v966
        %1294 = vmatpush1.bf16.msra.mxu0 %v965
        %1295 = vmatprep.subr.bf16.mxu0 %v974
        %1296 = vmatpush1.bf16.msra.mxu0 %v973
        %1297 = vmatprep.subr.bf16.mxu0 %v982
        %1298 = vmatpush1.bf16.msra.mxu0 %v981
        %1299 = vmatprep.subr.bf16.mxu0 %v990
        %1300 = vmatpush1.bf16.msra.mxu0 %v989
        %1301 = vmatprep.subr.bf16.mxu0 %v998
        %1302 = vmatpush1.bf16.msra.mxu0 %v997
        %1303 = vmatprep.subr.bf16.mxu0 %v1006
        %1304 = vmatpush1.bf16.msra.mxu0 %v1005
        %1305 = vmatprep.subr.bf16.mxu0 %v1014
        %1306 = vmatpush1.bf16.msra.mxu0 %v1013
        %1307 = vmatprep.subr.bf16.mxu0 %v1022
        %1308 = vmatpush1.bf16.msra.mxu0 %v1021
        %1309 = vmatprep.subr.bf16.mxu0 %v1030
        %1310 = vmatpush1.bf16.msra.mxu0 %v1029
        %1311 = vmatprep.subr.bf16.mxu0 %v1038
        %1312 = vmatpush1.bf16.msra.mxu0 %v1037
        %1313 = vmatprep.subr.bf16.mxu0 %v1046
        %1314 = vmatpush1.bf16.msra.mxu0 %v1045
        %1315 = vmatprep.subr.bf16.mxu0 %v1054
        %1316 = vmatpush1.bf16.msra.mxu0 %v1053
        %1317 = vmatprep.subr.bf16.mxu0 %v1062
        %1318 = vmatpush1.bf16.msra.mxu0 %v1061
        %1319 = vmatprep.subr.bf16.mxu0 %v1070
        %1320 = vmatpush1.bf16.msra.mxu0 %v1069
        %1321 = vmatprep.subr.bf16.mxu0 %v1078
        %1322 = vmatpush1.bf16.msra.mxu0 %v1077
        %1323 = vmatprep.mubr.bf16.mxu0 %v440
        %1324 = vmatmul.mubr.bf16.gmra.mrb[0].mxu0 %v439
        %v1325 = vpop.f32.mrb[0].mxu0
        %v1326 = vadd.f32 0.0, %v1325
        %v1327 = vpop.f32.mrb[0].mxu0
        %v1328 = vadd.f32 0.0, %v1327
        %v1329 = vpop.f32.mrb[0].mxu0
        %v1330 = vpop.f32.mrb[0].mxu0
        %1331 = vdwg.mxu0
        %1332 = vmatprep.subr.bf16.mxu0 %v960
        %1333 = vmatpush1.bf16.msra.mxu0 %v959
        %1334 = vmatprep.subr.bf16.mxu0 %v968
        %1335 = vmatpush1.bf16.msra.mxu0 %v967
        %1336 = vmatprep.subr.bf16.mxu0 %v976
        %1337 = vmatpush1.bf16.msra.mxu0 %v975
        %1338 = vmatprep.subr.bf16.mxu0 %v984
        %1339 = vmatpush1.bf16.msra.mxu0 %v983
        %1340 = vmatprep.subr.bf16.mxu0 %v992
        %1341 = vmatpush1.bf16.msra.mxu0 %v991
        %1342 = vmatprep.subr.bf16.mxu0 %v1000
        %1343 = vmatpush1.bf16.msra.mxu0 %v999
        %1344 = vmatprep.subr.bf16.mxu0 %v1008
        %1345 = vmatpush1.bf16.msra.mxu0 %v1007
        %1346 = vmatprep.subr.bf16.mxu0 %v1016
        %1347 = vmatpush1.bf16.msra.mxu0 %v1015
        %1348 = vmatprep.subr.bf16.mxu0 %v1024
        %1349 = vmatpush1.bf16.msra.mxu0 %v1023
        %1350 = vmatprep.subr.bf16.mxu0 %v1032
        %1351 = vmatpush1.bf16.msra.mxu0 %v1031
        %1352 = vmatprep.subr.bf16.mxu0 %v1040
        %1353 = vmatpush1.bf16.msra.mxu0 %v1039
        %1354 = vmatprep.subr.bf16.mxu0 %v1048
        %1355 = vmatpush1.bf16.msra.mxu0 %v1047
        %1356 = vmatprep.subr.bf16.mxu0 %v1056
        %1357 = vmatpush1.bf16.msra.mxu0 %v1055
        %1358 = vmatprep.subr.bf16.mxu0 %v1064
        %1359 = vmatpush1.bf16.msra.mxu0 %v1063
        %1360 = vmatprep.subr.bf16.mxu0 %v1072
        %1361 = vmatpush1.bf16.msra.mxu0 %v1071
        %1362 = vmatprep.subr.bf16.mxu0 %v1080
        %1363 = vmatpush1.bf16.msra.mxu0 %v1079
        %1364 = vmatprep.mubr.bf16.mxu0 %v440
        %1365 = vmatmul.mubr.bf16.gmra.mrb[0].mxu0 %v439
        %v1366 = vpop.f32.mrb[0].mxu0
        %v1367 = vadd.f32 0.0, %v1366
        %v1368 = vpop.f32.mrb[0].mxu0
        %v1369 = vadd.f32 0.0, %v1368
        %v1370 = vpop.f32.mrb[0].mxu0
        %v1371 = vpop.f32.mrb[0].mxu0
        %1372 = vdwg.mxu0
        %v1381 = vcombine.low %v1244, %v1246
        %v1382 = vcombine.low %v1285, %v1287
        %v1384 = vunpack.c.l.s4 1983009808
        %v1385 = vunpack.c.0.s8 %v1384
        %v1386 = vlaneseq
        %v1387 = vshrl.u32 %v1386, 7
        %v1388 = vsub.s32 %v1385, %v1387
        %v1389 = vrot.slane %v1381, %v1388
        %v1391 = vunpack.c.l.s4 1983009808
        %v1392 = vunpack.c.0.s8 %v1391
        %v1393 = vlaneseq
        %v1394 = vshrl.u32 %v1393, 7
        %v1395 = vsub.s32 %v1392, %v1394
        %v1396 = vrot.slane %v1382, %v1395
        %v1397 = vcombine.low %v1389, %v1396
        %v1398 = vcombine.low %v1326, %v1328
        %v1399 = vcombine.low %v1367, %v1369
        %v1401 = vunpack.c.l.s4 1983009808
        %v1402 = vunpack.c.0.s8 %v1401
        %v1403 = vlaneseq
        %v1404 = vshrl.u32 %v1403, 7
        %v1405 = vsub.s32 %v1402, %v1404
        %v1406 = vrot.slane %v1398, %v1405
        %v1408 = vunpack.c.l.s4 1983009808
        %v1409 = vunpack.c.0.s8 %v1408
        %v1410 = vlaneseq
        %v1411 = vshrl.u32 %v1410, 7
        %v1412 = vsub.s32 %v1409, %v1411
        %v1413 = vrot.slane %v1399, %v1412
        %v1414 = vcombine.low %v1406, %v1413
        %v1417 = vadd.f32 %v437, %v1397
        %v1418 = vadd.f32 %v438, %v1414
        %1419 = vst [vmem:[#allocation2] sm:$0xff] %v1417
        %1420 = vst [vmem:[#allocation2 + $0x8] sm:$0xff] %v1418
        %p1421 = scmp.eq.s32.totalorder %s19, 3
        // Predicated region
        $region91: #{net_forward.3} parent=81 // pred_check
          %p1422 = pneg %p1421
        $region92: #{net_forward.3} parent=81 // pred_check_branch
          %1424 = sbr.rel (%p1422) target = $region94
        $region93: #{net_forward.3} parent=81 // pred_region
          %v1425 = vld [vmem:[#allocation2] sm:$0xff]
          %v1426 = vld [vmem:[#allocation2 + $0x8] sm:$0xff]
          %v1427 = vld [vmem:[%s4] sm:$0xff]
          %v1429 = vlaneseq
          %v1430 = vshrl.u32 %v1429, 7
          %v1431 = vsub.s32 0, %v1430
          %v1432 = vrot.slane %v1427, %v1431
          %v1433 = vlaneseq
          %v1434 = vshrl.u32 %v1433, 7
          %v1435 = vsub.s32 1, %v1434
          %v1436 = vrot.slane %v1427, %v1435
          %v1437 = vlaneseq
          %v1438 = vshrl.u32 %v1437, 7
          %v1439 = vsub.s32 2, %v1438
          %v1440 = vrot.slane %v1427, %v1439
          %v1441 = vlaneseq
          %v1442 = vshrl.u32 %v1441, 7
          %v1443 = vsub.s32 3, %v1442
          %v1444 = vrot.slane %v1427, %v1443
          %v1445 = vlaneseq
          %v1446 = vshrl.u32 %v1445, 7
          %v1447 = vsub.s32 4, %v1446
          %v1448 = vrot.slane %v1427, %v1447
          %v1449 = vlaneseq
          %v1450 = vshrl.u32 %v1449, 7
          %v1451 = vsub.s32 5, %v1450
          %v1452 = vrot.slane %v1427, %v1451
          %v1453 = vlaneseq
          %v1454 = vshrl.u32 %v1453, 7
          %v1455 = vsub.s32 6, %v1454
          %v1456 = vrot.slane %v1427, %v1455
          %v1457 = vlaneseq
          %v1458 = vshrl.u32 %v1457, 7
          %v1459 = vsub.s32 7, %v1458
          %v1460 = vrot.slane %v1427, %v1459
          %v1461 = vcombine.low %v1432, %v1436
          %v1462 = vcombine.low %v1440, %v1444
          %v1464 = vunpack.c.l.s4 1983009808
          %v1465 = vunpack.c.0.s8 %v1464
          %v1466 = vlaneseq
          %v1467 = vshrl.u32 %v1466, 7
          %v1468 = vsub.s32 %v1465, %v1467
          %v1469 = vrot.slane %v1461, %v1468
          %v1471 = vunpack.c.l.s4 1983009808
          %v1472 = vunpack.c.0.s8 %v1471
          %v1473 = vlaneseq
          %v1474 = vshrl.u32 %v1473, 7
          %v1475 = vsub.s32 %v1472, %v1474
          %v1476 = vrot.slane %v1462, %v1475
          %v1477 = vcombine.low %v1469, %v1476
          %v1478 = vcombine.low %v1448, %v1452
          %v1479 = vcombine.low %v1456, %v1460
          %v1481 = vunpack.c.l.s4 1983009808
          %v1482 = vunpack.c.0.s8 %v1481
          %v1483 = vlaneseq
          %v1484 = vshrl.u32 %v1483, 7
          %v1485 = vsub.s32 %v1482, %v1484
          %v1486 = vrot.slane %v1478, %v1485
          %v1488 = vunpack.c.l.s4 1983009808
          %v1489 = vunpack.c.0.s8 %v1488
          %v1490 = vlaneseq
          %v1491 = vshrl.u32 %v1490, 7
          %v1492 = vsub.s32 %v1489, %v1491
          %v1493 = vrot.slane %v1479, %v1492
          %v1494 = vcombine.low %v1486, %v1493
          %v1497 = vadd.f32 %v1425, %v1477
          %v1498 = vadd.f32 %v1426, %v1494
          %v1501 = vcombine.high %v1497, %v1497
          %v1503 = vunpack.c.l.s4 1983009808
          %v1504 = vunpack.c.0.s8 %v1503
          %v1505 = vlaneseq
          %v1506 = vshrl.u32 %v1505, 7
          %v1507 = vsub.s32 %v1504, %v1506
          %v1508 = vrot.slane %v1497, %v1507
          %v1510 = vunpack.c.l.s4 1983009808
          %v1511 = vunpack.c.0.s8 %v1510
          %v1512 = vlaneseq
          %v1513 = vshrl.u32 %v1512, 7
          %v1514 = vsub.s32 %v1511, %v1513
          %v1515 = vrot.slane %v1501, %v1514
          %v1516 = vcombine.high %v1508, %v1508
          %v1517 = vcombine.high %v1515, %v1515
          %v1518 = vcombine.high %v1498, %v1498
          %v1520 = vunpack.c.l.s4 1983009808
          %v1521 = vunpack.c.0.s8 %v1520
          %v1522 = vlaneseq
          %v1523 = vshrl.u32 %v1522, 7
          %v1524 = vsub.s32 %v1521, %v1523
          %v1525 = vrot.slane %v1498, %v1524
          %v1527 = vunpack.c.l.s4 1983009808
          %v1528 = vunpack.c.0.s8 %v1527
          %v1529 = vlaneseq
          %v1530 = vshrl.u32 %v1529, 7
          %v1531 = vsub.s32 %v1528, %v1530
          %v1532 = vrot.slane %v1518, %v1531
          %v1533 = vcombine.high %v1525, %v1525
          %v1534 = vcombine.high %v1532, %v1532
          %v1543 = vpack.c.bf16 %v1508, %v1508
          %v1544 = vpack.c.bf16 %v1516, %v1516
          %v1545 = vpack.c.bf16 %v1515, %v1515
          %v1546 = vpack.c.bf16 %v1517, %v1517
          %v1547 = vpack.c.bf16 %v1525, %v1525
          %v1548 = vpack.c.bf16 %v1533, %v1533
          %v1549 = vpack.c.bf16 %v1532, %v1532
          %v1550 = vpack.c.bf16 %v1534, %v1534
          %v1551 = vld [vmem:[%s5] sm:$0xf]
          %v1552 = vld [vmem:[%s5 + $0x4] sm:$0xf]
          %v1553 = vld [vmem:[%s5 + $0x8] sm:$0xf]
          %v1554 = vld [vmem:[%s5 + $0xc] sm:$0xf]
          %v1555 = vld [vmem:[%s5 + $0x10] sm:$0xf]
          %v1556 = vld [vmem:[%s5 + $0x14] sm:$0xf]
          %v1557 = vld [vmem:[%s5 + $0x18] sm:$0xf]
          %v1558 = vld [vmem:[%s5 + $0x1c] sm:$0xf]
          %v1559 = vld [vmem:[%s5 + $0x20] sm:$0xf]
          %v1560 = vld [vmem:[%s5 + $0x24] sm:$0xf]
          %v1561 = vld [vmem:[%s5 + $0x28] sm:$0xf]
          %v1562 = vld [vmem:[%s5 + $0x2c] sm:$0xf]
          %v1563 = vld [vmem:[%s5 + $0x30] sm:$0xf]
          %v1564 = vld [vmem:[%s5 + $0x34] sm:$0xf]
          %v1565 = vld [vmem:[%s5 + $0x38] sm:$0xf]
          %v1566 = vld [vmem:[%s5 + $0x3c] sm:$0xf]
          %v1567 = vld [vmem:[%s5 + $0x40] sm:$0xf]
          %v1568 = vld [vmem:[%s5 + $0x44] sm:$0xf]
          %v1569 = vld [vmem:[%s5 + $0x48] sm:$0xf]
          %v1570 = vld [vmem:[%s5 + $0x4c] sm:$0xf]
          %v1571 = vld [vmem:[%s5 + $0x50] sm:$0xf]
          %v1572 = vld [vmem:[%s5 + $0x54] sm:$0xf]
          %v1573 = vld [vmem:[%s5 + $0x58] sm:$0xf]
          %v1574 = vld [vmem:[%s5 + $0x5c] sm:$0xf]
          %v1575 = vld [vmem:[%s5 + $0x60] sm:$0xf]
          %v1576 = vld [vmem:[%s5 + $0x64] sm:$0xf]
          %v1577 = vld [vmem:[%s5 + $0x68] sm:$0xf]
          %v1578 = vld [vmem:[%s5 + $0x6c] sm:$0xf]
          %v1579 = vld [vmem:[%s5 + $0x70] sm:$0xf]
          %v1580 = vld [vmem:[%s5 + $0x74] sm:$0xf]
          %v1581 = vld [vmem:[%s5 + $0x78] sm:$0xf]
          %v1582 = vld [vmem:[%s5 + $0x7c] sm:$0xf]
          %v1583 = vld [vmem:[%s5 + $0x80] sm:$0xf]
          %v1584 = vld [vmem:[%s5 + $0x84] sm:$0xf]
          %v1585 = vld [vmem:[%s5 + $0x88] sm:$0xf]
          %v1586 = vld [vmem:[%s5 + $0x8c] sm:$0xf]
          %v1587 = vld [vmem:[%s5 + $0x90] sm:$0xf]
          %v1588 = vld [vmem:[%s5 + $0x94] sm:$0xf]
          %v1589 = vld [vmem:[%s5 + $0x98] sm:$0xf]
          %v1590 = vld [vmem:[%s5 + $0x9c] sm:$0xf]
          %v1591 = vld [vmem:[%s5 + $0xa0] sm:$0xf]
          %v1592 = vld [vmem:[%s5 + $0xa4] sm:$0xf]
          %v1593 = vld [vmem:[%s5 + $0xa8] sm:$0xf]
          %v1594 = vld [vmem:[%s5 + $0xac] sm:$0xf]
          %v1595 = vld [vmem:[%s5 + $0xb0] sm:$0xf]
          %v1596 = vld [vmem:[%s5 + $0xb4] sm:$0xf]
          %v1597 = vld [vmem:[%s5 + $0xb8] sm:$0xf]
          %v1598 = vld [vmem:[%s5 + $0xbc] sm:$0xf]
          %v1599 = vld [vmem:[%s5 + $0xc0] sm:$0xf]
          %v1600 = vld [vmem:[%s5 + $0xc4] sm:$0xf]
          %v1601 = vld [vmem:[%s5 + $0xc8] sm:$0xf]
          %v1602 = vld [vmem:[%s5 + $0xcc] sm:$0xf]
          %v1603 = vld [vmem:[%s5 + $0xd0] sm:$0xf]
          %v1604 = vld [vmem:[%s5 + $0xd4] sm:$0xf]
          %v1605 = vld [vmem:[%s5 + $0xd8] sm:$0xf]
          %v1606 = vld [vmem:[%s5 + $0xdc] sm:$0xf]
          %v1607 = vld [vmem:[%s5 + $0xe0] sm:$0xf]
          %v1608 = vld [vmem:[%s5 + $0xe4] sm:$0xf]
          %v1609 = vld [vmem:[%s5 + $0xe8] sm:$0xf]
          %v1610 = vld [vmem:[%s5 + $0xec] sm:$0xf]
          %v1611 = vld [vmem:[%s5 + $0xf0] sm:$0xf]
          %v1612 = vld [vmem:[%s5 + $0xf4] sm:$0xf]
          %v1613 = vld [vmem:[%s5 + $0xf8] sm:$0xf]
          %v1614 = vld [vmem:[%s5 + $0xfc] sm:$0xf]
          %v1615 = vld [vmem:[%s5 + $0x100] sm:$0xf]
          %v1616 = vld [vmem:[%s5 + $0x104] sm:$0xf]
          %v1617 = vld [vmem:[%s5 + $0x108] sm:$0xf]
          %v1618 = vld [vmem:[%s5 + $0x10c] sm:$0xf]
          %v1619 = vld [vmem:[%s5 + $0x110] sm:$0xf]
          %v1620 = vld [vmem:[%s5 + $0x114] sm:$0xf]
          %v1621 = vld [vmem:[%s5 + $0x118] sm:$0xf]
          %v1622 = vld [vmem:[%s5 + $0x11c] sm:$0xf]
          %v1623 = vld [vmem:[%s5 + $0x120] sm:$0xf]
          %v1624 = vld [vmem:[%s5 + $0x124] sm:$0xf]
          %v1625 = vld [vmem:[%s5 + $0x128] sm:$0xf]
          %v1626 = vld [vmem:[%s5 + $0x12c] sm:$0xf]
          %v1627 = vld [vmem:[%s5 + $0x130] sm:$0xf]
          %v1628 = vld [vmem:[%s5 + $0x134] sm:$0xf]
          %v1629 = vld [vmem:[%s5 + $0x138] sm:$0xf]
          %v1630 = vld [vmem:[%s5 + $0x13c] sm:$0xf]
          %v1631 = vld [vmem:[%s5 + $0x140] sm:$0xf]
          %v1632 = vld [vmem:[%s5 + $0x144] sm:$0xf]
          %v1633 = vld [vmem:[%s5 + $0x148] sm:$0xf]
          %v1634 = vld [vmem:[%s5 + $0x14c] sm:$0xf]
          %v1635 = vld [vmem:[%s5 + $0x150] sm:$0xf]
          %v1636 = vld [vmem:[%s5 + $0x154] sm:$0xf]
          %v1637 = vld [vmem:[%s5 + $0x158] sm:$0xf]
          %v1638 = vld [vmem:[%s5 + $0x15c] sm:$0xf]
          %v1639 = vld [vmem:[%s5 + $0x160] sm:$0xf]
          %v1640 = vld [vmem:[%s5 + $0x164] sm:$0xf]
          %v1641 = vld [vmem:[%s5 + $0x168] sm:$0xf]
          %v1642 = vld [vmem:[%s5 + $0x16c] sm:$0xf]
          %v1643 = vld [vmem:[%s5 + $0x170] sm:$0xf]
          %v1644 = vld [vmem:[%s5 + $0x174] sm:$0xf]
          %v1645 = vld [vmem:[%s5 + $0x178] sm:$0xf]
          %v1646 = vld [vmem:[%s5 + $0x17c] sm:$0xf]
          %v1647 = vld [vmem:[%s5 + $0x180] sm:$0xf]
          %v1648 = vld [vmem:[%s5 + $0x184] sm:$0xf]
          %v1649 = vld [vmem:[%s5 + $0x188] sm:$0xf]
          %v1650 = vld [vmem:[%s5 + $0x18c] sm:$0xf]
          %v1651 = vld [vmem:[%s5 + $0x190] sm:$0xf]
          %v1652 = vld [vmem:[%s5 + $0x194] sm:$0xf]
          %v1653 = vld [vmem:[%s5 + $0x198] sm:$0xf]
          %v1654 = vld [vmem:[%s5 + $0x19c] sm:$0xf]
          %v1655 = vld [vmem:[%s5 + $0x1a0] sm:$0xf]
          %v1656 = vld [vmem:[%s5 + $0x1a4] sm:$0xf]
          %v1657 = vld [vmem:[%s5 + $0x1a8] sm:$0xf]
          %v1658 = vld [vmem:[%s5 + $0x1ac] sm:$0xf]
          %v1659 = vld [vmem:[%s5 + $0x1b0] sm:$0xf]
          %v1660 = vld [vmem:[%s5 + $0x1b4] sm:$0xf]
          %v1661 = vld [vmem:[%s5 + $0x1b8] sm:$0xf]
          %v1662 = vld [vmem:[%s5 + $0x1bc] sm:$0xf]
          %v1663 = vld [vmem:[%s5 + $0x1c0] sm:$0xf]
          %v1664 = vld [vmem:[%s5 + $0x1c4] sm:$0xf]
          %v1665 = vld [vmem:[%s5 + $0x1c8] sm:$0xf]
          %v1666 = vld [vmem:[%s5 + $0x1cc] sm:$0xf]
          %v1667 = vld [vmem:[%s5 + $0x1d0] sm:$0xf]
          %v1668 = vld [vmem:[%s5 + $0x1d4] sm:$0xf]
          %v1669 = vld [vmem:[%s5 + $0x1d8] sm:$0xf]
          %v1670 = vld [vmem:[%s5 + $0x1dc] sm:$0xf]
          %v1671 = vld [vmem:[%s5 + $0x1e0] sm:$0xf]
          %v1672 = vld [vmem:[%s5 + $0x1e4] sm:$0xf]
          %v1673 = vld [vmem:[%s5 + $0x1e8] sm:$0xf]
          %v1674 = vld [vmem:[%s5 + $0x1ec] sm:$0xf]
          %v1675 = vld [vmem:[%s5 + $0x1f0] sm:$0xf]
          %v1676 = vld [vmem:[%s5 + $0x1f4] sm:$0xf]
          %v1677 = vld [vmem:[%s5 + $0x1f8] sm:$0xf]
          %v1678 = vld [vmem:[%s5 + $0x1fc] sm:$0xf]
          %v1679 = vld [vmem:[%s6] sm:$0x1]
          %v1681 = vlaneseq
          %v1682 = vshrl.u32 %v1681, 7
          %v1683 = vsub.s32 0, %v1682
          %v1684 = vrot.slane %v1679, %v1683
          %v1814 = vunpack.c.l.b16 %v1551
          %v1815 = vunpack.c.l.b16 %v1552
          %v1816 = vunpack.c.l.b16 %v1553
          %v1817 = vunpack.c.l.b16 %v1554
          %v1818 = vunpack.c.l.b16 %v1555
          %v1819 = vunpack.c.l.b16 %v1556
          %v1820 = vunpack.c.l.b16 %v1557
          %v1821 = vunpack.c.l.b16 %v1558
          %v1822 = vunpack.c.l.b16 %v1559
          %v1823 = vunpack.c.l.b16 %v1560
          %v1824 = vunpack.c.l.b16 %v1561
          %v1825 = vunpack.c.l.b16 %v1562
          %v1826 = vunpack.c.l.b16 %v1563
          %v1827 = vunpack.c.l.b16 %v1564
          %v1828 = vunpack.c.l.b16 %v1565
          %v1829 = vunpack.c.l.b16 %v1566
          %v1830 = vunpack.c.l.b16 %v1567
          %v1831 = vunpack.c.l.b16 %v1568
          %v1832 = vunpack.c.l.b16 %v1569
          %v1833 = vunpack.c.l.b16 %v1570
          %v1834 = vunpack.c.l.b16 %v1571
          %v1835 = vunpack.c.l.b16 %v1572
          %v1836 = vunpack.c.l.b16 %v1573
          %v1837 = vunpack.c.l.b16 %v1574
          %v1838 = vunpack.c.l.b16 %v1575
          %v1839 = vunpack.c.l.b16 %v1576
          %v1840 = vunpack.c.l.b16 %v1577
          %v1841 = vunpack.c.l.b16 %v1578
          %v1842 = vunpack.c.l.b16 %v1579
          %v1843 = vunpack.c.l.b16 %v1580
          %v1844 = vunpack.c.l.b16 %v1581
          %v1845 = vunpack.c.l.b16 %v1582
          %v1846 = vunpack.c.l.b16 %v1583
          %v1847 = vunpack.c.l.b16 %v1584
          %v1848 = vunpack.c.l.b16 %v1585
          %v1849 = vunpack.c.l.b16 %v1586
          %v1850 = vunpack.c.l.b16 %v1587
          %v1851 = vunpack.c.l.b16 %v1588
          %v1852 = vunpack.c.l.b16 %v1589
          %v1853 = vunpack.c.l.b16 %v1590
          %v1854 = vunpack.c.l.b16 %v1591
          %v1855 = vunpack.c.l.b16 %v1592
          %v1856 = vunpack.c.l.b16 %v1593
          %v1857 = vunpack.c.l.b16 %v1594
          %v1858 = vunpack.c.l.b16 %v1595
          %v1859 = vunpack.c.l.b16 %v1596
          %v1860 = vunpack.c.l.b16 %v1597
          %v1861 = vunpack.c.l.b16 %v1598
          %v1862 = vunpack.c.l.b16 %v1599
          %v1863 = vunpack.c.l.b16 %v1600
          %v1864 = vunpack.c.l.b16 %v1601
          %v1865 = vunpack.c.l.b16 %v1602
          %v1866 = vunpack.c.l.b16 %v1603
          %v1867 = vunpack.c.l.b16 %v1604
          %v1868 = vunpack.c.l.b16 %v1605
          %v1869 = vunpack.c.l.b16 %v1606
          %v1870 = vunpack.c.l.b16 %v1607
          %v1871 = vunpack.c.l.b16 %v1608
          %v1872 = vunpack.c.l.b16 %v1609
          %v1873 = vunpack.c.l.b16 %v1610
          %v1874 = vunpack.c.l.b16 %v1611
          %v1875 = vunpack.c.l.b16 %v1612
          %v1876 = vunpack.c.l.b16 %v1613
          %v1877 = vunpack.c.l.b16 %v1614
          %v1878 = vunpack.c.l.b16 %v1615
          %v1879 = vunpack.c.l.b16 %v1616
          %v1880 = vunpack.c.l.b16 %v1617
          %v1881 = vunpack.c.l.b16 %v1618
          %v1882 = vunpack.c.l.b16 %v1619
          %v1883 = vunpack.c.l.b16 %v1620
          %v1884 = vunpack.c.l.b16 %v1621
          %v1885 = vunpack.c.l.b16 %v1622
          %v1886 = vunpack.c.l.b16 %v1623
          %v1887 = vunpack.c.l.b16 %v1624
          %v1888 = vunpack.c.l.b16 %v1625
          %v1889 = vunpack.c.l.b16 %v1626
          %v1890 = vunpack.c.l.b16 %v1627
          %v1891 = vunpack.c.l.b16 %v1628
          %v1892 = vunpack.c.l.b16 %v1629
          %v1893 = vunpack.c.l.b16 %v1630
          %v1894 = vunpack.c.l.b16 %v1631
          %v1895 = vunpack.c.l.b16 %v1632
          %v1896 = vunpack.c.l.b16 %v1633
          %v1897 = vunpack.c.l.b16 %v1634
          %v1898 = vunpack.c.l.b16 %v1635
          %v1899 = vunpack.c.l.b16 %v1636
          %v1900 = vunpack.c.l.b16 %v1637
          %v1901 = vunpack.c.l.b16 %v1638
          %v1902 = vunpack.c.l.b16 %v1639
          %v1903 = vunpack.c.l.b16 %v1640
          %v1904 = vunpack.c.l.b16 %v1641
          %v1905 = vunpack.c.l.b16 %v1642
          %v1906 = vunpack.c.l.b16 %v1643
          %v1907 = vunpack.c.l.b16 %v1644
          %v1908 = vunpack.c.l.b16 %v1645
          %v1909 = vunpack.c.l.b16 %v1646
          %v1910 = vunpack.c.l.b16 %v1647
          %v1911 = vunpack.c.l.b16 %v1648
          %v1912 = vunpack.c.l.b16 %v1649
          %v1913 = vunpack.c.l.b16 %v1650
          %v1914 = vunpack.c.l.b16 %v1651
          %v1915 = vunpack.c.l.b16 %v1652
          %v1916 = vunpack.c.l.b16 %v1653
          %v1917 = vunpack.c.l.b16 %v1654
          %v1918 = vunpack.c.l.b16 %v1655
          %v1919 = vunpack.c.l.b16 %v1656
          %v1920 = vunpack.c.l.b16 %v1657
          %v1921 = vunpack.c.l.b16 %v1658
          %v1922 = vunpack.c.l.b16 %v1659
          %v1923 = vunpack.c.l.b16 %v1660
          %v1924 = vunpack.c.l.b16 %v1661
          %v1925 = vunpack.c.l.b16 %v1662
          %v1926 = vunpack.c.l.b16 %v1663
          %v1927 = vunpack.c.l.b16 %v1664
          %v1928 = vunpack.c.l.b16 %v1665
          %v1929 = vunpack.c.l.b16 %v1666
          %v1930 = vunpack.c.l.b16 %v1667
          %v1931 = vunpack.c.l.b16 %v1668
          %v1932 = vunpack.c.l.b16 %v1669
          %v1933 = vunpack.c.l.b16 %v1670
          %v1934 = vunpack.c.l.b16 %v1671
          %v1935 = vunpack.c.l.b16 %v1672
          %v1936 = vunpack.c.l.b16 %v1673
          %v1937 = vunpack.c.l.b16 %v1674
          %v1938 = vunpack.c.l.b16 %v1675
          %v1939 = vunpack.c.l.b16 %v1676
          %v1940 = vunpack.c.l.b16 %v1677
          %v1941 = vunpack.c.l.b16 %v1678
          %v1942 = vpack.c.b16 %v1815, %v1814
          %v1943 = vpack.c.b16 %v1817, %v1816
          %v1944 = vpack.c.b16 %v1819, %v1818
          %v1945 = vpack.c.b16 %v1821, %v1820
          %v1946 = vpack.c.b16 %v1823, %v1822
          %v1947 = vpack.c.b16 %v1825, %v1824
          %v1948 = vpack.c.b16 %v1827, %v1826
          %v1949 = vpack.c.b16 %v1829, %v1828
          %v1950 = vpack.c.b16 %v1831, %v1830
          %v1951 = vpack.c.b16 %v1833, %v1832
          %v1952 = vpack.c.b16 %v1835, %v1834
          %v1953 = vpack.c.b16 %v1837, %v1836
          %v1954 = vpack.c.b16 %v1839, %v1838
          %v1955 = vpack.c.b16 %v1841, %v1840
          %v1956 = vpack.c.b16 %v1843, %v1842
          %v1957 = vpack.c.b16 %v1845, %v1844
          %v1958 = vpack.c.b16 %v1847, %v1846
          %v1959 = vpack.c.b16 %v1849, %v1848
          %v1960 = vpack.c.b16 %v1851, %v1850
          %v1961 = vpack.c.b16 %v1853, %v1852
          %v1962 = vpack.c.b16 %v1855, %v1854
          %v1963 = vpack.c.b16 %v1857, %v1856
          %v1964 = vpack.c.b16 %v1859, %v1858
          %v1965 = vpack.c.b16 %v1861, %v1860
          %v1966 = vpack.c.b16 %v1863, %v1862
          %v1967 = vpack.c.b16 %v1865, %v1864
          %v1968 = vpack.c.b16 %v1867, %v1866
          %v1969 = vpack.c.b16 %v1869, %v1868
          %v1970 = vpack.c.b16 %v1871, %v1870
          %v1971 = vpack.c.b16 %v1873, %v1872
          %v1972 = vpack.c.b16 %v1875, %v1874
          %v1973 = vpack.c.b16 %v1877, %v1876
          %v1974 = vpack.c.b16 %v1879, %v1878
          %v1975 = vpack.c.b16 %v1881, %v1880
          %v1976 = vpack.c.b16 %v1883, %v1882
          %v1977 = vpack.c.b16 %v1885, %v1884
          %v1978 = vpack.c.b16 %v1887, %v1886
          %v1979 = vpack.c.b16 %v1889, %v1888
          %v1980 = vpack.c.b16 %v1891, %v1890
          %v1981 = vpack.c.b16 %v1893, %v1892
          %v1982 = vpack.c.b16 %v1895, %v1894
          %v1983 = vpack.c.b16 %v1897, %v1896
          %v1984 = vpack.c.b16 %v1899, %v1898
          %v1985 = vpack.c.b16 %v1901, %v1900
          %v1986 = vpack.c.b16 %v1903, %v1902
          %v1987 = vpack.c.b16 %v1905, %v1904
          %v1988 = vpack.c.b16 %v1907, %v1906
          %v1989 = vpack.c.b16 %v1909, %v1908
          %v1990 = vpack.c.b16 %v1911, %v1910
          %v1991 = vpack.c.b16 %v1913, %v1912
          %v1992 = vpack.c.b16 %v1915, %v1914
          %v1993 = vpack.c.b16 %v1917, %v1916
          %v1994 = vpack.c.b16 %v1919, %v1918
          %v1995 = vpack.c.b16 %v1921, %v1920
          %v1996 = vpack.c.b16 %v1923, %v1922
          %v1997 = vpack.c.b16 %v1925, %v1924
          %v1998 = vpack.c.b16 %v1927, %v1926
          %v1999 = vpack.c.b16 %v1929, %v1928
          %v2000 = vpack.c.b16 %v1931, %v1930
          %v2001 = vpack.c.b16 %v1933, %v1932
          %v2002 = vpack.c.b16 %v1935, %v1934
          %v2003 = vpack.c.b16 %v1937, %v1936
          %v2004 = vpack.c.b16 %v1939, %v1938
          %v2005 = vpack.c.b16 %v1941, %v1940
          %2070 = vmatprep.subr.bf16.mxu0 0
          %2071 = vmatpush1.bf16.msra.mxu0 %v1942
          %2072 = vmatprep.subr.bf16.mxu0 0
          %2073 = vmatpush1.bf16.msra.mxu0 %v1943
          %2074 = vmatprep.subr.bf16.mxu0 0
          %2075 = vmatpush1.bf16.msra.mxu0 %v1944
          %2076 = vmatprep.subr.bf16.mxu0 0
          %2077 = vmatpush1.bf16.msra.mxu0 %v1945
          %2078 = vmatprep.subr.bf16.mxu0 0
          %2079 = vmatpush1.bf16.msra.mxu0 %v1946
          %2080 = vmatprep.subr.bf16.mxu0 0
          %2081 = vmatpush1.bf16.msra.mxu0 %v1947
          %2082 = vmatprep.subr.bf16.mxu0 0
          %2083 = vmatpush1.bf16.msra.mxu0 %v1948
          %2084 = vmatprep.subr.bf16.mxu0 0
          %2085 = vmatpush1.bf16.msra.mxu0 %v1949
          %2086 = vmatprep.subr.bf16.mxu0 0
          %2087 = vmatpush1.bf16.msra.mxu0 %v1950
          %2088 = vmatprep.subr.bf16.mxu0 0
          %2089 = vmatpush1.bf16.msra.mxu0 %v1951
          %2090 = vmatprep.subr.bf16.mxu0 0
          %2091 = vmatpush1.bf16.msra.mxu0 %v1952
          %2092 = vmatprep.subr.bf16.mxu0 0
          %2093 = vmatpush1.bf16.msra.mxu0 %v1953
          %2094 = vmatprep.subr.bf16.mxu0 0
          %2095 = vmatpush1.bf16.msra.mxu0 %v1954
          %2096 = vmatprep.subr.bf16.mxu0 0
          %2097 = vmatpush1.bf16.msra.mxu0 %v1955
          %2098 = vmatprep.subr.bf16.mxu0 0
          %2099 = vmatpush1.bf16.msra.mxu0 %v1956
          %2100 = vmatprep.subr.bf16.mxu0 0
          %2101 = vmatpush1.bf16.msra.mxu0 %v1957
          %2102 = vmatprep.mubr.bf16.mxu0 %v1544
          %2103 = vmatmul.mubr.bf16.gmra.mrb[0].mxu0 %v1543
          %v2104 = vpop.f32.mrb[0].mxu0
          %v2105 = vadd.f32 %v1684, %v2104
          %v2106 = vpop.f32.mrb[0].mxu0
          %v2107 = vpop.f32.mrb[0].mxu0
          %v2108 = vpop.f32.mrb[0].mxu0
          %2109 = vdwg.mxu0
          %2110 = vmatprep.subr.bf16.mxu0 0
          %2111 = vmatpush1.bf16.msra.mxu0 %v1958
          %2112 = vmatprep.subr.bf16.mxu0 0
          %2113 = vmatpush1.bf16.msra.mxu0 %v1959
          %2114 = vmatprep.subr.bf16.mxu0 0
          %2115 = vmatpush1.bf16.msra.mxu0 %v1960
          %2116 = vmatprep.subr.bf16.mxu0 0
          %2117 = vmatpush1.bf16.msra.mxu0 %v1961
          %2118 = vmatprep.subr.bf16.mxu0 0
          %2119 = vmatpush1.bf16.msra.mxu0 %v1962
          %2120 = vmatprep.subr.bf16.mxu0 0
          %2121 = vmatpush1.bf16.msra.mxu0 %v1963
          %2122 = vmatprep.subr.bf16.mxu0 0
          %2123 = vmatpush1.bf16.msra.mxu0 %v1964
          %2124 = vmatprep.subr.bf16.mxu0 0
          %2125 = vmatpush1.bf16.msra.mxu0 %v1965
          %2126 = vmatprep.subr.bf16.mxu0 0
          %2127 = vmatpush1.bf16.msra.mxu0 %v1966
          %2128 = vmatprep.subr.bf16.mxu0 0
          %2129 = vmatpush1.bf16.msra.mxu0 %v1967
          %2130 = vmatprep.subr.bf16.mxu0 0
          %2131 = vmatpush1.bf16.msra.mxu0 %v1968
          %2132 = vmatprep.subr.bf16.mxu0 0
          %2133 = vmatpush1.bf16.msra.mxu0 %v1969
          %2134 = vmatprep.subr.bf16.mxu0 0
          %2135 = vmatpush1.bf16.msra.mxu0 %v1970
          %2136 = vmatprep.subr.bf16.mxu0 0
          %2137 = vmatpush1.bf16.msra.mxu0 %v1971
          %2138 = vmatprep.subr.bf16.mxu0 0
          %2139 = vmatpush1.bf16.msra.mxu0 %v1972
          %2140 = vmatprep.subr.bf16.mxu0 0
          %2141 = vmatpush1.bf16.msra.mxu0 %v1973
          %2142 = vmatprep.mubr.bf16.mxu0 %v1546
          %2143 = vmatmul.mubr.bf16.gmra.mrb[0].mxu0 %v1545
          %v2144 = vpop.f32.mrb[0].mxu0
          %v2145 = vadd.f32 %v2105, %v2144
          %v2146 = vpop.f32.mrb[0].mxu0
          %v2147 = vpop.f32.mrb[0].mxu0
          %v2148 = vpop.f32.mrb[0].mxu0
          %2149 = vdwg.mxu0
          %2150 = vmatprep.subr.bf16.mxu0 0
          %2151 = vmatpush1.bf16.msra.mxu0 %v1974
          %2152 = vmatprep.subr.bf16.mxu0 0
          %2153 = vmatpush1.bf16.msra.mxu0 %v1975
          %2154 = vmatprep.subr.bf16.mxu0 0
          %2155 = vmatpush1.bf16.msra.mxu0 %v1976
          %2156 = vmatprep.subr.bf16.mxu0 0
          %2157 = vmatpush1.bf16.msra.mxu0 %v1977
          %2158 = vmatprep.subr.bf16.mxu0 0
          %2159 = vmatpush1.bf16.msra.mxu0 %v1978
          %2160 = vmatprep.subr.bf16.mxu0 0
          %2161 = vmatpush1.bf16.msra.mxu0 %v1979
          %2162 = vmatprep.subr.bf16.mxu0 0
          %2163 = vmatpush1.bf16.msra.mxu0 %v1980
          %2164 = vmatprep.subr.bf16.mxu0 0
          %2165 = vmatpush1.bf16.msra.mxu0 %v1981
          %2166 = vmatprep.subr.bf16.mxu0 0
          %2167 = vmatpush1.bf16.msra.mxu0 %v1982
          %2168 = vmatprep.subr.bf16.mxu0 0
          %2169 = vmatpush1.bf16.msra.mxu0 %v1983
          %2170 = vmatprep.subr.bf16.mxu0 0
          %2171 = vmatpush1.bf16.msra.mxu0 %v1984
          %2172 = vmatprep.subr.bf16.mxu0 0
          %2173 = vmatpush1.bf16.msra.mxu0 %v1985
          %2174 = vmatprep.subr.bf16.mxu0 0
          %2175 = vmatpush1.bf16.msra.mxu0 %v1986
          %2176 = vmatprep.subr.bf16.mxu0 0
          %2177 = vmatpush1.bf16.msra.mxu0 %v1987
          %2178 = vmatprep.subr.bf16.mxu0 0
          %2179 = vmatpush1.bf16.msra.mxu0 %v1988
          %2180 = vmatprep.subr.bf16.mxu0 0
          %2181 = vmatpush1.bf16.msra.mxu0 %v1989
          %2182 = vmatprep.mubr.bf16.mxu0 %v1548
          %2183 = vmatmul.mubr.bf16.gmra.mrb[0].mxu0 %v1547
          %v2184 = vpop.f32.mrb[0].mxu0
          %v2185 = vadd.f32 %v2145, %v2184
          %v2186 = vpop.f32.mrb[0].mxu0
          %v2187 = vpop.f32.mrb[0].mxu0
          %v2188 = vpop.f32.mrb[0].mxu0
          %2189 = vdwg.mxu0
          %2190 = vmatprep.subr.bf16.mxu0 0
          %2191 = vmatpush1.bf16.msra.mxu0 %v1990
          %2192 = vmatprep.subr.bf16.mxu0 0
          %2193 = vmatpush1.bf16.msra.mxu0 %v1991
          %2194 = vmatprep.subr.bf16.mxu0 0
          %2195 = vmatpush1.bf16.msra.mxu0 %v1992
          %2196 = vmatprep.subr.bf16.mxu0 0
          %2197 = vmatpush1.bf16.msra.mxu0 %v1993
          %2198 = vmatprep.subr.bf16.mxu0 0
          %2199 = vmatpush1.bf16.msra.mxu0 %v1994
          %2200 = vmatprep.subr.bf16.mxu0 0
          %2201 = vmatpush1.bf16.msra.mxu0 %v1995
          %2202 = vmatprep.subr.bf16.mxu0 0
          %2203 = vmatpush1.bf16.msra.mxu0 %v1996
          %2204 = vmatprep.subr.bf16.mxu0 0
          %2205 = vmatpush1.bf16.msra.mxu0 %v1997
          %2206 = vmatprep.subr.bf16.mxu0 0
          %2207 = vmatpush1.bf16.msra.mxu0 %v1998
          %2208 = vmatprep.subr.bf16.mxu0 0
          %2209 = vmatpush1.bf16.msra.mxu0 %v1999
          %2210 = vmatprep.subr.bf16.mxu0 0
          %2211 = vmatpush1.bf16.msra.mxu0 %v2000
          %2212 = vmatprep.subr.bf16.mxu0 0
          %2213 = vmatpush1.bf16.msra.mxu0 %v2001
          %2214 = vmatprep.subr.bf16.mxu0 0
          %2215 = vmatpush1.bf16.msra.mxu0 %v2002
          %2216 = vmatprep.subr.bf16.mxu0 0
          %2217 = vmatpush1.bf16.msra.mxu0 %v2003
          %2218 = vmatprep.subr.bf16.mxu0 0
          %2219 = vmatpush1.bf16.msra.mxu0 %v2004
          %2220 = vmatprep.subr.bf16.mxu0 0
          %2221 = vmatpush1.bf16.msra.mxu0 %v2005
          %2222 = vmatprep.mubr.bf16.mxu0 %v1550
          %2223 = vmatmul.mubr.bf16.gmra.mrb[0].mxu0 %v1549
          %v2224 = vpop.f32.mrb[0].mxu0
          %v2225 = vadd.f32 %v2185, %v2224
          %v2226 = vpop.f32.mrb[0].mxu0
          %v2227 = vpop.f32.mrb[0].mxu0
          %v2228 = vpop.f32.mrb[0].mxu0
          %2229 = vdwg.mxu0
          %v2230 = vxor.u32 %v2225, 2147483648
          %v2231 = vmul.f32 %v2230, 1.442695
          %v2232 = vpow.pop %v2231
          %v2233 = vadd.f32 %v2232, 1.0
          %v2234 = vrcp.pop %v2233
          %v2235 = vmul.f32 1.0, %v2234
          %2236 = vst [vmem:[#allocation4] sm:$0x3] %v2235
        $region94: #{net_forward.3} parent=81 // pred_fallthru
          _
        // Predicated region
        $region95: #{net_forward.3} parent=81 // pred_check
          %p2237 = pneg %p194
        $region96: #{net_forward.3} parent=81 // pred_check_branch
          %2239 = sbr.rel (%p2237) target = $region98
        $region97: #{net_forward.3} parent=81 // pred_region
          %s2241 = ssub.s32 32, 32
          %2242 = vsyncadd [#allocation5], %s2241
          %s2244 = sshll.u32 [#allocation4], 4
          %s2245 = int_to_ptr.vmem [resolvable:$true] %s2244
          %2247 = dma.vmem_to_hbm [thread:$0]  %s2245, 32, %s7, [#allocation5]
        $region98: #{net_forward.3} parent=81 // pred_fallthru
          _
        // Predicated region
        $region99: #{net_forward.3} parent=81 // pred_check
          %p2248 = pneg %p194
        $region100: #{net_forward.3} parent=81 // pred_check_branch
          %2250 = sbr.rel (%p2248) target = $region102
        $region101: #{net_forward.3} parent=81 // pred_region
          %2251 = dma.done [#allocation5], 32
        $region102: #{net_forward.3} parent=81 // pred_fallthru
          _
      $region82: #{net_forward.3} parent=5 // pred_fallthru
        _
      %p2252 = scmp.le.s32.totalorder 2, %s14
      // Predicated region
      $region103: #{net_forward.3} parent=5 // pred_check
        %p2253 = pneg %p2252
      $region104: #{net_forward.3} parent=5 // pred_check_branch
        %2255 = sbr.rel (%p2253) target = $region106
      $region105: #{net_forward.3} parent=5 // pred_region
        %s2256 = ssub.s32 %s14, 2
      $region106: #{net_forward.3} parent=5 // pred_fallthru
        _
    $region6: #{net_forward.3} parent=1 // loop_footer
      %s18 = sadd.s32 1, %s14
    $region7: #{net_forward.3} parent=1 // loop_footer_branch
      %13 = sbr.rel target = $region3
    $region8: #{net_forward.3} parent=1 // loop_exit
      _
    %2257 = vsyncpa [#allocation5], 1
    %s2258 = scalar_lea.sflag [#allocation5], 1
    %2259 = vsyncpa %s2258, 1

</llo_original>
